<compile_context>
chip_gen: v5e
topology: v5e:2x2
jax: 0.10.0
libtpu: 0.0.40
codegen_flags: <defaults>
</compile_context>

<pallas_src>
import functools

import jax
import jax.numpy as jnp
from jax import lax
from jax.experimental import pallas as pl
from jax.experimental.pallas import tpu as pltpu

_BN_EPS = 1e-5

# Conv-stack geometry (3x160x160 input):
#   conv1 k4 s4: 160 -> 40, conv2 k4 s4: 40 -> 10, conv3 k4 s2: 10 -> 4
_IN_HW = 160
_K = 4                      # every conv kernel is 4x4
_M = 5                      # conv2-output phase grid (10 = 2*_M)
_H3 = 4                     # conv3 output spatial size (== pool target)
_C1, _C2, _C3 = 8, 16, 32
_NFEAT = _C3 * _H3 * _H3    # 512
_BLK = 32                   # padded rows per (phase, batch) block (25 -> 32)
_P1C = _K * _K * (_K * _K * 3)   # 768 = 16 taps x (4*4*3) patch


# ----------------------------------------------------------------------------
# Fused forward kernel
# ----------------------------------------------------------------------------
def _prior_fused_kernel(p1_ref, w1_ref, b1_ref, w2_ref, b2_ref, w3_ref, b3_ref,
                        wfc_ref, bfc_ref, wd_ref, bd_ref, wml_ref, bml_ref,
                        g_ref, eps_ref,
                        out_ref,
                        s2_ref,
                        *, batch, n_options, latent):
    B, D, L = batch, n_options, latent
    f32 = jnp.float32

    # ---- conv1 (+BN1 in, +BN2+ReLU) and conv2 (+BN3+ReLU): two dense matmuls.
    # p1 rows: (ph_h, ph_w, b, 5x5 grid padded to 32); cols: 16 conv1 taps x
    # (4x4x3) patch.  w1 is block-diagonal so the 16 taps come out
    # lane-concatenated: h1 lanes = (tap g2, conv1 channel).
    h1 = jnp.maximum(
        jnp.dot(p1_ref[...], w1_ref[...], preferred_element_type=f32)
        + b1_ref[...], 0.0)
    s2_ref[...] = jnp.maximum(
        jnp.dot(h1.astype(w2_ref.dtype), w2_ref[...],
                preferred_element_type=f32) + b2_ref[...], 0.0)

    # ---- conv3 (k4, s2, +BN4+ReLU).  For tap (i3, j3), the conv2 pixel
    # feeding output (h, w) lives at relative row 5*(h + i3//2) + (w + j3//2)
    # of the phase block (i3%2, j3%2); a single 19-row window per (tap, b)
    # covers all 16 output pixels at relative rows 5*h + w (rows 4, 9, 14 are
    # junk and never read downstream).
    s3 = []
    for b in range(B):
        acc = jnp.zeros((19, _C3), f32)
        for i3 in range(_K):
            ai, ri = i3 // 2, i3 % 2
            for j3 in range(_K):
                aj, rj = j3 // 2, j3 % 2
                start = ((ri * 2 + rj) * B + b) * _BLK + ai * _M + aj
                win = s2_ref[start:start + 19, :]                    # (19, 16)
                g = i3 * _K + j3
                acc = acc + jnp.dot(win, w3_ref[g * _C2:(g + 1) * _C2, :],
                                    preferred_element_type=f32)
        s3.append(jnp.maximum(acc + b3_ref[...], 0.0))               # (19, 32)

    # ---- AdaptiveAvgPool2d((4,4)) is the identity here; fc + ReLU is a
    # 16-position accumulation, so the (h, w, c) flatten never materializes.
    feat = jnp.zeros((B, wfc_ref.shape[1]), f32)
    for h in range(_H3):
        for w in range(_H3):
            r = _M * h + w
            lhs = jnp.concatenate([s3[b][r:r + 1, :] for b in range(B)], axis=0)
            k = h * _H3 + w
            feat = feat + jnp.dot(lhs, wfc_ref[k * _C3:(k + 1) * _C3, :],
                                  preferred_element_type=f32)
    feat = jnp.maximum(feat + bfc_ref[...], 0.0)
    # nan_to_num(nan=0, posinf=1, neginf=-1)  (neginf branch is dead post-ReLU)
    feat = jnp.where(feat != feat, 0.0, feat)
    feat = jnp.where(feat == jnp.inf, 1.0, feat)
    feat = jnp.where(feat == -jnp.inf, -1.0, feat)

    # ---- discrete head: hard gumbel-softmax (forward value only) ------------
    logits = jnp.dot(feat, wd_ref[...], preferred_element_type=f32) + bd_ref[...]
    pert = logits + g_ref[...]
    maxv = jnp.max(pert, axis=-1, keepdims=True)
    iota = lax.broadcasted_iota(jnp.int32, (B, D), 1)
    first = jnp.min(jnp.where(pert >= maxv, iota, D), axis=-1, keepdims=True)
    onehot = (iota == first).astype(f32)

    # ---- all D mean heads + all D logstd heads in one lane-dense matmul;
    # select the chosen option's mean/logstd with the one-hot BEFORE exp.
    mls = jnp.dot(feat, wml_ref[...], preferred_element_type=f32) + bml_ref[...]
    DL = D * L
    z_mean = jnp.zeros((B, L), f32)
    logstd = jnp.zeros((B, L), f32)
    for d in range(D):
        sel = onehot[:, d:d + 1]
        z_mean = z_mean + sel * mls[:, d * L:(d + 1) * L]
        logstd = logstd + sel * mls[:, DL + d * L:DL + (d + 1) * L]
    z_std = jnp.exp(logstd)
    z = z_mean + z_std * eps_ref[...]

    # ---- packed lane-dense output: [logits | z | z_mean | z_std], one store -
    out_ref[...] = jnp.concatenate([logits, z, z_mean, z_std], axis=-1)


# ----------------------------------------------------------------------------
# Host-side weight folding / layout prep (tiny, one-time XLA ops)
# ----------------------------------------------------------------------------
def _bn_affine(bn):
    s = bn["gamma"] / jnp.sqrt(bn["var"] + _BN_EPS)
    t = bn["beta"] - bn["mean"] * s
    return s, t


def _conv_w_mat(w, post_scale):
    """(Cout,Cin,kh,kw) torch conv weight -> (kh*kw*Cin, Cout) matmul weight,
    with the post-conv BN scale folded into the output-channel columns."""
    cout = w.shape[0]
    return w.transpose(2, 3, 1, 0).reshape(-1, cout) * post_scale[None, :]


@jax.jit
def prior_forward(params, bev, rng):
    B, Cin, H, W = bev.shape
    assert Cin == 3 and H == _IN_HW and W == _IN_HW, \
        "fused kernel is specialized to 3x160x160 BEV inputs"
    D = params["disc_w"].shape[1]
    L = params["mean_w"].shape[-1]

    # Fold BatchNorms (eval mode) into conv weights / biases.
    s1, t1 = _bn_affine(params["bn1"])                        # pre-conv BN(3)
    w1 = params["conv1_w"] * s1[None, :, None, None]
    b1 = params["conv1_b"] + jnp.sum(
        params["conv1_w"] * t1[None, :, None, None], axis=(1, 2, 3))
    s2, t2 = _bn_affine(params["bn2"])
    w1m = _conv_w_mat(w1, s2)                                 # (48, 8)
    b1v = (b1 * s2 + t2).reshape(1, _C1)

    s3, t3 = _bn_affine(params["bn3"])
    w2m = _conv_w_mat(params["conv2_w"], s3)                  # (128, 16)
    b2v = (params["conv2_b"] * s3 + t3).reshape(1, _C2)

    s4, t4 = _bn_affine(params["bn4"])
    w3m = _conv_w_mat(params["conv3_w"], s4)                  # (256, 32)
    b3v = (params["conv3_b"] * s4 + t4).reshape(1, _C3)

    # Block-diagonal conv1 weight: the 16 conv1 taps of every conv2 pixel come
    # out lane-concatenated, so conv2 is a single K=128 contraction.
    eye = jnp.eye(_K * _K, dtype=w1m.dtype)
    w1bd = (eye[:, None, :, None] * w1m[None, :, None, :]) \
        .reshape(_P1C, _K * _K * _C1).astype(jnp.bfloat16)    # (768, 128)
    b1t = jnp.tile(b1v, (1, _K * _K))                         # (1, 128)

    # fc weight: torch flattens (C,H,W); the kernel consumes (H,W,C) rows.
    wfc = params["fc_w"].reshape(_C3, _H3, _H3, -1).transpose(1, 2, 0, 3) \
                        .reshape(_NFEAT, -1)
    bfc = params["fc_b"].reshape(1, -1)

    wd = params["disc_w"]
    bd = params["disc_b"].reshape(1, D)

    # All D mean heads and D logstd heads packed into one (256, 2*D*L) matmul.
    wml = jnp.concatenate(
        [params["mean_w"].transpose(1, 0, 2).reshape(-1, D * L),
         params["logstd_w"].transpose(1, 0, 2).reshape(-1, D * L)], axis=1)
    bml = jnp.concatenate(
        [params["mean_b"].reshape(-1), params["logstd_b"].reshape(-1)]
    ).reshape(1, 2 * D * L)

    # conv1 im2col (bf16): one row per conv2 output pixel, 16 conv1 taps
    # lane-concatenated.  Row order (ph_h, ph_w, b, 5x5 grid padded to 32);
    # col order (i2, j2, kh1, kw1, cin).  H = 160 decomposes as
    # (m:5, ph_h:2, i2:4, kh1:4); same for W.
    x = bev.astype(jnp.bfloat16).reshape(B, 3, _M, 2, _K, _K, _M, 2, _K, _K)
    p1 = x.transpose(3, 7, 0, 2, 6, 4, 8, 5, 9, 1) \
          .reshape(4 * B, _M * _M, _P1C)
    p1 = jnp.pad(p1, ((0, 0), (0, _BLK - _M * _M), (0, 0))) \
            .reshape(4 * B * _BLK, _P1C)

    k_g, k_n = jax.random.split(rng)
    gumbel = jax.random.gumbel(k_g, (B, D), dtype=jnp.float32)
    eps = jax.random.normal(k_n, (B, L), dtype=jnp.float32)

    vmem = pl.BlockSpec(memory_space=pltpu.MemorySpace.VMEM)
    packed = pl.pallas_call(
        functools.partial(_prior_fused_kernel, batch=B, n_options=D, latent=L),
        out_shape=jax.ShapeDtypeStruct((B, D + 3 * L), jnp.float32),
        in_specs=[vmem] * 15,
        out_specs=vmem,
        scratch_shapes=[
            pltpu.VMEM((4 * B * _BLK, _C2), jnp.float32),     # conv2 output
        ],
    )(p1, w1bd, b1t, w2m.astype(jnp.bfloat16), b2v, w3m, b3v,
      wfc, bfc, wd, bd, wml, bml, gumbel, eps)

    logits = packed[:, :D]
    z = packed[:, D:D + L]
    z_mean = packed[:, D + L:D + 2 * L]
    z_std = packed[:, D + 2 * L:]
    return z, logits, z_mean, z_std


# ----------------------------------------------------------------------------
# Deterministic synthetic parameter init (shapes follow Prior.__init__)
# ----------------------------------------------------------------------------
def init_params(key, latent_dim, discrete_option):
    keys = jax.random.split(key, 18)

    def w(k, shape, scale=0.05):
        return (scale * jax.random.normal(k, shape)).astype(jnp.float32)

    def bn(k, c):
        k1, k2, k3, k4 = jax.random.split(k, 4)
        return dict(
            gamma=(1.0 + 0.1 * jax.random.normal(k1, (c,))).astype(jnp.float32),
            beta=w(k2, (c,), 0.1),
            mean=w(k3, (c,), 0.1),
            var=(0.5 + jax.random.uniform(k4, (c,))).astype(jnp.float32),
        )

    D, L = discrete_option, latent_dim
    return dict(
        bn1=bn(keys[0], 3),
        conv1_w=w(keys[1], (8, 3, 4, 4)), conv1_b=w(keys[2], (8,)),
        bn2=bn(keys[3], 8),
        conv2_w=w(keys[4], (16, 8, 4, 4)), conv2_b=w(keys[5], (16,)),
        bn3=bn(keys[6], 16),
        conv3_w=w(keys[7], (32, 16, 4, 4)), conv3_b=w(keys[8], (32,)),
        bn4=bn(keys[9], 32),
        fc_w=w(keys[10], (512, 256)), fc_b=w(keys[11], (256,)),
        disc_w=w(keys[12], (256, D)), disc_b=w(keys[13], (D,)),
        mean_w=w(keys[14], (D, 256, L)), mean_b=w(keys[15], (D, L)),
        logstd_w=w(keys[16], (D, 256, L)), logstd_b=w(keys[17], (D, L)),
    )


if __name__ == "__main__":
    key = jax.random.PRNGKey(0)
    kp, kx, kr = jax.random.split(key, 3)
    latent_dim, discrete_option = 8, 4
    params = init_params(kp, latent_dim, discrete_option)
    # NCHW input like PyTorch; 160x160 makes the conv stack produce exactly
    # 4x4 spatial output (40 -> 10 -> 4) so AdaptiveAvgPool2d((4,4)) is identity.
    bev = jax.random.normal(kx, (2, 3, 160, 160), dtype=jnp.float32)

    z, logits, z_mean, z_std = prior_forward(params, bev, kr)
    jax.block_until_ready((z, logits, z_mean, z_std))
    assert z.shape == (2, latent_dim)
    assert logits.shape == (2, discrete_option)
    assert z_mean.shape == (2, latent_dim)
    assert z_std.shape == (2, latent_dim)
    assert bool(jnp.isfinite(z).all()) and bool(jnp.isfinite(logits).all())
    assert bool((z_std > 0).all())
    print("KERNEL_OK")
</pallas_src>

<mosaic_0001>
module attributes {stable_mosaic.version = 11 : i64} {
  func.func @_prior_fused_kernel(%arg0: memref<256x768xbf16, #tpu.memory_space<vmem>>, %arg1: memref<768x128xbf16, #tpu.memory_space<vmem>>, %arg2: memref<1x128xf32, #tpu.memory_space<vmem>>, %arg3: memref<128x16xbf16, #tpu.memory_space<vmem>>, %arg4: memref<1x16xf32, #tpu.memory_space<vmem>>, %arg5: memref<256x32xf32, #tpu.memory_space<vmem>>, %arg6: memref<1x32xf32, #tpu.memory_space<vmem>>, %arg7: memref<512x256xf32, #tpu.memory_space<vmem>>, %arg8: memref<1x256xf32, #tpu.memory_space<vmem>>, %arg9: memref<256x4xf32, #tpu.memory_space<vmem>>, %arg10: memref<1x4xf32, #tpu.memory_space<vmem>>, %arg11: memref<256x64xf32, #tpu.memory_space<vmem>>, %arg12: memref<1x64xf32, #tpu.memory_space<vmem>>, %arg13: memref<2x4xf32, #tpu.memory_space<vmem>>, %arg14: memref<2x8xf32, #tpu.memory_space<vmem>>, %arg15: memref<2x28xf32, #tpu.memory_space<vmem>>, %arg16: memref<256x16xf32, #tpu.memory_space<vmem>>) attributes {dimension_semantics = [], scalar_prefetch = 0 : i64, scratch_operands = 1 : i64, tpu.core_type = #tpu.core_type<tc>} {
    %c0 = arith.constant 0 : index
    %c0_0 = arith.constant 0 : index
    %0 = vector.load %arg0[%c0, %c0_0] : memref<256x768xbf16, #tpu.memory_space<vmem>>, vector<256x768xbf16>
    %c0_1 = arith.constant 0 : index
    %c0_2 = arith.constant 0 : index
    %1 = vector.load %arg1[%c0_1, %c0_2] : memref<768x128xbf16, #tpu.memory_space<vmem>>, vector<768x128xbf16>
    %cst = arith.constant dense<0.000000e+00> : vector<256x128xf32>
    %2 = tpu.matmul %0, %1, %cst {dimension_numbers = #tpu.dot_dimension_numbers<[1], [0], [0], [1], [0, 0, 1, 1], [], []>} : vector<256x768xbf16>, vector<768x128xbf16>, vector<256x128xf32> -> vector<256x128xf32>
    %c0_3 = arith.constant 0 : index
    %c0_4 = arith.constant 0 : index
    %3 = vector.load %arg2[%c0_3, %c0_4] : memref<1x128xf32, #tpu.memory_space<vmem>>, vector<1x128xf32>
    %4 = vector.broadcast %3 : vector<1x128xf32> to vector<256x128xf32>
    %5 = arith.addf %2, %4 : vector<256x128xf32>
    %cst_5 = arith.constant 0.000000e+00 : f32
    %6 = vector.broadcast %cst_5 : f32 to vector<256x128xf32>
    %7 = arith.maximumf %5, %6 : vector<256x128xf32>
    %8 = arith.truncf %7 : vector<256x128xf32> to vector<256x128xbf16>
    %c0_6 = arith.constant 0 : index
    %c0_7 = arith.constant 0 : index
    %9 = vector.load %arg3[%c0_6, %c0_7] : memref<128x16xbf16, #tpu.memory_space<vmem>>, vector<128x16xbf16>
    %cst_8 = arith.constant dense<0.000000e+00> : vector<256x16xf32>
    %10 = tpu.matmul %8, %9, %cst_8 {dimension_numbers = #tpu.dot_dimension_numbers<[1], [0], [0], [1], [0, 0, 1, 1], [], []>} : vector<256x128xbf16>, vector<128x16xbf16>, vector<256x16xf32> -> vector<256x16xf32>
    %c0_9 = arith.constant 0 : index
    %c0_10 = arith.constant 0 : index
    %11 = vector.load %arg4[%c0_9, %c0_10] : memref<1x16xf32, #tpu.memory_space<vmem>>, vector<1x16xf32>
    %12 = vector.broadcast %11 : vector<1x16xf32> to vector<256x16xf32>
    %13 = arith.addf %10, %12 : vector<256x16xf32>
    %cst_11 = arith.constant 0.000000e+00 : f32
    %14 = vector.broadcast %cst_11 : f32 to vector<256x16xf32>
    %15 = arith.maximumf %13, %14 : vector<256x16xf32>
    %c0_12 = arith.constant 0 : index
    %c0_13 = arith.constant 0 : index
    %16 = vector.load %arg16[%c0_12, %c0_13] : memref<256x16xf32, #tpu.memory_space<vmem>>, vector<256x16xf32>
    tpu.vector_store %arg16[%c0_12, %c0_13], %15 {strides = array<i32>} : memref<256x16xf32, #tpu.memory_space<vmem>>, vector<256x16xf32>,
    %cst_14 = arith.constant 0.000000e+00 : f32
    %17 = vector.broadcast %cst_14 : f32 to vector<19x32xf32>
    %c0_15 = arith.constant 0 : index
    %c0_16 = arith.constant 0 : index
    %18 = vector.load %arg16[%c0_15, %c0_16] : memref<256x16xf32, #tpu.memory_space<vmem>>, vector<19x16xf32>
    %c0_17 = arith.constant 0 : index
    %c0_18 = arith.constant 0 : index
    %19 = vector.load %arg5[%c0_17, %c0_18] : memref<256x32xf32, #tpu.memory_space<vmem>>, vector<16x32xf32>
    %cst_19 = arith.constant dense<0.000000e+00> : vector<19x32xf32>
    %20 = tpu.matmul %18, %19, %cst_19 {dimension_numbers = #tpu.dot_dimension_numbers<[1], [0], [0], [1], [0, 0, 1, 1], [], []>} : vector<19x16xf32>, vector<16x32xf32>, vector<19x32xf32> -> vector<19x32xf32>
    %21 = arith.addf %17, %20 : vector<19x32xf32>
    %c64 = arith.constant 64 : index
    %c0_20 = arith.constant 0 : index
    %22 = vector.load %arg16[%c64, %c0_20] : memref<256x16xf32, #tpu.memory_space<vmem>>, vector<19x16xf32>
    %c16 = arith.constant 16 : index
    %c0_21 = arith.constant 0 : index
    %23 = vector.load %arg5[%c16, %c0_21] : memref<256x32xf32, #tpu.memory_space<vmem>>, vector<16x32xf32>
    %cst_22 = arith.constant dense<0.000000e+00> : vector<19x32xf32>
    %24 = tpu.matmul %22, %23, %cst_22 {dimension_numbers = #tpu.dot_dimension_numbers<[1], [0], [0], [1], [0, 0, 1, 1], [], []>} : vector<19x16xf32>, vector<16x32xf32>, vector<19x32xf32> -> vector<19x32xf32>
    %25 = arith.addf %21, %24 : vector<19x32xf32>
    %c1 = arith.constant 1 : index
    %c0_23 = arith.constant 0 : index
    %26 = vector.load %arg16[%c1, %c0_23] : memref<256x16xf32, #tpu.memory_space<vmem>>, vector<19x16xf32>
    %c32 = arith.constant 32 : index
    %c0_24 = arith.constant 0 : index
    %27 = vector.load %arg5[%c32, %c0_24] : memref<256x32xf32, #tpu.memory_space<vmem>>, vector<16x32xf32>
    %cst_25 = arith.constant dense<0.000000e+00> : vector<19x32xf32>
    %28 = tpu.matmul %26, %27, %cst_25 {dimension_numbers = #tpu.dot_dimension_numbers<[1], [0], [0], [1], [0, 0, 1, 1], [], []>} : vector<19x16xf32>, vector<16x32xf32>, vector<19x32xf32> -> vector<19x32xf32>
    %29 = arith.addf %25, %28 : vector<19x32xf32>
    %c65 = arith.constant 65 : index
    %c0_26 = arith.constant 0 : index
    %30 = vector.load %arg16[%c65, %c0_26] : memref<256x16xf32, #tpu.memory_space<vmem>>, vector<19x16xf32>
    %c48 = arith.constant 48 : index
    %c0_27 = arith.constant 0 : index
    %31 = vector.load %arg5[%c48, %c0_27] : memref<256x32xf32, #tpu.memory_space<vmem>>, vector<16x32xf32>
    %cst_28 = arith.constant dense<0.000000e+00> : vector<19x32xf32>
    %32 = tpu.matmul %30, %31, %cst_28 {dimension_numbers = #tpu.dot_dimension_numbers<[1], [0], [0], [1], [0, 0, 1, 1], [], []>} : vector<19x16xf32>, vector<16x32xf32>, vector<19x32xf32> -> vector<19x32xf32>
    %33 = arith.addf %29, %32 : vector<19x32xf32>
    %c128 = arith.constant 128 : index
    %c0_29 = arith.constant 0 : index
    %34 = vector.load %arg16[%c128, %c0_29] : memref<256x16xf32, #tpu.memory_space<vmem>>, vector<19x16xf32>
    %c64_30 = arith.constant 64 : index
    %c0_31 = arith.constant 0 : index
    %35 = vector.load %arg5[%c64_30, %c0_31] : memref<256x32xf32, #tpu.memory_space<vmem>>, vector<16x32xf32>
    %cst_32 = arith.constant dense<0.000000e+00> : vector<19x32xf32>
    %36 = tpu.matmul %34, %35, %cst_32 {dimension_numbers = #tpu.dot_dimension_numbers<[1], [0], [0], [1], [0, 0, 1, 1], [], []>} : vector<19x16xf32>, vector<16x32xf32>, vector<19x32xf32> -> vector<19x32xf32>
    %37 = arith.addf %33, %36 : vector<19x32xf32>
    %c192 = arith.constant 192 : index
    %c0_33 = arith.constant 0 : index
    %38 = vector.load %arg16[%c192, %c0_33] : memref<256x16xf32, #tpu.memory_space<vmem>>, vector<19x16xf32>
    %c80 = arith.constant 80 : index
    %c0_34 = arith.constant 0 : index
    %39 = vector.load %arg5[%c80, %c0_34] : memref<256x32xf32, #tpu.memory_space<vmem>>, vector<16x32xf32>
    %cst_35 = arith.constant dense<0.000000e+00> : vector<19x32xf32>
    %40 = tpu.matmul %38, %39, %cst_35 {dimension_numbers = #tpu.dot_dimension_numbers<[1], [0], [0], [1], [0, 0, 1, 1], [], []>} : vector<19x16xf32>, vector<16x32xf32>, vector<19x32xf32> -> vector<19x32xf32>
    %41 = arith.addf %37, %40 : vector<19x32xf32>
    %c129 = arith.constant 129 : index
    %c0_36 = arith.constant 0 : index
    %42 = vector.load %arg16[%c129, %c0_36] : memref<256x16xf32, #tpu.memory_space<vmem>>, vector<19x16xf32>
    %c96 = arith.constant 96 : index
    %c0_37 = arith.constant 0 : index
    %43 = vector.load %arg5[%c96, %c0_37] : memref<256x32xf32, #tpu.memory_space<vmem>>, vector<16x32xf32>
    %cst_38 = arith.constant dense<0.000000e+00> : vector<19x32xf32>
    %44 = tpu.matmul %42, %43, %cst_38 {dimension_numbers = #tpu.dot_dimension_numbers<[1], [0], [0], [1], [0, 0, 1, 1], [], []>} : vector<19x16xf32>, vector<16x32xf32>, vector<19x32xf32> -> vector<19x32xf32>
    %45 = arith.addf %41, %44 : vector<19x32xf32>
    %c193 = arith.constant 193 : index
    %c0_39 = arith.constant 0 : index
    %46 = vector.load %arg16[%c193, %c0_39] : memref<256x16xf32, #tpu.memory_space<vmem>>, vector<19x16xf32>
    %c112 = arith.constant 112 : index
    %c0_40 = arith.constant 0 : index
    %47 = vector.load %arg5[%c112, %c0_40] : memref<256x32xf32, #tpu.memory_space<vmem>>, vector<16x32xf32>
    %cst_41 = arith.constant dense<0.000000e+00> : vector<19x32xf32>
    %48 = tpu.matmul %46, %47, %cst_41 {dimension_numbers = #tpu.dot_dimension_numbers<[1], [0], [0], [1], [0, 0, 1, 1], [], []>} : vector<19x16xf32>, vector<16x32xf32>, vector<19x32xf32> -> vector<19x32xf32>
    %49 = arith.addf %45, %48 : vector<19x32xf32>
    %c5 = arith.constant 5 : index
    %c0_42 = arith.constant 0 : index
    %50 = vector.load %arg16[%c5, %c0_42] : memref<256x16xf32, #tpu.memory_space<vmem>>, vector<19x16xf32>
    %c128_43 = arith.constant 128 : index
    %c0_44 = arith.constant 0 : index
    %51 = vector.load %arg5[%c128_43, %c0_44] : memref<256x32xf32, #tpu.memory_space<vmem>>, vector<16x32xf32>
    %cst_45 = arith.constant dense<0.000000e+00> : vector<19x32xf32>
    %52 = tpu.matmul %50, %51, %cst_45 {dimension_numbers = #tpu.dot_dimension_numbers<[1], [0], [0], [1], [0, 0, 1, 1], [], []>} : vector<19x16xf32>, vector<16x32xf32>, vector<19x32xf32> -> vector<19x32xf32>
    %53 = arith.addf %49, %52 : vector<19x32xf32>
    %c69 = arith.constant 69 : index
    %c0_46 = arith.constant 0 : index
    %54 = vector.load %arg16[%c69, %c0_46] : memref<256x16xf32, #tpu.memory_space<vmem>>, vector<19x16xf32>
    %c144 = arith.constant 144 : index
    %c0_47 = arith.constant 0 : index
    %55 = vector.load %arg5[%c144, %c0_47] : memref<256x32xf32, #tpu.memory_space<vmem>>, vector<16x32xf32>
    %cst_48 = arith.constant dense<0.000000e+00> : vector<19x32xf32>
    %56 = tpu.matmul %54, %55, %cst_48 {dimension_numbers = #tpu.dot_dimension_numbers<[1], [0], [0], [1], [0, 0, 1, 1], [], []>} : vector<19x16xf32>, vector<16x32xf32>, vector<19x32xf32> -> vector<19x32xf32>
    %57 = arith.addf %53, %56 : vector<19x32xf32>
    %c6 = arith.constant 6 : index
    %c0_49 = arith.constant 0 : index
    %58 = vector.load %arg16[%c6, %c0_49] : memref<256x16xf32, #tpu.memory_space<vmem>>, vector<19x16xf32>
    %c160 = arith.constant 160 : index
    %c0_50 = arith.constant 0 : index
    %59 = vector.load %arg5[%c160, %c0_50] : memref<256x32xf32, #tpu.memory_space<vmem>>, vector<16x32xf32>
    %cst_51 = arith.constant dense<0.000000e+00> : vector<19x32xf32>
    %60 = tpu.matmul %58, %59, %cst_51 {dimension_numbers = #tpu.dot_dimension_numbers<[1], [0], [0], [1], [0, 0, 1, 1], [], []>} : vector<19x16xf32>, vector<16x32xf32>, vector<19x32xf32> -> vector<19x32xf32>
    %61 = arith.addf %57, %60 : vector<19x32xf32>
    %c70 = arith.constant 70 : index
    %c0_52 = arith.constant 0 : index
    %62 = vector.load %arg16[%c70, %c0_52] : memref<256x16xf32, #tpu.memory_space<vmem>>, vector<19x16xf32>
    %c176 = arith.constant 176 : index
    %c0_53 = arith.constant 0 : index
    %63 = vector.load %arg5[%c176, %c0_53] : memref<256x32xf32, #tpu.memory_space<vmem>>, vector<16x32xf32>
    %cst_54 = arith.constant dense<0.000000e+00> : vector<19x32xf32>
    %64 = tpu.matmul %62, %63, %cst_54 {dimension_numbers = #tpu.dot_dimension_numbers<[1], [0], [0], [1], [0, 0, 1, 1], [], []>} : vector<19x16xf32>, vector<16x32xf32>, vector<19x32xf32> -> vector<19x32xf32>
    %65 = arith.addf %61, %64 : vector<19x32xf32>
    %c133 = arith.constant 133 : index
    %c0_55 = arith.constant 0 : index
    %66 = vector.load %arg16[%c133, %c0_55] : memref<256x16xf32, #tpu.memory_space<vmem>>, vector<19x16xf32>
    %c192_56 = arith.constant 192 : index
    %c0_57 = arith.constant 0 : index
    %67 = vector.load %arg5[%c192_56, %c0_57] : memref<256x32xf32, #tpu.memory_space<vmem>>, vector<16x32xf32>
    %cst_58 = arith.constant dense<0.000000e+00> : vector<19x32xf32>
    %68 = tpu.matmul %66, %67, %cst_58 {dimension_numbers = #tpu.dot_dimension_numbers<[1], [0], [0], [1], [0, 0, 1, 1], [], []>} : vector<19x16xf32>, vector<16x32xf32>, vector<19x32xf32> -> vector<19x32xf32>
    %69 = arith.addf %65, %68 : vector<19x32xf32>
    %c197 = arith.constant 197 : index
    %c0_59 = arith.constant 0 : index
    %70 = vector.load %arg16[%c197, %c0_59] : memref<256x16xf32, #tpu.memory_space<vmem>>, vector<19x16xf32>
    %c208 = arith.constant 208 : index
    %c0_60 = arith.constant 0 : index
    %71 = vector.load %arg5[%c208, %c0_60] : memref<256x32xf32, #tpu.memory_space<vmem>>, vector<16x32xf32>
    %cst_61 = arith.constant dense<0.000000e+00> : vector<19x32xf32>
    %72 = tpu.matmul %70, %71, %cst_61 {dimension_numbers = #tpu.dot_dimension_numbers<[1], [0], [0], [1], [0, 0, 1, 1], [], []>} : vector<19x16xf32>, vector<16x32xf32>, vector<19x32xf32> -> vector<19x32xf32>
    %73 = arith.addf %69, %72 : vector<19x32xf32>
    %c134 = arith.constant 134 : index
    %c0_62 = arith.constant 0 : index
    %74 = vector.load %arg16[%c134, %c0_62] : memref<256x16xf32, #tpu.memory_space<vmem>>, vector<19x16xf32>
    %c224 = arith.constant 224 : index
    %c0_63 = arith.constant 0 : index
    %75 = vector.load %arg5[%c224, %c0_63] : memref<256x32xf32, #tpu.memory_space<vmem>>, vector<16x32xf32>
    %cst_64 = arith.constant dense<0.000000e+00> : vector<19x32xf32>
    %76 = tpu.matmul %74, %75, %cst_64 {dimension_numbers = #tpu.dot_dimension_numbers<[1], [0], [0], [1], [0, 0, 1, 1], [], []>} : vector<19x16xf32>, vector<16x32xf32>, vector<19x32xf32> -> vector<19x32xf32>
    %77 = arith.addf %73, %76 : vector<19x32xf32>
    %c198 = arith.constant 198 : index
    %c0_65 = arith.constant 0 : index
    %78 = vector.load %arg16[%c198, %c0_65] : memref<256x16xf32, #tpu.memory_space<vmem>>, vector<19x16xf32>
    %c240 = arith.constant 240 : index
    %c0_66 = arith.constant 0 : index
    %79 = vector.load %arg5[%c240, %c0_66] : memref<256x32xf32, #tpu.memory_space<vmem>>, vector<16x32xf32>
    %cst_67 = arith.constant dense<0.000000e+00> : vector<19x32xf32>
    %80 = tpu.matmul %78, %79, %cst_67 {dimension_numbers = #tpu.dot_dimension_numbers<[1], [0], [0], [1], [0, 0, 1, 1], [], []>} : vector<19x16xf32>, vector<16x32xf32>, vector<19x32xf32> -> vector<19x32xf32>
    %81 = arith.addf %77, %80 : vector<19x32xf32>
    %c0_68 = arith.constant 0 : index
    %c0_69 = arith.constant 0 : index
    %82 = vector.load %arg6[%c0_68, %c0_69] : memref<1x32xf32, #tpu.memory_space<vmem>>, vector<1x32xf32>
    %83 = vector.broadcast %82 : vector<1x32xf32> to vector<19x32xf32>
    %84 = arith.addf %81, %83 : vector<19x32xf32>
    %cst_70 = arith.constant 0.000000e+00 : f32
    %85 = vector.broadcast %cst_70 : f32 to vector<19x32xf32>
    %86 = arith.maximumf %84, %85 : vector<19x32xf32>
    %cst_71 = arith.constant 0.000000e+00 : f32
    %87 = vector.broadcast %cst_71 : f32 to vector<19x32xf32>
    %c32_72 = arith.constant 32 : index
    %c0_73 = arith.constant 0 : index
    %88 = vector.load %arg16[%c32_72, %c0_73] : memref<256x16xf32, #tpu.memory_space<vmem>>, vector<19x16xf32>
    %c0_74 = arith.constant 0 : index
    %c0_75 = arith.constant 0 : index
    %89 = vector.load %arg5[%c0_74, %c0_75] : memref<256x32xf32, #tpu.memory_space<vmem>>, vector<16x32xf32>
    %cst_76 = arith.constant dense<0.000000e+00> : vector<19x32xf32>
    %90 = tpu.matmul %88, %89, %cst_76 {dimension_numbers = #tpu.dot_dimension_numbers<[1], [0], [0], [1], [0, 0, 1, 1], [], []>} : vector<19x16xf32>, vector<16x32xf32>, vector<19x32xf32> -> vector<19x32xf32>
    %91 = arith.addf %87, %90 : vector<19x32xf32>
    %c96_77 = arith.constant 96 : index
    %c0_78 = arith.constant 0 : index
    %92 = vector.load %arg16[%c96_77, %c0_78] : memref<256x16xf32, #tpu.memory_space<vmem>>, vector<19x16xf32>
    %c16_79 = arith.constant 16 : index
    %c0_80 = arith.constant 0 : index
    %93 = vector.load %arg5[%c16_79, %c0_80] : memref<256x32xf32, #tpu.memory_space<vmem>>, vector<16x32xf32>
    %cst_81 = arith.constant dense<0.000000e+00> : vector<19x32xf32>
    %94 = tpu.matmul %92, %93, %cst_81 {dimension_numbers = #tpu.dot_dimension_numbers<[1], [0], [0], [1], [0, 0, 1, 1], [], []>} : vector<19x16xf32>, vector<16x32xf32>, vector<19x32xf32> -> vector<19x32xf32>
    %95 = arith.addf %91, %94 : vector<19x32xf32>
    %c33 = arith.constant 33 : index
    %c0_82 = arith.constant 0 : index
    %96 = vector.load %arg16[%c33, %c0_82] : memref<256x16xf32, #tpu.memory_space<vmem>>, vector<19x16xf32>
    %c32_83 = arith.constant 32 : index
    %c0_84 = arith.constant 0 : index
    %97 = vector.load %arg5[%c32_83, %c0_84] : memref<256x32xf32, #tpu.memory_space<vmem>>, vector<16x32xf32>
    %cst_85 = arith.constant dense<0.000000e+00> : vector<19x32xf32>
    %98 = tpu.matmul %96, %97, %cst_85 {dimension_numbers = #tpu.dot_dimension_numbers<[1], [0], [0], [1], [0, 0, 1, 1], [], []>} : vector<19x16xf32>, vector<16x32xf32>, vector<19x32xf32> -> vector<19x32xf32>
    %99 = arith.addf %95, %98 : vector<19x32xf32>
    %c97 = arith.constant 97 : index
    %c0_86 = arith.constant 0 : index
    %100 = vector.load %arg16[%c97, %c0_86] : memref<256x16xf32, #tpu.memory_space<vmem>>, vector<19x16xf32>
    %c48_87 = arith.constant 48 : index
    %c0_88 = arith.constant 0 : index
    %101 = vector.load %arg5[%c48_87, %c0_88] : memref<256x32xf32, #tpu.memory_space<vmem>>, vector<16x32xf32>
    %cst_89 = arith.constant dense<0.000000e+00> : vector<19x32xf32>
    %102 = tpu.matmul %100, %101, %cst_89 {dimension_numbers = #tpu.dot_dimension_numbers<[1], [0], [0], [1], [0, 0, 1, 1], [], []>} : vector<19x16xf32>, vector<16x32xf32>, vector<19x32xf32> -> vector<19x32xf32>
    %103 = arith.addf %99, %102 : vector<19x32xf32>
    %c160_90 = arith.constant 160 : index
    %c0_91 = arith.constant 0 : index
    %104 = vector.load %arg16[%c160_90, %c0_91] : memref<256x16xf32, #tpu.memory_space<vmem>>, vector<19x16xf32>
    %c64_92 = arith.constant 64 : index
    %c0_93 = arith.constant 0 : index
    %105 = vector.load %arg5[%c64_92, %c0_93] : memref<256x32xf32, #tpu.memory_space<vmem>>, vector<16x32xf32>
    %cst_94 = arith.constant dense<0.000000e+00> : vector<19x32xf32>
    %106 = tpu.matmul %104, %105, %cst_94 {dimension_numbers = #tpu.dot_dimension_numbers<[1], [0], [0], [1], [0, 0, 1, 1], [], []>} : vector<19x16xf32>, vector<16x32xf32>, vector<19x32xf32> -> vector<19x32xf32>
    %107 = arith.addf %103, %106 : vector<19x32xf32>
    %c224_95 = arith.constant 224 : index
    %c0_96 = arith.constant 0 : index
    %108 = vector.load %arg16[%c224_95, %c0_96] : memref<256x16xf32, #tpu.memory_space<vmem>>, vector<19x16xf32>
    %c80_97 = arith.constant 80 : index
    %c0_98 = arith.constant 0 : index
    %109 = vector.load %arg5[%c80_97, %c0_98] : memref<256x32xf32, #tpu.memory_space<vmem>>, vector<16x32xf32>
    %cst_99 = arith.constant dense<0.000000e+00> : vector<19x32xf32>
    %110 = tpu.matmul %108, %109, %cst_99 {dimension_numbers = #tpu.dot_dimension_numbers<[1], [0], [0], [1], [0, 0, 1, 1], [], []>} : vector<19x16xf32>, vector<16x32xf32>, vector<19x32xf32> -> vector<19x32xf32>
    %111 = arith.addf %107, %110 : vector<19x32xf32>
    %c161 = arith.constant 161 : index
    %c0_100 = arith.constant 0 : index
    %112 = vector.load %arg16[%c161, %c0_100] : memref<256x16xf32, #tpu.memory_space<vmem>>, vector<19x16xf32>
    %c96_101 = arith.constant 96 : index
    %c0_102 = arith.constant 0 : index
    %113 = vector.load %arg5[%c96_101, %c0_102] : memref<256x32xf32, #tpu.memory_space<vmem>>, vector<16x32xf32>
    %cst_103 = arith.constant dense<0.000000e+00> : vector<19x32xf32>
    %114 = tpu.matmul %112, %113, %cst_103 {dimension_numbers = #tpu.dot_dimension_numbers<[1], [0], [0], [1], [0, 0, 1, 1], [], []>} : vector<19x16xf32>, vector<16x32xf32>, vector<19x32xf32> -> vector<19x32xf32>
    %115 = arith.addf %111, %114 : vector<19x32xf32>
    %c225 = arith.constant 225 : index
    %c0_104 = arith.constant 0 : index
    %116 = vector.load %arg16[%c225, %c0_104] : memref<256x16xf32, #tpu.memory_space<vmem>>, vector<19x16xf32>
    %c112_105 = arith.constant 112 : index
    %c0_106 = arith.constant 0 : index
    %117 = vector.load %arg5[%c112_105, %c0_106] : memref<256x32xf32, #tpu.memory_space<vmem>>, vector<16x32xf32>
    %cst_107 = arith.constant dense<0.000000e+00> : vector<19x32xf32>
    %118 = tpu.matmul %116, %117, %cst_107 {dimension_numbers = #tpu.dot_dimension_numbers<[1], [0], [0], [1], [0, 0, 1, 1], [], []>} : vector<19x16xf32>, vector<16x32xf32>, vector<19x32xf32> -> vector<19x32xf32>
    %119 = arith.addf %115, %118 : vector<19x32xf32>
    %c37 = arith.constant 37 : index
    %c0_108 = arith.constant 0 : index
    %120 = vector.load %arg16[%c37, %c0_108] : memref<256x16xf32, #tpu.memory_space<vmem>>, vector<19x16xf32>
    %c128_109 = arith.constant 128 : index
    %c0_110 = arith.constant 0 : index
    %121 = vector.load %arg5[%c128_109, %c0_110] : memref<256x32xf32, #tpu.memory_space<vmem>>, vector<16x32xf32>
    %cst_111 = arith.constant dense<0.000000e+00> : vector<19x32xf32>
    %122 = tpu.matmul %120, %121, %cst_111 {dimension_numbers = #tpu.dot_dimension_numbers<[1], [0], [0], [1], [0, 0, 1, 1], [], []>} : vector<19x16xf32>, vector<16x32xf32>, vector<19x32xf32> -> vector<19x32xf32>
    %123 = arith.addf %119, %122 : vector<19x32xf32>
    %c101 = arith.constant 101 : index
    %c0_112 = arith.constant 0 : index
    %124 = vector.load %arg16[%c101, %c0_112] : memref<256x16xf32, #tpu.memory_space<vmem>>, vector<19x16xf32>
    %c144_113 = arith.constant 144 : index
    %c0_114 = arith.constant 0 : index
    %125 = vector.load %arg5[%c144_113, %c0_114] : memref<256x32xf32, #tpu.memory_space<vmem>>, vector<16x32xf32>
    %cst_115 = arith.constant dense<0.000000e+00> : vector<19x32xf32>
    %126 = tpu.matmul %124, %125, %cst_115 {dimension_numbers = #tpu.dot_dimension_numbers<[1], [0], [0], [1], [0, 0, 1, 1], [], []>} : vector<19x16xf32>, vector<16x32xf32>, vector<19x32xf32> -> vector<19x32xf32>
    %127 = arith.addf %123, %126 : vector<19x32xf32>
    %c38 = arith.constant 38 : index
    %c0_116 = arith.constant 0 : index
    %128 = vector.load %arg16[%c38, %c0_116] : memref<256x16xf32, #tpu.memory_space<vmem>>, vector<19x16xf32>
    %c160_117 = arith.constant 160 : index
    %c0_118 = arith.constant 0 : index
    %129 = vector.load %arg5[%c160_117, %c0_118] : memref<256x32xf32, #tpu.memory_space<vmem>>, vector<16x32xf32>
    %cst_119 = arith.constant dense<0.000000e+00> : vector<19x32xf32>
    %130 = tpu.matmul %128, %129, %cst_119 {dimension_numbers = #tpu.dot_dimension_numbers<[1], [0], [0], [1], [0, 0, 1, 1], [], []>} : vector<19x16xf32>, vector<16x32xf32>, vector<19x32xf32> -> vector<19x32xf32>
    %131 = arith.addf %127, %130 : vector<19x32xf32>
    %c102 = arith.constant 102 : index
    %c0_120 = arith.constant 0 : index
    %132 = vector.load %arg16[%c102, %c0_120] : memref<256x16xf32, #tpu.memory_space<vmem>>, vector<19x16xf32>
    %c176_121 = arith.constant 176 : index
    %c0_122 = arith.constant 0 : index
    %133 = vector.load %arg5[%c176_121, %c0_122] : memref<256x32xf32, #tpu.memory_space<vmem>>, vector<16x32xf32>
    %cst_123 = arith.constant dense<0.000000e+00> : vector<19x32xf32>
    %134 = tpu.matmul %132, %133, %cst_123 {dimension_numbers = #tpu.dot_dimension_numbers<[1], [0], [0], [1], [0, 0, 1, 1], [], []>} : vector<19x16xf32>, vector<16x32xf32>, vector<19x32xf32> -> vector<19x32xf32>
    %135 = arith.addf %131, %134 : vector<19x32xf32>
    %c165 = arith.constant 165 : index
    %c0_124 = arith.constant 0 : index
    %136 = vector.load %arg16[%c165, %c0_124] : memref<256x16xf32, #tpu.memory_space<vmem>>, vector<19x16xf32>
    %c192_125 = arith.constant 192 : index
    %c0_126 = arith.constant 0 : index
    %137 = vector.load %arg5[%c192_125, %c0_126] : memref<256x32xf32, #tpu.memory_space<vmem>>, vector<16x32xf32>
    %cst_127 = arith.constant dense<0.000000e+00> : vector<19x32xf32>
    %138 = tpu.matmul %136, %137, %cst_127 {dimension_numbers = #tpu.dot_dimension_numbers<[1], [0], [0], [1], [0, 0, 1, 1], [], []>} : vector<19x16xf32>, vector<16x32xf32>, vector<19x32xf32> -> vector<19x32xf32>
    %139 = arith.addf %135, %138 : vector<19x32xf32>
    %c229 = arith.constant 229 : index
    %c0_128 = arith.constant 0 : index
    %140 = vector.load %arg16[%c229, %c0_128] : memref<256x16xf32, #tpu.memory_space<vmem>>, vector<19x16xf32>
    %c208_129 = arith.constant 208 : index
    %c0_130 = arith.constant 0 : index
    %141 = vector.load %arg5[%c208_129, %c0_130] : memref<256x32xf32, #tpu.memory_space<vmem>>, vector<16x32xf32>
    %cst_131 = arith.constant dense<0.000000e+00> : vector<19x32xf32>
    %142 = tpu.matmul %140, %141, %cst_131 {dimension_numbers = #tpu.dot_dimension_numbers<[1], [0], [0], [1], [0, 0, 1, 1], [], []>} : vector<19x16xf32>, vector<16x32xf32>, vector<19x32xf32> -> vector<19x32xf32>
    %143 = arith.addf %139, %142 : vector<19x32xf32>
    %c166 = arith.constant 166 : index
    %c0_132 = arith.constant 0 : index
    %144 = vector.load %arg16[%c166, %c0_132] : memref<256x16xf32, #tpu.memory_space<vmem>>, vector<19x16xf32>
    %c224_133 = arith.constant 224 : index
    %c0_134 = arith.constant 0 : index
    %145 = vector.load %arg5[%c224_133, %c0_134] : memref<256x32xf32, #tpu.memory_space<vmem>>, vector<16x32xf32>
    %cst_135 = arith.constant dense<0.000000e+00> : vector<19x32xf32>
    %146 = tpu.matmul %144, %145, %cst_135 {dimension_numbers = #tpu.dot_dimension_numbers<[1], [0], [0], [1], [0, 0, 1, 1], [], []>} : vector<19x16xf32>, vector<16x32xf32>, vector<19x32xf32> -> vector<19x32xf32>
    %147 = arith.addf %143, %146 : vector<19x32xf32>
    %c230 = arith.constant 230 : index
    %c0_136 = arith.constant 0 : index
    %148 = vector.load %arg16[%c230, %c0_136] : memref<256x16xf32, #tpu.memory_space<vmem>>, vector<19x16xf32>
    %c240_137 = arith.constant 240 : index
    %c0_138 = arith.constant 0 : index
    %149 = vector.load %arg5[%c240_137, %c0_138] : memref<256x32xf32, #tpu.memory_space<vmem>>, vector<16x32xf32>
    %cst_139 = arith.constant dense<0.000000e+00> : vector<19x32xf32>
    %150 = tpu.matmul %148, %149, %cst_139 {dimension_numbers = #tpu.dot_dimension_numbers<[1], [0], [0], [1], [0, 0, 1, 1], [], []>} : vector<19x16xf32>, vector<16x32xf32>, vector<19x32xf32> -> vector<19x32xf32>
    %151 = arith.addf %147, %150 : vector<19x32xf32>
    %c0_140 = arith.constant 0 : index
    %c0_141 = arith.constant 0 : index
    %152 = vector.load %arg6[%c0_140, %c0_141] : memref<1x32xf32, #tpu.memory_space<vmem>>, vector<1x32xf32>
    %153 = vector.broadcast %152 : vector<1x32xf32> to vector<19x32xf32>
    %154 = arith.addf %151, %153 : vector<19x32xf32>
    %cst_142 = arith.constant 0.000000e+00 : f32
    %155 = vector.broadcast %cst_142 : f32 to vector<19x32xf32>
    %156 = arith.maximumf %154, %155 : vector<19x32xf32>
    %cst_143 = arith.constant 0.000000e+00 : f32
    %157 = vector.broadcast %cst_143 : f32 to vector<2x256xf32>
    %158 = vector.extract_strided_slice %86 {offsets = [0, 0], sizes = [1, 32], strides = [1, 1]} : vector<19x32xf32> to vector<1x32xf32>
    %159 = vector.extract_strided_slice %156 {offsets = [0, 0], sizes = [1, 32], strides = [1, 1]} : vector<19x32xf32> to vector<1x32xf32>
    %160 = tpu.concatenate %158, %159 in 0 : vector<1x32xf32>, vector<1x32xf32> -> vector<2x32xf32>
    %c0_144 = arith.constant 0 : index
    %c0_145 = arith.constant 0 : index
    %161 = vector.load %arg7[%c0_144, %c0_145] : memref<512x256xf32, #tpu.memory_space<vmem>>, vector<32x256xf32>
    %cst_146 = arith.constant dense<0.000000e+00> : vector<2x256xf32>
    %162 = tpu.matmul %160, %161, %cst_146 {dimension_numbers = #tpu.dot_dimension_numbers<[1], [0], [0], [1], [0, 0, 1, 1], [], []>} : vector<2x32xf32>, vector<32x256xf32>, vector<2x256xf32> -> vector<2x256xf32>
    %163 = arith.addf %157, %162 : vector<2x256xf32>
    %164 = vector.extract_strided_slice %86 {offsets = [1, 0], sizes = [1, 32], strides = [1, 1]} : vector<19x32xf32> to vector<1x32xf32>
    %165 = vector.extract_strided_slice %156 {offsets = [1, 0], sizes = [1, 32], strides = [1, 1]} : vector<19x32xf32> to vector<1x32xf32>
    %166 = tpu.concatenate %164, %165 in 0 : vector<1x32xf32>, vector<1x32xf32> -> vector<2x32xf32>
    %c32_147 = arith.constant 32 : index
    %c0_148 = arith.constant 0 : index
    %167 = vector.load %arg7[%c32_147, %c0_148] : memref<512x256xf32, #tpu.memory_space<vmem>>, vector<32x256xf32>
    %cst_149 = arith.constant dense<0.000000e+00> : vector<2x256xf32>
    %168 = tpu.matmul %166, %167, %cst_149 {dimension_numbers = #tpu.dot_dimension_numbers<[1], [0], [0], [1], [0, 0, 1, 1], [], []>} : vector<2x32xf32>, vector<32x256xf32>, vector<2x256xf32> -> vector<2x256xf32>
    %169 = arith.addf %163, %168 : vector<2x256xf32>
    %170 = vector.extract_strided_slice %86 {offsets = [2, 0], sizes = [1, 32], strides = [1, 1]} : vector<19x32xf32> to vector<1x32xf32>
    %171 = vector.extract_strided_slice %156 {offsets = [2, 0], sizes = [1, 32], strides = [1, 1]} : vector<19x32xf32> to vector<1x32xf32>
    %172 = tpu.concatenate %170, %171 in 0 : vector<1x32xf32>, vector<1x32xf32> -> vector<2x32xf32>
    %c64_150 = arith.constant 64 : index
    %c0_151 = arith.constant 0 : index
    %173 = vector.load %arg7[%c64_150, %c0_151] : memref<512x256xf32, #tpu.memory_space<vmem>>, vector<32x256xf32>
    %cst_152 = arith.constant dense<0.000000e+00> : vector<2x256xf32>
    %174 = tpu.matmul %172, %173, %cst_152 {dimension_numbers = #tpu.dot_dimension_numbers<[1], [0], [0], [1], [0, 0, 1, 1], [], []>} : vector<2x32xf32>, vector<32x256xf32>, vector<2x256xf32> -> vector<2x256xf32>
    %175 = arith.addf %169, %174 : vector<2x256xf32>
    %176 = vector.extract_strided_slice %86 {offsets = [3, 0], sizes = [1, 32], strides = [1, 1]} : vector<19x32xf32> to vector<1x32xf32>
    %177 = vector.extract_strided_slice %156 {offsets = [3, 0], sizes = [1, 32], strides = [1, 1]} : vector<19x32xf32> to vector<1x32xf32>
    %178 = tpu.concatenate %176, %177 in 0 : vector<1x32xf32>, vector<1x32xf32> -> vector<2x32xf32>
    %c96_153 = arith.constant 96 : index
    %c0_154 = arith.constant 0 : index
    %179 = vector.load %arg7[%c96_153, %c0_154] : memref<512x256xf32, #tpu.memory_space<vmem>>, vector<32x256xf32>
    %cst_155 = arith.constant dense<0.000000e+00> : vector<2x256xf32>
    %180 = tpu.matmul %178, %179, %cst_155 {dimension_numbers = #tpu.dot_dimension_numbers<[1], [0], [0], [1], [0, 0, 1, 1], [], []>} : vector<2x32xf32>, vector<32x256xf32>, vector<2x256xf32> -> vector<2x256xf32>
    %181 = arith.addf %175, %180 : vector<2x256xf32>
    %182 = vector.extract_strided_slice %86 {offsets = [5, 0], sizes = [1, 32], strides = [1, 1]} : vector<19x32xf32> to vector<1x32xf32>
    %183 = vector.extract_strided_slice %156 {offsets = [5, 0], sizes = [1, 32], strides = [1, 1]} : vector<19x32xf32> to vector<1x32xf32>
    %184 = tpu.concatenate %182, %183 in 0 : vector<1x32xf32>, vector<1x32xf32> -> vector<2x32xf32>
    %c128_156 = arith.constant 128 : index
    %c0_157 = arith.constant 0 : index
    %185 = vector.load %arg7[%c128_156, %c0_157] : memref<512x256xf32, #tpu.memory_space<vmem>>, vector<32x256xf32>
    %cst_158 = arith.constant dense<0.000000e+00> : vector<2x256xf32>
    %186 = tpu.matmul %184, %185, %cst_158 {dimension_numbers = #tpu.dot_dimension_numbers<[1], [0], [0], [1], [0, 0, 1, 1], [], []>} : vector<2x32xf32>, vector<32x256xf32>, vector<2x256xf32> -> vector<2x256xf32>
    %187 = arith.addf %181, %186 : vector<2x256xf32>
    %188 = vector.extract_strided_slice %86 {offsets = [6, 0], sizes = [1, 32], strides = [1, 1]} : vector<19x32xf32> to vector<1x32xf32>
    %189 = vector.extract_strided_slice %156 {offsets = [6, 0], sizes = [1, 32], strides = [1, 1]} : vector<19x32xf32> to vector<1x32xf32>
    %190 = tpu.concatenate %188, %189 in 0 : vector<1x32xf32>, vector<1x32xf32> -> vector<2x32xf32>
    %c160_159 = arith.constant 160 : index
    %c0_160 = arith.constant 0 : index
    %191 = vector.load %arg7[%c160_159, %c0_160] : memref<512x256xf32, #tpu.memory_space<vmem>>, vector<32x256xf32>
    %cst_161 = arith.constant dense<0.000000e+00> : vector<2x256xf32>
    %192 = tpu.matmul %190, %191, %cst_161 {dimension_numbers = #tpu.dot_dimension_numbers<[1], [0], [0], [1], [0, 0, 1, 1], [], []>} : vector<2x32xf32>, vector<32x256xf32>, vector<2x256xf32> -> vector<2x256xf32>
    %193 = arith.addf %187, %192 : vector<2x256xf32>
    %194 = vector.extract_strided_slice %86 {offsets = [7, 0], sizes = [1, 32], strides = [1, 1]} : vector<19x32xf32> to vector<1x32xf32>
    %195 = vector.extract_strided_slice %156 {offsets = [7, 0], sizes = [1, 32], strides = [1, 1]} : vector<19x32xf32> to vector<1x32xf32>
    %196 = tpu.concatenate %194, %195 in 0 : vector<1x32xf32>, vector<1x32xf32> -> vector<2x32xf32>
    %c192_162 = arith.constant 192 : index
    %c0_163 = arith.constant 0 : index
    %197 = vector.load %arg7[%c192_162, %c0_163] : memref<512x256xf32, #tpu.memory_space<vmem>>, vector<32x256xf32>
    %cst_164 = arith.constant dense<0.000000e+00> : vector<2x256xf32>
    %198 = tpu.matmul %196, %197, %cst_164 {dimension_numbers = #tpu.dot_dimension_numbers<[1], [0], [0], [1], [0, 0, 1, 1], [], []>} : vector<2x32xf32>, vector<32x256xf32>, vector<2x256xf32> -> vector<2x256xf32>
    %199 = arith.addf %193, %198 : vector<2x256xf32>
    %200 = vector.extract_strided_slice %86 {offsets = [8, 0], sizes = [1, 32], strides = [1, 1]} : vector<19x32xf32> to vector<1x32xf32>
    %201 = vector.extract_strided_slice %156 {offsets = [8, 0], sizes = [1, 32], strides = [1, 1]} : vector<19x32xf32> to vector<1x32xf32>
    %202 = tpu.concatenate %200, %201 in 0 : vector<1x32xf32>, vector<1x32xf32> -> vector<2x32xf32>
    %c224_165 = arith.constant 224 : index
    %c0_166 = arith.constant 0 : index
    %203 = vector.load %arg7[%c224_165, %c0_166] : memref<512x256xf32, #tpu.memory_space<vmem>>, vector<32x256xf32>
    %cst_167 = arith.constant dense<0.000000e+00> : vector<2x256xf32>
    %204 = tpu.matmul %202, %203, %cst_167 {dimension_numbers = #tpu.dot_dimension_numbers<[1], [0], [0], [1], [0, 0, 1, 1], [], []>} : vector<2x32xf32>, vector<32x256xf32>, vector<2x256xf32> -> vector<2x256xf32>
    %205 = arith.addf %199, %204 : vector<2x256xf32>
    %206 = vector.extract_strided_slice %86 {offsets = [10, 0], sizes = [1, 32], strides = [1, 1]} : vector<19x32xf32> to vector<1x32xf32>
    %207 = vector.extract_strided_slice %156 {offsets = [10, 0], sizes = [1, 32], strides = [1, 1]} : vector<19x32xf32> to vector<1x32xf32>
    %208 = tpu.concatenate %206, %207 in 0 : vector<1x32xf32>, vector<1x32xf32> -> vector<2x32xf32>
    %c256 = arith.constant 256 : index
    %c0_168 = arith.constant 0 : index
    %209 = vector.load %arg7[%c256, %c0_168] : memref<512x256xf32, #tpu.memory_space<vmem>>, vector<32x256xf32>
    %cst_169 = arith.constant dense<0.000000e+00> : vector<2x256xf32>
    %210 = tpu.matmul %208, %209, %cst_169 {dimension_numbers = #tpu.dot_dimension_numbers<[1], [0], [0], [1], [0, 0, 1, 1], [], []>} : vector<2x32xf32>, vector<32x256xf32>, vector<2x256xf32> -> vector<2x256xf32>
    %211 = arith.addf %205, %210 : vector<2x256xf32>
    %212 = vector.extract_strided_slice %86 {offsets = [11, 0], sizes = [1, 32], strides = [1, 1]} : vector<19x32xf32> to vector<1x32xf32>
    %213 = vector.extract_strided_slice %156 {offsets = [11, 0], sizes = [1, 32], strides = [1, 1]} : vector<19x32xf32> to vector<1x32xf32>
    %214 = tpu.concatenate %212, %213 in 0 : vector<1x32xf32>, vector<1x32xf32> -> vector<2x32xf32>
    %c288 = arith.constant 288 : index
    %c0_170 = arith.constant 0 : index
    %215 = vector.load %arg7[%c288, %c0_170] : memref<512x256xf32, #tpu.memory_space<vmem>>, vector<32x256xf32>
    %cst_171 = arith.constant dense<0.000000e+00> : vector<2x256xf32>
    %216 = tpu.matmul %214, %215, %cst_171 {dimension_numbers = #tpu.dot_dimension_numbers<[1], [0], [0], [1], [0, 0, 1, 1], [], []>} : vector<2x32xf32>, vector<32x256xf32>, vector<2x256xf32> -> vector<2x256xf32>
    %217 = arith.addf %211, %216 : vector<2x256xf32>
    %218 = vector.extract_strided_slice %86 {offsets = [12, 0], sizes = [1, 32], strides = [1, 1]} : vector<19x32xf32> to vector<1x32xf32>
    %219 = vector.extract_strided_slice %156 {offsets = [12, 0], sizes = [1, 32], strides = [1, 1]} : vector<19x32xf32> to vector<1x32xf32>
    %220 = tpu.concatenate %218, %219 in 0 : vector<1x32xf32>, vector<1x32xf32> -> vector<2x32xf32>
    %c320 = arith.constant 320 : index
    %c0_172 = arith.constant 0 : index
    %221 = vector.load %arg7[%c320, %c0_172] : memref<512x256xf32, #tpu.memory_space<vmem>>, vector<32x256xf32>
    %cst_173 = arith.constant dense<0.000000e+00> : vector<2x256xf32>
    %222 = tpu.matmul %220, %221, %cst_173 {dimension_numbers = #tpu.dot_dimension_numbers<[1], [0], [0], [1], [0, 0, 1, 1], [], []>} : vector<2x32xf32>, vector<32x256xf32>, vector<2x256xf32> -> vector<2x256xf32>
    %223 = arith.addf %217, %222 : vector<2x256xf32>
    %224 = vector.extract_strided_slice %86 {offsets = [13, 0], sizes = [1, 32], strides = [1, 1]} : vector<19x32xf32> to vector<1x32xf32>
    %225 = vector.extract_strided_slice %156 {offsets = [13, 0], sizes = [1, 32], strides = [1, 1]} : vector<19x32xf32> to vector<1x32xf32>
    %226 = tpu.concatenate %224, %225 in 0 : vector<1x32xf32>, vector<1x32xf32> -> vector<2x32xf32>
    %c352 = arith.constant 352 : index
    %c0_174 = arith.constant 0 : index
    %227 = vector.load %arg7[%c352, %c0_174] : memref<512x256xf32, #tpu.memory_space<vmem>>, vector<32x256xf32>
    %cst_175 = arith.constant dense<0.000000e+00> : vector<2x256xf32>
    %228 = tpu.matmul %226, %227, %cst_175 {dimension_numbers = #tpu.dot_dimension_numbers<[1], [0], [0], [1], [0, 0, 1, 1], [], []>} : vector<2x32xf32>, vector<32x256xf32>, vector<2x256xf32> -> vector<2x256xf32>
    %229 = arith.addf %223, %228 : vector<2x256xf32>
    %230 = vector.extract_strided_slice %86 {offsets = [15, 0], sizes = [1, 32], strides = [1, 1]} : vector<19x32xf32> to vector<1x32xf32>
    %231 = vector.extract_strided_slice %156 {offsets = [15, 0], sizes = [1, 32], strides = [1, 1]} : vector<19x32xf32> to vector<1x32xf32>
    %232 = tpu.concatenate %230, %231 in 0 : vector<1x32xf32>, vector<1x32xf32> -> vector<2x32xf32>
    %c384 = arith.constant 384 : index
    %c0_176 = arith.constant 0 : index
    %233 = vector.load %arg7[%c384, %c0_176] : memref<512x256xf32, #tpu.memory_space<vmem>>, vector<32x256xf32>
    %cst_177 = arith.constant dense<0.000000e+00> : vector<2x256xf32>
    %234 = tpu.matmul %232, %233, %cst_177 {dimension_numbers = #tpu.dot_dimension_numbers<[1], [0], [0], [1], [0, 0, 1, 1], [], []>} : vector<2x32xf32>, vector<32x256xf32>, vector<2x256xf32> -> vector<2x256xf32>
    %235 = arith.addf %229, %234 : vector<2x256xf32>
    %236 = vector.extract_strided_slice %86 {offsets = [16, 0], sizes = [1, 32], strides = [1, 1]} : vector<19x32xf32> to vector<1x32xf32>
    %237 = vector.extract_strided_slice %156 {offsets = [16, 0], sizes = [1, 32], strides = [1, 1]} : vector<19x32xf32> to vector<1x32xf32>
    %238 = tpu.concatenate %236, %237 in 0 : vector<1x32xf32>, vector<1x32xf32> -> vector<2x32xf32>
    %c416 = arith.constant 416 : index
    %c0_178 = arith.constant 0 : index
    %239 = vector.load %arg7[%c416, %c0_178] : memref<512x256xf32, #tpu.memory_space<vmem>>, vector<32x256xf32>
    %cst_179 = arith.constant dense<0.000000e+00> : vector<2x256xf32>
    %240 = tpu.matmul %238, %239, %cst_179 {dimension_numbers = #tpu.dot_dimension_numbers<[1], [0], [0], [1], [0, 0, 1, 1], [], []>} : vector<2x32xf32>, vector<32x256xf32>, vector<2x256xf32> -> vector<2x256xf32>
    %241 = arith.addf %235, %240 : vector<2x256xf32>
    %242 = vector.extract_strided_slice %86 {offsets = [17, 0], sizes = [1, 32], strides = [1, 1]} : vector<19x32xf32> to vector<1x32xf32>
    %243 = vector.extract_strided_slice %156 {offsets = [17, 0], sizes = [1, 32], strides = [1, 1]} : vector<19x32xf32> to vector<1x32xf32>
    %244 = tpu.concatenate %242, %243 in 0 : vector<1x32xf32>, vector<1x32xf32> -> vector<2x32xf32>
    %c448 = arith.constant 448 : index
    %c0_180 = arith.constant 0 : index
    %245 = vector.load %arg7[%c448, %c0_180] : memref<512x256xf32, #tpu.memory_space<vmem>>, vector<32x256xf32>
    %cst_181 = arith.constant dense<0.000000e+00> : vector<2x256xf32>
    %246 = tpu.matmul %244, %245, %cst_181 {dimension_numbers = #tpu.dot_dimension_numbers<[1], [0], [0], [1], [0, 0, 1, 1], [], []>} : vector<2x32xf32>, vector<32x256xf32>, vector<2x256xf32> -> vector<2x256xf32>
    %247 = arith.addf %241, %246 : vector<2x256xf32>
    %248 = vector.extract_strided_slice %86 {offsets = [18, 0], sizes = [1, 32], strides = [1, 1]} : vector<19x32xf32> to vector<1x32xf32>
    %249 = vector.extract_strided_slice %156 {offsets = [18, 0], sizes = [1, 32], strides = [1, 1]} : vector<19x32xf32> to vector<1x32xf32>
    %250 = tpu.concatenate %248, %249 in 0 : vector<1x32xf32>, vector<1x32xf32> -> vector<2x32xf32>
    %c480 = arith.constant 480 : index
    %c0_182 = arith.constant 0 : index
    %251 = vector.load %arg7[%c480, %c0_182] : memref<512x256xf32, #tpu.memory_space<vmem>>, vector<32x256xf32>
    %cst_183 = arith.constant dense<0.000000e+00> : vector<2x256xf32>
    %252 = tpu.matmul %250, %251, %cst_183 {dimension_numbers = #tpu.dot_dimension_numbers<[1], [0], [0], [1], [0, 0, 1, 1], [], []>} : vector<2x32xf32>, vector<32x256xf32>, vector<2x256xf32> -> vector<2x256xf32>
    %253 = arith.addf %247, %252 : vector<2x256xf32>
    %c0_184 = arith.constant 0 : index
    %c0_185 = arith.constant 0 : index
    %254 = vector.load %arg8[%c0_184, %c0_185] : memref<1x256xf32, #tpu.memory_space<vmem>>, vector<1x256xf32>
    %255 = vector.broadcast %254 : vector<1x256xf32> to vector<2x256xf32>
    %256 = arith.addf %253, %255 : vector<2x256xf32>
    %cst_186 = arith.constant 0.000000e+00 : f32
    %257 = vector.broadcast %cst_186 : f32 to vector<2x256xf32>
    %258 = arith.maximumf %256, %257 : vector<2x256xf32>
    %259 = arith.cmpf one, %258, %258 : vector<2x256xf32>
    %cst_187 = arith.constant 0.000000e+00 : f32
    %260 = vector.broadcast %cst_187 : f32 to vector<2x256xf32>
    %261 = arith.select %259, %260, %258 : vector<2x256xi1>, vector<2x256xf32>
    %cst_188 = arith.constant 0x7F800000 : f32
    %262 = vector.broadcast %cst_188 : f32 to vector<2x256xf32>
    %263 = arith.cmpf oeq, %261, %262 : vector<2x256xf32>
    %cst_189 = arith.constant 1.000000e+00 : f32
    %264 = vector.broadcast %cst_189 : f32 to vector<2x256xf32>
    %265 = arith.select %263, %264, %261 : vector<2x256xi1>, vector<2x256xf32>
    %cst_190 = arith.constant 0xFF800000 : f32
    %266 = vector.broadcast %cst_190 : f32 to vector<2x256xf32>
    %267 = arith.cmpf oeq, %265, %266 : vector<2x256xf32>
    %cst_191 = arith.constant -1.000000e+00 : f32
    %268 = vector.broadcast %cst_191 : f32 to vector<2x256xf32>
    %269 = arith.select %267, %268, %265 : vector<2x256xi1>, vector<2x256xf32>
    %c0_192 = arith.constant 0 : index
    %c0_193 = arith.constant 0 : index
    %270 = vector.load %arg9[%c0_192, %c0_193] : memref<256x4xf32, #tpu.memory_space<vmem>>, vector<256x4xf32>
    %cst_194 = arith.constant dense<0.000000e+00> : vector<2x4xf32>
    %271 = tpu.matmul %269, %270, %cst_194 {dimension_numbers = #tpu.dot_dimension_numbers<[1], [0], [0], [1], [0, 0, 1, 1], [], []>} : vector<2x256xf32>, vector<256x4xf32>, vector<2x4xf32> -> vector<2x4xf32>
    %c0_195 = arith.constant 0 : index
    %c0_196 = arith.constant 0 : index
    %272 = vector.load %arg10[%c0_195, %c0_196] : memref<1x4xf32, #tpu.memory_space<vmem>>, vector<1x4xf32>
    %273 = vector.broadcast %272 : vector<1x4xf32> to vector<2x4xf32>
    %274 = arith.addf %271, %273 : vector<2x4xf32>
    %c0_197 = arith.constant 0 : index
    %c0_198 = arith.constant 0 : index
    %275 = vector.load %arg13[%c0_197, %c0_198] : memref<2x4xf32, #tpu.memory_space<vmem>>, vector<2x4xf32>
    %276 = arith.addf %274, %275 : vector<2x4xf32>
    %cst_199 = arith.constant dense<0xFF800000> : vector<2xf32>
    %277 = vector.multi_reduction <maximumf>, %276, %cst_199 [1] : vector<2x4xf32> to vector<2xf32>
    %278 = vector.shape_cast %277 : vector<2xf32> to vector<2x1xf32>
    %279 = tpu.iota {dimensions = array<i32: 1>} : vector<2x4xi32>
    %280 = vector.broadcast %278 : vector<2x1xf32> to vector<2x4xf32>
    %281 = arith.cmpf oge, %276, %280 : vector<2x4xf32>
    %c4_i32 = arith.constant 4 : i32
    %282 = vector.broadcast %c4_i32 : i32 to vector<2x4xi32>
    %283 = arith.select %281, %279, %282 : vector<2x4xi1>, vector<2x4xi32>
    %cst_200 = arith.constant dense<2147483647> : vector<2xi32>
    %284 = vector.multi_reduction <minsi>, %283, %cst_200 [1] : vector<2x4xi32> to vector<2xi32>
    %285 = vector.shape_cast %284 : vector<2xi32> to vector<2x1xi32>
    %286 = vector.broadcast %285 : vector<2x1xi32> to vector<2x4xi32>
    %287 = arith.cmpi eq, %279, %286 : vector<2x4xi32>
    %288 = arith.extui %287 : vector<2x4xi1> to vector<2x4xi32>
    %289 = arith.sitofp %288 : vector<2x4xi32> to vector<2x4xf32>
    %c0_201 = arith.constant 0 : index
    %c0_202 = arith.constant 0 : index
    %290 = vector.load %arg11[%c0_201, %c0_202] : memref<256x64xf32, #tpu.memory_space<vmem>>, vector<256x64xf32>
    %cst_203 = arith.constant dense<0.000000e+00> : vector<2x64xf32>
    %291 = tpu.matmul %269, %290, %cst_203 {dimension_numbers = #tpu.dot_dimension_numbers<[1], [0], [0], [1], [0, 0, 1, 1], [], []>} : vector<2x256xf32>, vector<256x64xf32>, vector<2x64xf32> -> vector<2x64xf32>
    %c0_204 = arith.constant 0 : index
    %c0_205 = arith.constant 0 : index
    %292 = vector.load %arg12[%c0_204, %c0_205] : memref<1x64xf32, #tpu.memory_space<vmem>>, vector<1x64xf32>
    %293 = vector.broadcast %292 : vector<1x64xf32> to vector<2x64xf32>
    %294 = arith.addf %291, %293 : vector<2x64xf32>
    %cst_206 = arith.constant 0.000000e+00 : f32
    %295 = vector.broadcast %cst_206 : f32 to vector<2x8xf32>
    %cst_207 = arith.constant 0.000000e+00 : f32
    %296 = vector.broadcast %cst_207 : f32 to vector<2x8xf32>
    %297 = vector.extract_strided_slice %289 {offsets = [0, 0], sizes = [2, 1], strides = [1, 1]} : vector<2x4xf32> to vector<2x1xf32>
    %298 = vector.extract_strided_slice %294 {offsets = [0, 0], sizes = [2, 8], strides = [1, 1]} : vector<2x64xf32> to vector<2x8xf32>
    %299 = vector.broadcast %297 : vector<2x1xf32> to vector<2x8xf32>
    %300 = arith.mulf %299, %298 : vector<2x8xf32>
    %301 = arith.addf %295, %300 : vector<2x8xf32>
    %302 = vector.extract_strided_slice %294 {offsets = [0, 32], sizes = [2, 8], strides = [1, 1]} : vector<2x64xf32> to vector<2x8xf32>
    %303 = vector.broadcast %297 : vector<2x1xf32> to vector<2x8xf32>
    %304 = arith.mulf %303, %302 : vector<2x8xf32>
    %305 = arith.addf %296, %304 : vector<2x8xf32>
    %306 = vector.extract_strided_slice %289 {offsets = [0, 1], sizes = [2, 1], strides = [1, 1]} : vector<2x4xf32> to vector<2x1xf32>
    %307 = vector.extract_strided_slice %294 {offsets = [0, 8], sizes = [2, 8], strides = [1, 1]} : vector<2x64xf32> to vector<2x8xf32>
    %308 = vector.broadcast %306 : vector<2x1xf32> to vector<2x8xf32>
    %309 = arith.mulf %308, %307 : vector<2x8xf32>
    %310 = arith.addf %301, %309 : vector<2x8xf32>
    %311 = vector.extract_strided_slice %294 {offsets = [0, 40], sizes = [2, 8], strides = [1, 1]} : vector<2x64xf32> to vector<2x8xf32>
    %312 = vector.broadcast %306 : vector<2x1xf32> to vector<2x8xf32>
    %313 = arith.mulf %312, %311 : vector<2x8xf32>
    %314 = arith.addf %305, %313 : vector<2x8xf32>
    %315 = vector.extract_strided_slice %289 {offsets = [0, 2], sizes = [2, 1], strides = [1, 1]} : vector<2x4xf32> to vector<2x1xf32>
    %316 = vector.extract_strided_slice %294 {offsets = [0, 16], sizes = [2, 8], strides = [1, 1]} : vector<2x64xf32> to vector<2x8xf32>
    %317 = vector.broadcast %315 : vector<2x1xf32> to vector<2x8xf32>
    %318 = arith.mulf %317, %316 : vector<2x8xf32>
    %319 = arith.addf %310, %318 : vector<2x8xf32>
    %320 = vector.extract_strided_slice %294 {offsets = [0, 48], sizes = [2, 8], strides = [1, 1]} : vector<2x64xf32> to vector<2x8xf32>
    %321 = vector.broadcast %315 : vector<2x1xf32> to vector<2x8xf32>
    %322 = arith.mulf %321, %320 : vector<2x8xf32>
    %323 = arith.addf %314, %322 : vector<2x8xf32>
    %324 = vector.extract_strided_slice %289 {offsets = [0, 3], sizes = [2, 1], strides = [1, 1]} : vector<2x4xf32> to vector<2x1xf32>
    %325 = vector.extract_strided_slice %294 {offsets = [0, 24], sizes = [2, 8], strides = [1, 1]} : vector<2x64xf32> to vector<2x8xf32>
    %326 = vector.broadcast %324 : vector<2x1xf32> to vector<2x8xf32>
    %327 = arith.mulf %326, %325 : vector<2x8xf32>
    %328 = arith.addf %319, %327 : vector<2x8xf32>
    %329 = vector.extract_strided_slice %294 {offsets = [0, 56], sizes = [2, 8], strides = [1, 1]} : vector<2x64xf32> to vector<2x8xf32>
    %330 = vector.broadcast %324 : vector<2x1xf32> to vector<2x8xf32>
    %331 = arith.mulf %330, %329 : vector<2x8xf32>
    %332 = arith.addf %323, %331 : vector<2x8xf32>
    %333 = math.exp %332 : vector<2x8xf32>
    %c0_208 = arith.constant 0 : index
    %c0_209 = arith.constant 0 : index
    %334 = vector.load %arg14[%c0_208, %c0_209] : memref<2x8xf32, #tpu.memory_space<vmem>>, vector<2x8xf32>
    %335 = arith.mulf %333, %334 : vector<2x8xf32>
    %336 = arith.addf %328, %335 : vector<2x8xf32>
    %337 = tpu.concatenate %274, %336, %328, %333 in 1 : vector<2x4xf32>, vector<2x8xf32>, vector<2x8xf32>, vector<2x8xf32> -> vector<2x28xf32>
    %c0_210 = arith.constant 0 : index
    %c0_211 = arith.constant 0 : index
    %338 = vector.load %arg15[%c0_210, %c0_211] : memref<2x28xf32, #tpu.memory_space<vmem>>, vector<2x28xf32>
    tpu.vector_store %arg15[%c0_210, %c0_211], %337 {strides = array<i32>} : memref<2x28xf32, #tpu.memory_space<vmem>>, vector<2x28xf32>,
    return
  }
}

</mosaic_0001>

<llo_original>
// kernel: prior_forward.3
$region0: #{prior_forward.3}
  #allocation0 [shape = 'u32[]', space=smem, size = 0x4, offset = 0x4, fixed_abs, tag = 'smem constant byte address 0x4 - core index']
  #allocation1 [shape = 'u32[72,128]{1,0:T(1,128)}', space=vmem, size = 0x9000, scoped, tag = 'internal scratch']
  #allocation2 [shape = 'f32[256,16]{1,0:T(8,128)}', space=vmem, size = 0x20000, scoped, tag = 'scratch operand']
  %s0 = inlined_call_operand.vmem [shape: bf16[256,768], index: 0, kind: input, shape index: {}]
  %s1 = inlined_call_operand.vmem [shape: bf16[768,128], index: 1, kind: input, shape index: {}]
  %s2 = inlined_call_operand.vmem [shape: f32[1,128], index: 2, kind: input, shape index: {}]
  %s3 = inlined_call_operand.vmem [shape: bf16[128,16], index: 3, kind: input, shape index: {}]
  %s4 = inlined_call_operand.vmem [shape: f32[1,16], index: 4, kind: input, shape index: {}]
  %s5 = inlined_call_operand.vmem [shape: f32[256,32], index: 5, kind: input, shape index: {}]
  %s6 = inlined_call_operand.vmem [shape: f32[1,32], index: 6, kind: input, shape index: {}]
  %s7 = inlined_call_operand.vmem [shape: f32[512,256], index: 7, kind: input, shape index: {}]
  %s8 = inlined_call_operand.vmem [shape: f32[1,256], index: 8, kind: input, shape index: {}]
  %s9 = inlined_call_operand.vmem [shape: f32[256,4], index: 9, kind: input, shape index: {}]
  %s10 = inlined_call_operand.vmem [shape: f32[1,4], index: 10, kind: input, shape index: {}]
  %s11 = inlined_call_operand.vmem [shape: f32[256,64], index: 11, kind: input, shape index: {}]
  %s12 = inlined_call_operand.vmem [shape: f32[1,64], index: 12, kind: input, shape index: {}]
  %s13 = inlined_call_operand.vmem [shape: f32[2,4], index: 13, kind: input, shape index: {}]
  %s14 = inlined_call_operand.vmem [shape: f32[2,8], index: 14, kind: input, shape index: {}]
  %s15 = inlined_call_operand.vmem [shape: f32[2,28], index: 15, kind: output, shape index: {}]
  %s16 = sld [smem:[#allocation0]]
  $region70: #{prior_forward.3} parent=0
    _
  %s18 = ssub.s32 1, %s16
  %s19 = scalar_select 0, %s18, %s16
  // Predicated region
  $region2: #{prior_forward.3} parent=0 // pred_check
    _
  $region3: #{prior_forward.3} parent=0 // pred_check_branch
    %21 = sbr.rel (0) target = $region5
  $region4: #{prior_forward.3} parent=0 // pred_region
    _
  $region5: #{prior_forward.3} parent=0 // pred_fallthru
    _
  // Predicated region
  $region6: #{prior_forward.3} parent=0 // pred_check
    _
  $region7: #{prior_forward.3} parent=0 // pred_check_branch
    %23 = sbr.rel (0) target = $region9
  $region8: #{prior_forward.3} parent=0 // pred_region
    _
  $region9: #{prior_forward.3} parent=0 // pred_fallthru
    _
  // Predicated region
  $region10: #{prior_forward.3} parent=0 // pred_check
    _
  $region11: #{prior_forward.3} parent=0 // pred_check_branch
    %25 = sbr.rel (0) target = $region13
  $region12: #{prior_forward.3} parent=0 // pred_region
    _
  $region13: #{prior_forward.3} parent=0 // pred_fallthru
    _
  // Predicated region
  $region14: #{prior_forward.3} parent=0 // pred_check
    _
  $region15: #{prior_forward.3} parent=0 // pred_check_branch
    %27 = sbr.rel (0) target = $region17
  $region16: #{prior_forward.3} parent=0 // pred_region
    _
  $region17: #{prior_forward.3} parent=0 // pred_fallthru
    _
  // Predicated region
  $region18: #{prior_forward.3} parent=0 // pred_check
    _
  $region19: #{prior_forward.3} parent=0 // pred_check_branch
    %29 = sbr.rel (0) target = $region21
  $region20: #{prior_forward.3} parent=0 // pred_region
    _
  $region21: #{prior_forward.3} parent=0 // pred_fallthru
    _
  // Predicated region
  $region22: #{prior_forward.3} parent=0 // pred_check
    _
  $region23: #{prior_forward.3} parent=0 // pred_check_branch
    %31 = sbr.rel (0) target = $region25
  $region24: #{prior_forward.3} parent=0 // pred_region
    _
  $region25: #{prior_forward.3} parent=0 // pred_fallthru
    _
  // Predicated region
  $region26: #{prior_forward.3} parent=0 // pred_check
    _
  $region27: #{prior_forward.3} parent=0 // pred_check_branch
    %33 = sbr.rel (0) target = $region29
  $region28: #{prior_forward.3} parent=0 // pred_region
    _
  $region29: #{prior_forward.3} parent=0 // pred_fallthru
    _
  // Predicated region
  $region30: #{prior_forward.3} parent=0 // pred_check
    _
  $region31: #{prior_forward.3} parent=0 // pred_check_branch
    %35 = sbr.rel (0) target = $region33
  $region32: #{prior_forward.3} parent=0 // pred_region
    _
  $region33: #{prior_forward.3} parent=0 // pred_fallthru
    _
  // Predicated region
  $region34: #{prior_forward.3} parent=0 // pred_check
    _
  $region35: #{prior_forward.3} parent=0 // pred_check_branch
    %37 = sbr.rel (0) target = $region37
  $region36: #{prior_forward.3} parent=0 // pred_region
    _
  $region37: #{prior_forward.3} parent=0 // pred_fallthru
    _
  // Predicated region
  $region38: #{prior_forward.3} parent=0 // pred_check
    _
  $region39: #{prior_forward.3} parent=0 // pred_check_branch
    %39 = sbr.rel (0) target = $region41
  $region40: #{prior_forward.3} parent=0 // pred_region
    _
  $region41: #{prior_forward.3} parent=0 // pred_fallthru
    _
  // Predicated region
  $region42: #{prior_forward.3} parent=0 // pred_check
    _
  $region43: #{prior_forward.3} parent=0 // pred_check_branch
    %41 = sbr.rel (0) target = $region45
  $region44: #{prior_forward.3} parent=0 // pred_region
    _
  $region45: #{prior_forward.3} parent=0 // pred_fallthru
    _
  // Predicated region
  $region46: #{prior_forward.3} parent=0 // pred_check
    _
  $region47: #{prior_forward.3} parent=0 // pred_check_branch
    %43 = sbr.rel (0) target = $region49
  $region48: #{prior_forward.3} parent=0 // pred_region
    _
  $region49: #{prior_forward.3} parent=0 // pred_fallthru
    _
  // Predicated region
  $region50: #{prior_forward.3} parent=0 // pred_check
    _
  $region51: #{prior_forward.3} parent=0 // pred_check_branch
    %45 = sbr.rel (0) target = $region53
  $region52: #{prior_forward.3} parent=0 // pred_region
    _
  $region53: #{prior_forward.3} parent=0 // pred_fallthru
    _
  // Predicated region
  $region54: #{prior_forward.3} parent=0 // pred_check
    _
  $region55: #{prior_forward.3} parent=0 // pred_check_branch
    %47 = sbr.rel (0) target = $region57
  $region56: #{prior_forward.3} parent=0 // pred_region
    _
  $region57: #{prior_forward.3} parent=0 // pred_fallthru
    _
  // Predicated region
  $region58: #{prior_forward.3} parent=0 // pred_check
    _
  $region59: #{prior_forward.3} parent=0 // pred_check_branch
    %49 = sbr.rel (0) target = $region61
  $region60: #{prior_forward.3} parent=0 // pred_region
    _
  $region61: #{prior_forward.3} parent=0 // pred_fallthru
    _
  %v50 = vld [vmem:[%s0] sm:$0xff]
  %v51 = vld [vmem:[%s0 + $0x8] sm:$0xff]
  %v52 = vld [vmem:[%s0 + $0x10] sm:$0xff]
  %v53 = vld [vmem:[%s0 + $0x18] sm:$0xff]
  %v54 = vld [vmem:[%s0 + $0x20] sm:$0xff]
  %v55 = vld [vmem:[%s0 + $0x28] sm:$0xff]
  %v56 = vld [vmem:[%s0 + $0x30] sm:$0xff]
  %v57 = vld [vmem:[%s0 + $0x38] sm:$0xff]
  %v58 = vld [vmem:[%s0 + $0x40] sm:$0xff]
  %v59 = vld [vmem:[%s0 + $0x48] sm:$0xff]
  %v60 = vld [vmem:[%s0 + $0x50] sm:$0xff]
  %v61 = vld [vmem:[%s0 + $0x58] sm:$0xff]
  %v62 = vld [vmem:[%s0 + $0x60] sm:$0xff]
  %v63 = vld [vmem:[%s0 + $0x68] sm:$0xff]
  %v64 = vld [vmem:[%s0 + $0x70] sm:$0xff]
  %v65 = vld [vmem:[%s0 + $0x78] sm:$0xff]
  %v66 = vld [vmem:[%s0 + $0x80] sm:$0xff]
  %v67 = vld [vmem:[%s0 + $0x88] sm:$0xff]
  %v68 = vld [vmem:[%s0 + $0x90] sm:$0xff]
  %v69 = vld [vmem:[%s0 + $0x98] sm:$0xff]
  %v70 = vld [vmem:[%s0 + $0xa0] sm:$0xff]
  %v71 = vld [vmem:[%s0 + $0xa8] sm:$0xff]
  %v72 = vld [vmem:[%s0 + $0xb0] sm:$0xff]
  %v73 = vld [vmem:[%s0 + $0xb8] sm:$0xff]
  %v74 = vld [vmem:[%s0 + $0xc0] sm:$0xff]
  %v75 = vld [vmem:[%s0 + $0xc8] sm:$0xff]
  %v76 = vld [vmem:[%s0 + $0xd0] sm:$0xff]
  %v77 = vld [vmem:[%s0 + $0xd8] sm:$0xff]
  %v78 = vld [vmem:[%s0 + $0xe0] sm:$0xff]
  %v79 = vld [vmem:[%s0 + $0xe8] sm:$0xff]
  %v80 = vld [vmem:[%s0 + $0xf0] sm:$0xff]
  %v81 = vld [vmem:[%s0 + $0xf8] sm:$0xff]
  %v82 = vld [vmem:[%s0 + $0x100] sm:$0xff]
  %v83 = vld [vmem:[%s0 + $0x108] sm:$0xff]
  %v84 = vld [vmem:[%s0 + $0x110] sm:$0xff]
  %v85 = vld [vmem:[%s0 + $0x118] sm:$0xff]
  %v86 = vld [vmem:[%s0 + $0x120] sm:$0xff]
  %v87 = vld [vmem:[%s0 + $0x128] sm:$0xff]
  %v88 = vld [vmem:[%s0 + $0x130] sm:$0xff]
  %v89 = vld [vmem:[%s0 + $0x138] sm:$0xff]
  %v90 = vld [vmem:[%s0 + $0x140] sm:$0xff]
  %v91 = vld [vmem:[%s0 + $0x148] sm:$0xff]
  %v92 = vld [vmem:[%s0 + $0x150] sm:$0xff]
  %v93 = vld [vmem:[%s0 + $0x158] sm:$0xff]
  %v94 = vld [vmem:[%s0 + $0x160] sm:$0xff]
  %v95 = vld [vmem:[%s0 + $0x168] sm:$0xff]
  %v96 = vld [vmem:[%s0 + $0x170] sm:$0xff]
  %v97 = vld [vmem:[%s0 + $0x178] sm:$0xff]
  %v98 = vld [vmem:[%s0 + $0x180] sm:$0xff]
  %v99 = vld [vmem:[%s0 + $0x188] sm:$0xff]
  %v100 = vld [vmem:[%s0 + $0x190] sm:$0xff]
  %v101 = vld [vmem:[%s0 + $0x198] sm:$0xff]
  %v102 = vld [vmem:[%s0 + $0x1a0] sm:$0xff]
  %v103 = vld [vmem:[%s0 + $0x1a8] sm:$0xff]
  %v104 = vld [vmem:[%s0 + $0x1b0] sm:$0xff]
  %v105 = vld [vmem:[%s0 + $0x1b8] sm:$0xff]
  %v106 = vld [vmem:[%s0 + $0x1c0] sm:$0xff]
  %v107 = vld [vmem:[%s0 + $0x1c8] sm:$0xff]
  %v108 = vld [vmem:[%s0 + $0x1d0] sm:$0xff]
  %v109 = vld [vmem:[%s0 + $0x1d8] sm:$0xff]
  %v110 = vld [vmem:[%s0 + $0x1e0] sm:$0xff]
  %v111 = vld [vmem:[%s0 + $0x1e8] sm:$0xff]
  %v112 = vld [vmem:[%s0 + $0x1f0] sm:$0xff]
  %v113 = vld [vmem:[%s0 + $0x1f8] sm:$0xff]
  %v114 = vld [vmem:[%s0 + $0x200] sm:$0xff]
  %v115 = vld [vmem:[%s0 + $0x208] sm:$0xff]
  %v116 = vld [vmem:[%s0 + $0x210] sm:$0xff]
  %v117 = vld [vmem:[%s0 + $0x218] sm:$0xff]
  %v118 = vld [vmem:[%s0 + $0x220] sm:$0xff]
  %v119 = vld [vmem:[%s0 + $0x228] sm:$0xff]
  %v120 = vld [vmem:[%s0 + $0x230] sm:$0xff]
  %v121 = vld [vmem:[%s0 + $0x238] sm:$0xff]
  %v122 = vld [vmem:[%s0 + $0x240] sm:$0xff]
  %v123 = vld [vmem:[%s0 + $0x248] sm:$0xff]
  %v124 = vld [vmem:[%s0 + $0x250] sm:$0xff]
  %v125 = vld [vmem:[%s0 + $0x258] sm:$0xff]
  %v126 = vld [vmem:[%s0 + $0x260] sm:$0xff]
  %v127 = vld [vmem:[%s0 + $0x268] sm:$0xff]
  %v128 = vld [vmem:[%s0 + $0x270] sm:$0xff]
  %v129 = vld [vmem:[%s0 + $0x278] sm:$0xff]
  %v130 = vld [vmem:[%s0 + $0x280] sm:$0xff]
  %v131 = vld [vmem:[%s0 + $0x288] sm:$0xff]
  %v132 = vld [vmem:[%s0 + $0x290] sm:$0xff]
  %v133 = vld [vmem:[%s0 + $0x298] sm:$0xff]
  %v134 = vld [vmem:[%s0 + $0x2a0] sm:$0xff]
  %v135 = vld [vmem:[%s0 + $0x2a8] sm:$0xff]
  %v136 = vld [vmem:[%s0 + $0x2b0] sm:$0xff]
  %v137 = vld [vmem:[%s0 + $0x2b8] sm:$0xff]
  %v138 = vld [vmem:[%s0 + $0x2c0] sm:$0xff]
  %v139 = vld [vmem:[%s0 + $0x2c8] sm:$0xff]
  %v140 = vld [vmem:[%s0 + $0x2d0] sm:$0xff]
  %v141 = vld [vmem:[%s0 + $0x2d8] sm:$0xff]
  %v142 = vld [vmem:[%s0 + $0x2e0] sm:$0xff]
  %v143 = vld [vmem:[%s0 + $0x2e8] sm:$0xff]
  %v144 = vld [vmem:[%s0 + $0x2f0] sm:$0xff]
  %v145 = vld [vmem:[%s0 + $0x2f8] sm:$0xff]
  %v146 = vld [vmem:[%s1] sm:$0xf]
  %v147 = vld [vmem:[%s1 + $0x4] sm:$0xf]
  %v148 = vld [vmem:[%s1 + $0x8] sm:$0xf]
  %v149 = vld [vmem:[%s1 + $0xc] sm:$0xf]
  %v150 = vld [vmem:[%s1 + $0x10] sm:$0xf]
  %v151 = vld [vmem:[%s1 + $0x14] sm:$0xf]
  %v152 = vld [vmem:[%s1 + $0x18] sm:$0xf]
  %v153 = vld [vmem:[%s1 + $0x1c] sm:$0xf]
  %v154 = vld [vmem:[%s1 + $0x20] sm:$0xf]
  %v155 = vld [vmem:[%s1 + $0x24] sm:$0xf]
  %v156 = vld [vmem:[%s1 + $0x28] sm:$0xf]
  %v157 = vld [vmem:[%s1 + $0x2c] sm:$0xf]
  %v158 = vld [vmem:[%s1 + $0x30] sm:$0xf]
  %v159 = vld [vmem:[%s1 + $0x34] sm:$0xf]
  %v160 = vld [vmem:[%s1 + $0x38] sm:$0xf]
  %v161 = vld [vmem:[%s1 + $0x3c] sm:$0xf]
  %v162 = vld [vmem:[%s1 + $0x40] sm:$0xf]
  %v163 = vld [vmem:[%s1 + $0x44] sm:$0xf]
  %v164 = vld [vmem:[%s1 + $0x48] sm:$0xf]
  %v165 = vld [vmem:[%s1 + $0x4c] sm:$0xf]
  %v166 = vld [vmem:[%s1 + $0x50] sm:$0xf]
  %v167 = vld [vmem:[%s1 + $0x54] sm:$0xf]
  %v168 = vld [vmem:[%s1 + $0x58] sm:$0xf]
  %v169 = vld [vmem:[%s1 + $0x5c] sm:$0xf]
  %v170 = vld [vmem:[%s1 + $0x60] sm:$0xf]
  %v171 = vld [vmem:[%s1 + $0x64] sm:$0xf]
  %v172 = vld [vmem:[%s1 + $0x68] sm:$0xf]
  %v173 = vld [vmem:[%s1 + $0x6c] sm:$0xf]
  %v174 = vld [vmem:[%s1 + $0x70] sm:$0xf]
  %v175 = vld [vmem:[%s1 + $0x74] sm:$0xf]
  %v176 = vld [vmem:[%s1 + $0x78] sm:$0xf]
  %v177 = vld [vmem:[%s1 + $0x7c] sm:$0xf]
  %v178 = vld [vmem:[%s1 + $0x80] sm:$0xf]
  %v179 = vld [vmem:[%s1 + $0x84] sm:$0xf]
  %v180 = vld [vmem:[%s1 + $0x88] sm:$0xf]
  %v181 = vld [vmem:[%s1 + $0x8c] sm:$0xf]
  %v182 = vld [vmem:[%s1 + $0x90] sm:$0xf]
  %v183 = vld [vmem:[%s1 + $0x94] sm:$0xf]
  %v184 = vld [vmem:[%s1 + $0x98] sm:$0xf]
  %v185 = vld [vmem:[%s1 + $0x9c] sm:$0xf]
  %v186 = vld [vmem:[%s1 + $0xa0] sm:$0xf]
  %v187 = vld [vmem:[%s1 + $0xa4] sm:$0xf]
  %v188 = vld [vmem:[%s1 + $0xa8] sm:$0xf]
  %v189 = vld [vmem:[%s1 + $0xac] sm:$0xf]
  %v190 = vld [vmem:[%s1 + $0xb0] sm:$0xf]
  %v191 = vld [vmem:[%s1 + $0xb4] sm:$0xf]
  %v192 = vld [vmem:[%s1 + $0xb8] sm:$0xf]
  %v193 = vld [vmem:[%s1 + $0xbc] sm:$0xf]
  %v194 = vld [vmem:[%s1 + $0xc0] sm:$0xf]
  %v195 = vld [vmem:[%s1 + $0xc4] sm:$0xf]
  %v196 = vld [vmem:[%s1 + $0xc8] sm:$0xf]
  %v197 = vld [vmem:[%s1 + $0xcc] sm:$0xf]
  %v198 = vld [vmem:[%s1 + $0xd0] sm:$0xf]
  %v199 = vld [vmem:[%s1 + $0xd4] sm:$0xf]
  %v200 = vld [vmem:[%s1 + $0xd8] sm:$0xf]
  %v201 = vld [vmem:[%s1 + $0xdc] sm:$0xf]
  %v202 = vld [vmem:[%s1 + $0xe0] sm:$0xf]
  %v203 = vld [vmem:[%s1 + $0xe4] sm:$0xf]
  %v204 = vld [vmem:[%s1 + $0xe8] sm:$0xf]
  %v205 = vld [vmem:[%s1 + $0xec] sm:$0xf]
  %v206 = vld [vmem:[%s1 + $0xf0] sm:$0xf]
  %v207 = vld [vmem:[%s1 + $0xf4] sm:$0xf]
  %v208 = vld [vmem:[%s1 + $0xf8] sm:$0xf]
  %v209 = vld [vmem:[%s1 + $0xfc] sm:$0xf]
  %v210 = vld [vmem:[%s1 + $0x100] sm:$0xf]
  %v211 = vld [vmem:[%s1 + $0x104] sm:$0xf]
  %v212 = vld [vmem:[%s1 + $0x108] sm:$0xf]
  %v213 = vld [vmem:[%s1 + $0x10c] sm:$0xf]
  %v214 = vld [vmem:[%s1 + $0x110] sm:$0xf]
  %v215 = vld [vmem:[%s1 + $0x114] sm:$0xf]
  %v216 = vld [vmem:[%s1 + $0x118] sm:$0xf]
  %v217 = vld [vmem:[%s1 + $0x11c] sm:$0xf]
  %v218 = vld [vmem:[%s1 + $0x120] sm:$0xf]
  %v219 = vld [vmem:[%s1 + $0x124] sm:$0xf]
  %v220 = vld [vmem:[%s1 + $0x128] sm:$0xf]
  %v221 = vld [vmem:[%s1 + $0x12c] sm:$0xf]
  %v222 = vld [vmem:[%s1 + $0x130] sm:$0xf]
  %v223 = vld [vmem:[%s1 + $0x134] sm:$0xf]
  %v224 = vld [vmem:[%s1 + $0x138] sm:$0xf]
  %v225 = vld [vmem:[%s1 + $0x13c] sm:$0xf]
  %v226 = vld [vmem:[%s1 + $0x140] sm:$0xf]
  %v227 = vld [vmem:[%s1 + $0x144] sm:$0xf]
  %v228 = vld [vmem:[%s1 + $0x148] sm:$0xf]
  %v229 = vld [vmem:[%s1 + $0x14c] sm:$0xf]
  %v230 = vld [vmem:[%s1 + $0x150] sm:$0xf]
  %v231 = vld [vmem:[%s1 + $0x154] sm:$0xf]
  %v232 = vld [vmem:[%s1 + $0x158] sm:$0xf]
  %v233 = vld [vmem:[%s1 + $0x15c] sm:$0xf]
  %v234 = vld [vmem:[%s1 + $0x160] sm:$0xf]
  %v235 = vld [vmem:[%s1 + $0x164] sm:$0xf]
  %v236 = vld [vmem:[%s1 + $0x168] sm:$0xf]
  %v237 = vld [vmem:[%s1 + $0x16c] sm:$0xf]
  %v238 = vld [vmem:[%s1 + $0x170] sm:$0xf]
  %v239 = vld [vmem:[%s1 + $0x174] sm:$0xf]
  %v240 = vld [vmem:[%s1 + $0x178] sm:$0xf]
  %v241 = vld [vmem:[%s1 + $0x17c] sm:$0xf]
  %v242 = vld [vmem:[%s2] sm:$0x1]
  %v244 = vperm.slane %v242, 0
  %v342 = vunpack.c.l.b16 %v50
  %v343 = vunpack.c.h.b16 %v50
  %v344 = vunpack.c.l.b16 %v51
  %v345 = vunpack.c.h.b16 %v51
  %v346 = vunpack.c.l.b16 %v52
  %v347 = vunpack.c.h.b16 %v52
  %v348 = vunpack.c.l.b16 %v53
  %v349 = vunpack.c.h.b16 %v53
  %v350 = vunpack.c.l.b16 %v54
  %v351 = vunpack.c.h.b16 %v54
  %v352 = vunpack.c.l.b16 %v55
  %v353 = vunpack.c.h.b16 %v55
  %v354 = vunpack.c.l.b16 %v56
  %v355 = vunpack.c.h.b16 %v56
  %v356 = vunpack.c.l.b16 %v57
  %v357 = vunpack.c.h.b16 %v57
  %v358 = vunpack.c.l.b16 %v58
  %v359 = vunpack.c.h.b16 %v58
  %v360 = vunpack.c.l.b16 %v59
  %v361 = vunpack.c.h.b16 %v59
  %v362 = vunpack.c.l.b16 %v60
  %v363 = vunpack.c.h.b16 %v60
  %v364 = vunpack.c.l.b16 %v61
  %v365 = vunpack.c.h.b16 %v61
  %v366 = vunpack.c.l.b16 %v62
  %v367 = vunpack.c.h.b16 %v62
  %v368 = vunpack.c.l.b16 %v63
  %v369 = vunpack.c.h.b16 %v63
  %v370 = vunpack.c.l.b16 %v64
  %v371 = vunpack.c.h.b16 %v64
  %v372 = vunpack.c.l.b16 %v65
  %v373 = vunpack.c.h.b16 %v65
  %v374 = vunpack.c.l.b16 %v66
  %v375 = vunpack.c.h.b16 %v66
  %v376 = vunpack.c.l.b16 %v67
  %v377 = vunpack.c.h.b16 %v67
  %v378 = vunpack.c.l.b16 %v68
  %v379 = vunpack.c.h.b16 %v68
  %v380 = vunpack.c.l.b16 %v69
  %v381 = vunpack.c.h.b16 %v69
  %v382 = vunpack.c.l.b16 %v70
  %v383 = vunpack.c.h.b16 %v70
  %v384 = vunpack.c.l.b16 %v71
  %v385 = vunpack.c.h.b16 %v71
  %v386 = vunpack.c.l.b16 %v72
  %v387 = vunpack.c.h.b16 %v72
  %v388 = vunpack.c.l.b16 %v73
  %v389 = vunpack.c.h.b16 %v73
  %v390 = vunpack.c.l.b16 %v74
  %v391 = vunpack.c.h.b16 %v74
  %v392 = vunpack.c.l.b16 %v75
  %v393 = vunpack.c.h.b16 %v75
  %v394 = vunpack.c.l.b16 %v76
  %v395 = vunpack.c.h.b16 %v76
  %v396 = vunpack.c.l.b16 %v77
  %v397 = vunpack.c.h.b16 %v77
  %v398 = vunpack.c.l.b16 %v78
  %v399 = vunpack.c.h.b16 %v78
  %v400 = vunpack.c.l.b16 %v79
  %v401 = vunpack.c.h.b16 %v79
  %v402 = vunpack.c.l.b16 %v80
  %v403 = vunpack.c.h.b16 %v80
  %v404 = vunpack.c.l.b16 %v81
  %v405 = vunpack.c.h.b16 %v81
  %v406 = vunpack.c.l.b16 %v82
  %v407 = vunpack.c.h.b16 %v82
  %v408 = vunpack.c.l.b16 %v83
  %v409 = vunpack.c.h.b16 %v83
  %v410 = vunpack.c.l.b16 %v84
  %v411 = vunpack.c.h.b16 %v84
  %v412 = vunpack.c.l.b16 %v85
  %v413 = vunpack.c.h.b16 %v85
  %v414 = vunpack.c.l.b16 %v86
  %v415 = vunpack.c.h.b16 %v86
  %v416 = vunpack.c.l.b16 %v87
  %v417 = vunpack.c.h.b16 %v87
  %v418 = vunpack.c.l.b16 %v88
  %v419 = vunpack.c.h.b16 %v88
  %v420 = vunpack.c.l.b16 %v89
  %v421 = vunpack.c.h.b16 %v89
  %v422 = vunpack.c.l.b16 %v90
  %v423 = vunpack.c.h.b16 %v90
  %v424 = vunpack.c.l.b16 %v91
  %v425 = vunpack.c.h.b16 %v91
  %v426 = vunpack.c.l.b16 %v92
  %v427 = vunpack.c.h.b16 %v92
  %v428 = vunpack.c.l.b16 %v93
  %v429 = vunpack.c.h.b16 %v93
  %v430 = vunpack.c.l.b16 %v94
  %v431 = vunpack.c.h.b16 %v94
  %v432 = vunpack.c.l.b16 %v95
  %v433 = vunpack.c.h.b16 %v95
  %v434 = vunpack.c.l.b16 %v96
  %v435 = vunpack.c.h.b16 %v96
  %v436 = vunpack.c.l.b16 %v97
  %v437 = vunpack.c.h.b16 %v97
  %v438 = vunpack.c.l.b16 %v98
  %v439 = vunpack.c.h.b16 %v98
  %v440 = vunpack.c.l.b16 %v99
  %v441 = vunpack.c.h.b16 %v99
  %v442 = vunpack.c.l.b16 %v100
  %v443 = vunpack.c.h.b16 %v100
  %v444 = vunpack.c.l.b16 %v101
  %v445 = vunpack.c.h.b16 %v101
  %v446 = vunpack.c.l.b16 %v102
  %v447 = vunpack.c.h.b16 %v102
  %v448 = vunpack.c.l.b16 %v103
  %v449 = vunpack.c.h.b16 %v103
  %v450 = vunpack.c.l.b16 %v104
  %v451 = vunpack.c.h.b16 %v104
  %v452 = vunpack.c.l.b16 %v105
  %v453 = vunpack.c.h.b16 %v105
  %v454 = vunpack.c.l.b16 %v106
  %v455 = vunpack.c.h.b16 %v106
  %v456 = vunpack.c.l.b16 %v107
  %v457 = vunpack.c.h.b16 %v107
  %v458 = vunpack.c.l.b16 %v108
  %v459 = vunpack.c.h.b16 %v108
  %v460 = vunpack.c.l.b16 %v109
  %v461 = vunpack.c.h.b16 %v109
  %v462 = vunpack.c.l.b16 %v110
  %v463 = vunpack.c.h.b16 %v110
  %v464 = vunpack.c.l.b16 %v111
  %v465 = vunpack.c.h.b16 %v111
  %v466 = vunpack.c.l.b16 %v112
  %v467 = vunpack.c.h.b16 %v112
  %v468 = vunpack.c.l.b16 %v113
  %v469 = vunpack.c.h.b16 %v113
  %v470 = vunpack.c.l.b16 %v114
  %v471 = vunpack.c.h.b16 %v114
  %v472 = vunpack.c.l.b16 %v115
  %v473 = vunpack.c.h.b16 %v115
  %v474 = vunpack.c.l.b16 %v116
  %v475 = vunpack.c.h.b16 %v116
  %v476 = vunpack.c.l.b16 %v117
  %v477 = vunpack.c.h.b16 %v117
  %v478 = vunpack.c.l.b16 %v118
  %v479 = vunpack.c.h.b16 %v118
  %v480 = vunpack.c.l.b16 %v119
  %v481 = vunpack.c.h.b16 %v119
  %v482 = vunpack.c.l.b16 %v120
  %v483 = vunpack.c.h.b16 %v120
  %v484 = vunpack.c.l.b16 %v121
  %v485 = vunpack.c.h.b16 %v121
  %v486 = vunpack.c.l.b16 %v122
  %v487 = vunpack.c.h.b16 %v122
  %v488 = vunpack.c.l.b16 %v123
  %v489 = vunpack.c.h.b16 %v123
  %v490 = vunpack.c.l.b16 %v124
  %v491 = vunpack.c.h.b16 %v124
  %v492 = vunpack.c.l.b16 %v125
  %v493 = vunpack.c.h.b16 %v125
  %v494 = vunpack.c.l.b16 %v126
  %v495 = vunpack.c.h.b16 %v126
  %v496 = vunpack.c.l.b16 %v127
  %v497 = vunpack.c.h.b16 %v127
  %v498 = vunpack.c.l.b16 %v128
  %v499 = vunpack.c.h.b16 %v128
  %v500 = vunpack.c.l.b16 %v129
  %v501 = vunpack.c.h.b16 %v129
  %v502 = vunpack.c.l.b16 %v130
  %v503 = vunpack.c.h.b16 %v130
  %v504 = vunpack.c.l.b16 %v131
  %v505 = vunpack.c.h.b16 %v131
  %v506 = vunpack.c.l.b16 %v132
  %v507 = vunpack.c.h.b16 %v132
  %v508 = vunpack.c.l.b16 %v133
  %v509 = vunpack.c.h.b16 %v133
  %v510 = vunpack.c.l.b16 %v134
  %v511 = vunpack.c.h.b16 %v134
  %v512 = vunpack.c.l.b16 %v135
  %v513 = vunpack.c.h.b16 %v135
  %v514 = vunpack.c.l.b16 %v136
  %v515 = vunpack.c.h.b16 %v136
  %v516 = vunpack.c.l.b16 %v137
  %v517 = vunpack.c.h.b16 %v137
  %v518 = vunpack.c.l.b16 %v138
  %v519 = vunpack.c.h.b16 %v138
  %v520 = vunpack.c.l.b16 %v139
  %v521 = vunpack.c.h.b16 %v139
  %v522 = vunpack.c.l.b16 %v140
  %v523 = vunpack.c.h.b16 %v140
  %v524 = vunpack.c.l.b16 %v141
  %v525 = vunpack.c.h.b16 %v141
  %v526 = vunpack.c.l.b16 %v142
  %v527 = vunpack.c.h.b16 %v142
  %v528 = vunpack.c.l.b16 %v143
  %v529 = vunpack.c.h.b16 %v143
  %v530 = vunpack.c.l.b16 %v144
  %v531 = vunpack.c.h.b16 %v144
  %v532 = vunpack.c.l.b16 %v145
  %v533 = vunpack.c.h.b16 %v145
  %v534 = vpack.c.b16 %v348, %v342
  %v535 = vpack.c.b16 %v349, %v343
  %v536 = vpack.c.b16 %v350, %v344
  %v537 = vpack.c.b16 %v351, %v345
  %v538 = vpack.c.b16 %v352, %v346
  %v539 = vpack.c.b16 %v353, %v347
  %v540 = vpack.c.b16 %v360, %v354
  %v541 = vpack.c.b16 %v361, %v355
  %v542 = vpack.c.b16 %v362, %v356
  %v543 = vpack.c.b16 %v363, %v357
  %v544 = vpack.c.b16 %v364, %v358
  %v545 = vpack.c.b16 %v365, %v359
  %v546 = vpack.c.b16 %v372, %v366
  %v547 = vpack.c.b16 %v373, %v367
  %v548 = vpack.c.b16 %v374, %v368
  %v549 = vpack.c.b16 %v375, %v369
  %v550 = vpack.c.b16 %v376, %v370
  %v551 = vpack.c.b16 %v377, %v371
  %v552 = vpack.c.b16 %v384, %v378
  %v553 = vpack.c.b16 %v385, %v379
  %v554 = vpack.c.b16 %v386, %v380
  %v555 = vpack.c.b16 %v387, %v381
  %v556 = vpack.c.b16 %v388, %v382
  %v557 = vpack.c.b16 %v389, %v383
  %v558 = vpack.c.b16 %v396, %v390
  %v559 = vpack.c.b16 %v397, %v391
  %v560 = vpack.c.b16 %v398, %v392
  %v561 = vpack.c.b16 %v399, %v393
  %v562 = vpack.c.b16 %v400, %v394
  %v563 = vpack.c.b16 %v401, %v395
  %v564 = vpack.c.b16 %v408, %v402
  %v565 = vpack.c.b16 %v409, %v403
  %v566 = vpack.c.b16 %v410, %v404
  %v567 = vpack.c.b16 %v411, %v405
  %v568 = vpack.c.b16 %v412, %v406
  %v569 = vpack.c.b16 %v413, %v407
  %v570 = vpack.c.b16 %v420, %v414
  %v571 = vpack.c.b16 %v421, %v415
  %v572 = vpack.c.b16 %v422, %v416
  %v573 = vpack.c.b16 %v423, %v417
  %v574 = vpack.c.b16 %v424, %v418
  %v575 = vpack.c.b16 %v425, %v419
  %v576 = vpack.c.b16 %v432, %v426
  %v577 = vpack.c.b16 %v433, %v427
  %v578 = vpack.c.b16 %v434, %v428
  %v579 = vpack.c.b16 %v435, %v429
  %v580 = vpack.c.b16 %v436, %v430
  %v581 = vpack.c.b16 %v437, %v431
  %v582 = vpack.c.b16 %v444, %v438
  %v583 = vpack.c.b16 %v445, %v439
  %v584 = vpack.c.b16 %v446, %v440
  %v585 = vpack.c.b16 %v447, %v441
  %v586 = vpack.c.b16 %v448, %v442
  %v587 = vpack.c.b16 %v449, %v443
  %v588 = vpack.c.b16 %v456, %v450
  %v589 = vpack.c.b16 %v457, %v451
  %v590 = vpack.c.b16 %v458, %v452
  %v591 = vpack.c.b16 %v459, %v453
  %v592 = vpack.c.b16 %v460, %v454
  %v593 = vpack.c.b16 %v461, %v455
  %v594 = vpack.c.b16 %v468, %v462
  %v595 = vpack.c.b16 %v469, %v463
  %v596 = vpack.c.b16 %v470, %v464
  %v597 = vpack.c.b16 %v471, %v465
  %v598 = vpack.c.b16 %v472, %v466
  %v599 = vpack.c.b16 %v473, %v467
  %v600 = vpack.c.b16 %v480, %v474
  %v601 = vpack.c.b16 %v481, %v475
  %v602 = vpack.c.b16 %v482, %v476
  %v603 = vpack.c.b16 %v483, %v477
  %v604 = vpack.c.b16 %v484, %v478
  %v605 = vpack.c.b16 %v485, %v479
  %v606 = vpack.c.b16 %v492, %v486
  %v607 = vpack.c.b16 %v493, %v487
  %v608 = vpack.c.b16 %v494, %v488
  %v609 = vpack.c.b16 %v495, %v489
  %v610 = vpack.c.b16 %v496, %v490
  %v611 = vpack.c.b16 %v497, %v491
  %v612 = vpack.c.b16 %v504, %v498
  %v613 = vpack.c.b16 %v505, %v499
  %v614 = vpack.c.b16 %v506, %v500
  %v615 = vpack.c.b16 %v507, %v501
  %v616 = vpack.c.b16 %v508, %v502
  %v617 = vpack.c.b16 %v509, %v503
  %v618 = vpack.c.b16 %v516, %v510
  %v619 = vpack.c.b16 %v517, %v511
  %v620 = vpack.c.b16 %v518, %v512
  %v621 = vpack.c.b16 %v519, %v513
  %v622 = vpack.c.b16 %v520, %v514
  %v623 = vpack.c.b16 %v521, %v515
  %v624 = vpack.c.b16 %v528, %v522
  %v625 = vpack.c.b16 %v529, %v523
  %v626 = vpack.c.b16 %v530, %v524
  %v627 = vpack.c.b16 %v531, %v525
  %v628 = vpack.c.b16 %v532, %v526
  %v629 = vpack.c.b16 %v533, %v527
  %v822 = vunpack.c.l.b16 %v146
  %v823 = vunpack.c.l.b16 %v147
  %v824 = vunpack.c.l.b16 %v148
  %v825 = vunpack.c.l.b16 %v149
  %v826 = vunpack.c.l.b16 %v150
  %v827 = vunpack.c.l.b16 %v151
  %v828 = vunpack.c.l.b16 %v152
  %v829 = vunpack.c.l.b16 %v153
  %v830 = vunpack.c.l.b16 %v154
  %v831 = vunpack.c.l.b16 %v155
  %v832 = vunpack.c.l.b16 %v156
  %v833 = vunpack.c.l.b16 %v157
  %v834 = vunpack.c.l.b16 %v158
  %v835 = vunpack.c.l.b16 %v159
  %v836 = vunpack.c.l.b16 %v160
  %v837 = vunpack.c.l.b16 %v161
  %v838 = vunpack.c.l.b16 %v162
  %v839 = vunpack.c.l.b16 %v163
  %v840 = vunpack.c.l.b16 %v164
  %v841 = vunpack.c.l.b16 %v165
  %v842 = vunpack.c.l.b16 %v166
  %v843 = vunpack.c.l.b16 %v167
  %v844 = vunpack.c.l.b16 %v168
  %v845 = vunpack.c.l.b16 %v169
  %v846 = vunpack.c.l.b16 %v170
  %v847 = vunpack.c.l.b16 %v171
  %v848 = vunpack.c.l.b16 %v172
  %v849 = vunpack.c.l.b16 %v173
  %v850 = vunpack.c.l.b16 %v174
  %v851 = vunpack.c.l.b16 %v175
  %v852 = vunpack.c.l.b16 %v176
  %v853 = vunpack.c.l.b16 %v177
  %v854 = vunpack.c.l.b16 %v178
  %v855 = vunpack.c.l.b16 %v179
  %v856 = vunpack.c.l.b16 %v180
  %v857 = vunpack.c.l.b16 %v181
  %v858 = vunpack.c.l.b16 %v182
  %v859 = vunpack.c.l.b16 %v183
  %v860 = vunpack.c.l.b16 %v184
  %v861 = vunpack.c.l.b16 %v185
  %v862 = vunpack.c.l.b16 %v186
  %v863 = vunpack.c.l.b16 %v187
  %v864 = vunpack.c.l.b16 %v188
  %v865 = vunpack.c.l.b16 %v189
  %v866 = vunpack.c.l.b16 %v190
  %v867 = vunpack.c.l.b16 %v191
  %v868 = vunpack.c.l.b16 %v192
  %v869 = vunpack.c.l.b16 %v193
  %v870 = vunpack.c.l.b16 %v194
  %v871 = vunpack.c.l.b16 %v195
  %v872 = vunpack.c.l.b16 %v196
  %v873 = vunpack.c.l.b16 %v197
  %v874 = vunpack.c.l.b16 %v198
  %v875 = vunpack.c.l.b16 %v199
  %v876 = vunpack.c.l.b16 %v200
  %v877 = vunpack.c.l.b16 %v201
  %v878 = vunpack.c.l.b16 %v202
  %v879 = vunpack.c.l.b16 %v203
  %v880 = vunpack.c.l.b16 %v204
  %v881 = vunpack.c.l.b16 %v205
  %v882 = vunpack.c.l.b16 %v206
  %v883 = vunpack.c.l.b16 %v207
  %v884 = vunpack.c.l.b16 %v208
  %v885 = vunpack.c.l.b16 %v209
  %v886 = vunpack.c.l.b16 %v210
  %v887 = vunpack.c.l.b16 %v211
  %v888 = vunpack.c.l.b16 %v212
  %v889 = vunpack.c.l.b16 %v213
  %v890 = vunpack.c.l.b16 %v214
  %v891 = vunpack.c.l.b16 %v215
  %v892 = vunpack.c.l.b16 %v216
  %v893 = vunpack.c.l.b16 %v217
  %v894 = vunpack.c.l.b16 %v218
  %v895 = vunpack.c.l.b16 %v219
  %v896 = vunpack.c.l.b16 %v220
  %v897 = vunpack.c.l.b16 %v221
  %v898 = vunpack.c.l.b16 %v222
  %v899 = vunpack.c.l.b16 %v223
  %v900 = vunpack.c.l.b16 %v224
  %v901 = vunpack.c.l.b16 %v225
  %v902 = vunpack.c.l.b16 %v226
  %v903 = vunpack.c.l.b16 %v227
  %v904 = vunpack.c.l.b16 %v228
  %v905 = vunpack.c.l.b16 %v229
  %v906 = vunpack.c.l.b16 %v230
  %v907 = vunpack.c.l.b16 %v231
  %v908 = vunpack.c.l.b16 %v232
  %v909 = vunpack.c.l.b16 %v233
  %v910 = vunpack.c.l.b16 %v234
  %v911 = vunpack.c.l.b16 %v235
  %v912 = vunpack.c.l.b16 %v236
  %v913 = vunpack.c.l.b16 %v237
  %v914 = vunpack.c.l.b16 %v238
  %v915 = vunpack.c.l.b16 %v239
  %v916 = vunpack.c.l.b16 %v240
  %v917 = vunpack.c.l.b16 %v241
  %v918 = vpack.c.b16 %v823, %v822
  %v919 = vpack.c.b16 %v825, %v824
  %v920 = vpack.c.b16 %v827, %v826
  %v921 = vpack.c.b16 %v829, %v828
  %v922 = vpack.c.b16 %v831, %v830
  %v923 = vpack.c.b16 %v833, %v832
  %v924 = vpack.c.b16 %v835, %v834
  %v925 = vpack.c.b16 %v837, %v836
  %v926 = vpack.c.b16 %v839, %v838
  %v927 = vpack.c.b16 %v841, %v840
  %v928 = vpack.c.b16 %v843, %v842
  %v929 = vpack.c.b16 %v845, %v844
  %v930 = vpack.c.b16 %v847, %v846
  %v931 = vpack.c.b16 %v849, %v848
  %v932 = vpack.c.b16 %v851, %v850
  %v933 = vpack.c.b16 %v853, %v852
  %v934 = vpack.c.b16 %v855, %v854
  %v935 = vpack.c.b16 %v857, %v856
  %v936 = vpack.c.b16 %v859, %v858
  %v937 = vpack.c.b16 %v861, %v860
  %v938 = vpack.c.b16 %v863, %v862
  %v939 = vpack.c.b16 %v865, %v864
  %v940 = vpack.c.b16 %v867, %v866
  %v941 = vpack.c.b16 %v869, %v868
  %v942 = vpack.c.b16 %v871, %v870
  %v943 = vpack.c.b16 %v873, %v872
  %v944 = vpack.c.b16 %v875, %v874
  %v945 = vpack.c.b16 %v877, %v876
  %v946 = vpack.c.b16 %v879, %v878
  %v947 = vpack.c.b16 %v881, %v880
  %v948 = vpack.c.b16 %v883, %v882
  %v949 = vpack.c.b16 %v885, %v884
  %v950 = vpack.c.b16 %v887, %v886
  %v951 = vpack.c.b16 %v889, %v888
  %v952 = vpack.c.b16 %v891, %v890
  %v953 = vpack.c.b16 %v893, %v892
  %v954 = vpack.c.b16 %v895, %v894
  %v955 = vpack.c.b16 %v897, %v896
  %v956 = vpack.c.b16 %v899, %v898
  %v957 = vpack.c.b16 %v901, %v900
  %v958 = vpack.c.b16 %v903, %v902
  %v959 = vpack.c.b16 %v905, %v904
  %v960 = vpack.c.b16 %v907, %v906
  %v961 = vpack.c.b16 %v909, %v908
  %v962 = vpack.c.b16 %v911, %v910
  %v963 = vpack.c.b16 %v913, %v912
  %v964 = vpack.c.b16 %v915, %v914
  %v965 = vpack.c.b16 %v917, %v916
  %1014 = vmatpush.bf16.msra.mxu0 %v925
  %1015 = vmatpush.bf16.msra.mxu0 %v924
  %1016 = vmatpush.bf16.msra.mxu0 %v923
  %1017 = vmatpush.bf16.msra.mxu0 %v922
  %1018 = vmatpush.bf16.msra.mxu0 %v921
  %1019 = vmatpush.bf16.msra.mxu0 %v920
  %1020 = vmatpush.bf16.msra.mxu0 %v919
  %1021 = vmatpush.bf16.msra.mxu0 %v918
  %1022 = vmatmul.bf16.gmra.mxu0 %v534
  %v1023 = vpop.f32.mrf.mxu0
  %v1024 = vadd.f32 %v244, %v1023
  %v1025 = vpop.f32.mrf.mxu0
  %v1026 = vadd.f32 %v244, %v1025
  %1027 = vmatmul.bf16.gmra.mxu0 %v540
  %v1028 = vpop.f32.mrf.mxu0
  %v1029 = vadd.f32 %v244, %v1028
  %v1030 = vpop.f32.mrf.mxu0
  %v1031 = vadd.f32 %v244, %v1030
  %1032 = vmatmul.bf16.gmra.mxu0 %v546
  %v1033 = vpop.f32.mrf.mxu0
  %v1034 = vadd.f32 %v244, %v1033
  %v1035 = vpop.f32.mrf.mxu0
  %v1036 = vadd.f32 %v244, %v1035
  %1037 = vmatmul.bf16.gmra.mxu0 %v552
  %v1038 = vpop.f32.mrf.mxu0
  %v1039 = vadd.f32 %v244, %v1038
  %v1040 = vpop.f32.mrf.mxu0
  %v1041 = vadd.f32 %v244, %v1040
  %1042 = vmatmul.bf16.gmra.mxu0 %v558
  %v1043 = vpop.f32.mrf.mxu0
  %v1044 = vadd.f32 %v244, %v1043
  %v1045 = vpop.f32.mrf.mxu0
  %v1046 = vadd.f32 %v244, %v1045
  %1047 = vmatmul.bf16.gmra.mxu0 %v564
  %v1048 = vpop.f32.mrf.mxu0
  %v1049 = vadd.f32 %v244, %v1048
  %v1050 = vpop.f32.mrf.mxu0
  %v1051 = vadd.f32 %v244, %v1050
  %1052 = vmatmul.bf16.gmra.mxu0 %v570
  %v1053 = vpop.f32.mrf.mxu0
  %v1054 = vadd.f32 %v244, %v1053
  %v1055 = vpop.f32.mrf.mxu0
  %v1056 = vadd.f32 %v244, %v1055
  %1057 = vmatmul.bf16.gmra.mxu0 %v576
  %v1058 = vpop.f32.mrf.mxu0
  %v1059 = vadd.f32 %v244, %v1058
  %v1060 = vpop.f32.mrf.mxu0
  %v1061 = vadd.f32 %v244, %v1060
  %1062 = vmatmul.bf16.gmra.mxu0 %v582
  %v1063 = vpop.f32.mrf.mxu0
  %v1064 = vadd.f32 %v244, %v1063
  %v1065 = vpop.f32.mrf.mxu0
  %v1066 = vadd.f32 %v244, %v1065
  %1067 = vmatmul.bf16.gmra.mxu0 %v588
  %v1068 = vpop.f32.mrf.mxu0
  %v1069 = vadd.f32 %v244, %v1068
  %v1070 = vpop.f32.mrf.mxu0
  %v1071 = vadd.f32 %v244, %v1070
  %1072 = vmatmul.bf16.gmra.mxu0 %v594
  %v1073 = vpop.f32.mrf.mxu0
  %v1074 = vadd.f32 %v244, %v1073
  %v1075 = vpop.f32.mrf.mxu0
  %v1076 = vadd.f32 %v244, %v1075
  %1077 = vmatmul.bf16.gmra.mxu0 %v600
  %v1078 = vpop.f32.mrf.mxu0
  %v1079 = vadd.f32 %v244, %v1078
  %v1080 = vpop.f32.mrf.mxu0
  %v1081 = vadd.f32 %v244, %v1080
  %1082 = vmatmul.bf16.gmra.mxu0 %v606
  %v1083 = vpop.f32.mrf.mxu0
  %v1084 = vadd.f32 %v244, %v1083
  %v1085 = vpop.f32.mrf.mxu0
  %v1086 = vadd.f32 %v244, %v1085
  %1087 = vmatmul.bf16.gmra.mxu0 %v612
  %v1088 = vpop.f32.mrf.mxu0
  %v1089 = vadd.f32 %v244, %v1088
  %v1090 = vpop.f32.mrf.mxu0
  %v1091 = vadd.f32 %v244, %v1090
  %1092 = vmatmul.bf16.gmra.mxu0 %v618
  %v1093 = vpop.f32.mrf.mxu0
  %v1094 = vadd.f32 %v244, %v1093
  %v1095 = vpop.f32.mrf.mxu0
  %v1096 = vadd.f32 %v244, %v1095
  %1097 = vmatmul.bf16.gmra.mxu0 %v624
  %v1098 = vpop.f32.mrf.mxu0
  %v1099 = vadd.f32 %v244, %v1098
  %v1100 = vpop.f32.mrf.mxu0
  %v1101 = vadd.f32 %v244, %v1100
  %1102 = vdwg.mxu0
  %1103 = vmatpush.bf16.msra.mxu0 %v933
  %1104 = vmatpush.bf16.msra.mxu0 %v932
  %1105 = vmatpush.bf16.msra.mxu0 %v931
  %1106 = vmatpush.bf16.msra.mxu0 %v930
  %1107 = vmatpush.bf16.msra.mxu0 %v929
  %1108 = vmatpush.bf16.msra.mxu0 %v928
  %1109 = vmatpush.bf16.msra.mxu0 %v927
  %1110 = vmatpush.bf16.msra.mxu0 %v926
  %1111 = vmatmul.bf16.gmra.mxu0 %v535
  %v1112 = vpop.f32.mrf.mxu0
  %v1113 = vadd.f32 %v1024, %v1112
  %v1114 = vpop.f32.mrf.mxu0
  %v1115 = vadd.f32 %v1026, %v1114
  %1116 = vmatmul.bf16.gmra.mxu0 %v541
  %v1117 = vpop.f32.mrf.mxu0
  %v1118 = vadd.f32 %v1029, %v1117
  %v1119 = vpop.f32.mrf.mxu0
  %v1120 = vadd.f32 %v1031, %v1119
  %1121 = vmatmul.bf16.gmra.mxu0 %v547
  %v1122 = vpop.f32.mrf.mxu0
  %v1123 = vadd.f32 %v1034, %v1122
  %v1124 = vpop.f32.mrf.mxu0
  %v1125 = vadd.f32 %v1036, %v1124
  %1126 = vmatmul.bf16.gmra.mxu0 %v553
  %v1127 = vpop.f32.mrf.mxu0
  %v1128 = vadd.f32 %v1039, %v1127
  %v1129 = vpop.f32.mrf.mxu0
  %v1130 = vadd.f32 %v1041, %v1129
  %1131 = vmatmul.bf16.gmra.mxu0 %v559
  %v1132 = vpop.f32.mrf.mxu0
  %v1133 = vadd.f32 %v1044, %v1132
  %v1134 = vpop.f32.mrf.mxu0
  %v1135 = vadd.f32 %v1046, %v1134
  %1136 = vmatmul.bf16.gmra.mxu0 %v565
  %v1137 = vpop.f32.mrf.mxu0
  %v1138 = vadd.f32 %v1049, %v1137
  %v1139 = vpop.f32.mrf.mxu0
  %v1140 = vadd.f32 %v1051, %v1139
  %1141 = vmatmul.bf16.gmra.mxu0 %v571
  %v1142 = vpop.f32.mrf.mxu0
  %v1143 = vadd.f32 %v1054, %v1142
  %v1144 = vpop.f32.mrf.mxu0
  %v1145 = vadd.f32 %v1056, %v1144
  %1146 = vmatmul.bf16.gmra.mxu0 %v577
  %v1147 = vpop.f32.mrf.mxu0
  %v1148 = vadd.f32 %v1059, %v1147
  %v1149 = vpop.f32.mrf.mxu0
  %v1150 = vadd.f32 %v1061, %v1149
  %1151 = vmatmul.bf16.gmra.mxu0 %v583
  %v1152 = vpop.f32.mrf.mxu0
  %v1153 = vadd.f32 %v1064, %v1152
  %v1154 = vpop.f32.mrf.mxu0
  %v1155 = vadd.f32 %v1066, %v1154
  %1156 = vmatmul.bf16.gmra.mxu0 %v589
  %v1157 = vpop.f32.mrf.mxu0
  %v1158 = vadd.f32 %v1069, %v1157
  %v1159 = vpop.f32.mrf.mxu0
  %v1160 = vadd.f32 %v1071, %v1159
  %1161 = vmatmul.bf16.gmra.mxu0 %v595
  %v1162 = vpop.f32.mrf.mxu0
  %v1163 = vadd.f32 %v1074, %v1162
  %v1164 = vpop.f32.mrf.mxu0
  %v1165 = vadd.f32 %v1076, %v1164
  %1166 = vmatmul.bf16.gmra.mxu0 %v601
  %v1167 = vpop.f32.mrf.mxu0
  %v1168 = vadd.f32 %v1079, %v1167
  %v1169 = vpop.f32.mrf.mxu0
  %v1170 = vadd.f32 %v1081, %v1169
  %1171 = vmatmul.bf16.gmra.mxu0 %v607
  %v1172 = vpop.f32.mrf.mxu0
  %v1173 = vadd.f32 %v1084, %v1172
  %v1174 = vpop.f32.mrf.mxu0
  %v1175 = vadd.f32 %v1086, %v1174
  %1176 = vmatmul.bf16.gmra.mxu0 %v613
  %v1177 = vpop.f32.mrf.mxu0
  %v1178 = vadd.f32 %v1089, %v1177
  %v1179 = vpop.f32.mrf.mxu0
  %v1180 = vadd.f32 %v1091, %v1179
  %1181 = vmatmul.bf16.gmra.mxu0 %v619
  %v1182 = vpop.f32.mrf.mxu0
  %v1183 = vadd.f32 %v1094, %v1182
  %v1184 = vpop.f32.mrf.mxu0
  %v1185 = vadd.f32 %v1096, %v1184
  %1186 = vmatmul.bf16.gmra.mxu0 %v625
  %v1187 = vpop.f32.mrf.mxu0
  %v1188 = vadd.f32 %v1099, %v1187
  %v1189 = vpop.f32.mrf.mxu0
  %v1190 = vadd.f32 %v1101, %v1189
  %1191 = vdwg.mxu0
  %1192 = vmatpush.bf16.msra.mxu0 %v941
  %1193 = vmatpush.bf16.msra.mxu0 %v940
  %1194 = vmatpush.bf16.msra.mxu0 %v939
  %1195 = vmatpush.bf16.msra.mxu0 %v938
  %1196 = vmatpush.bf16.msra.mxu0 %v937
  %1197 = vmatpush.bf16.msra.mxu0 %v936
  %1198 = vmatpush.bf16.msra.mxu0 %v935
  %1199 = vmatpush.bf16.msra.mxu0 %v934
  %1200 = vmatmul.bf16.gmra.mxu0 %v536
  %v1201 = vpop.f32.mrf.mxu0
  %v1202 = vadd.f32 %v1113, %v1201
  %v1203 = vpop.f32.mrf.mxu0
  %v1204 = vadd.f32 %v1115, %v1203
  %1205 = vmatmul.bf16.gmra.mxu0 %v542
  %v1206 = vpop.f32.mrf.mxu0
  %v1207 = vadd.f32 %v1118, %v1206
  %v1208 = vpop.f32.mrf.mxu0
  %v1209 = vadd.f32 %v1120, %v1208
  %1210 = vmatmul.bf16.gmra.mxu0 %v548
  %v1211 = vpop.f32.mrf.mxu0
  %v1212 = vadd.f32 %v1123, %v1211
  %v1213 = vpop.f32.mrf.mxu0
  %v1214 = vadd.f32 %v1125, %v1213
  %1215 = vmatmul.bf16.gmra.mxu0 %v554
  %v1216 = vpop.f32.mrf.mxu0
  %v1217 = vadd.f32 %v1128, %v1216
  %v1218 = vpop.f32.mrf.mxu0
  %v1219 = vadd.f32 %v1130, %v1218
  %1220 = vmatmul.bf16.gmra.mxu0 %v560
  %v1221 = vpop.f32.mrf.mxu0
  %v1222 = vadd.f32 %v1133, %v1221
  %v1223 = vpop.f32.mrf.mxu0
  %v1224 = vadd.f32 %v1135, %v1223
  %1225 = vmatmul.bf16.gmra.mxu0 %v566
  %v1226 = vpop.f32.mrf.mxu0
  %v1227 = vadd.f32 %v1138, %v1226
  %v1228 = vpop.f32.mrf.mxu0
  %v1229 = vadd.f32 %v1140, %v1228
  %1230 = vmatmul.bf16.gmra.mxu0 %v572
  %v1231 = vpop.f32.mrf.mxu0
  %v1232 = vadd.f32 %v1143, %v1231
  %v1233 = vpop.f32.mrf.mxu0
  %v1234 = vadd.f32 %v1145, %v1233
  %1235 = vmatmul.bf16.gmra.mxu0 %v578
  %v1236 = vpop.f32.mrf.mxu0
  %v1237 = vadd.f32 %v1148, %v1236
  %v1238 = vpop.f32.mrf.mxu0
  %v1239 = vadd.f32 %v1150, %v1238
  %1240 = vmatmul.bf16.gmra.mxu0 %v584
  %v1241 = vpop.f32.mrf.mxu0
  %v1242 = vadd.f32 %v1153, %v1241
  %v1243 = vpop.f32.mrf.mxu0
  %v1244 = vadd.f32 %v1155, %v1243
  %1245 = vmatmul.bf16.gmra.mxu0 %v590
  %v1246 = vpop.f32.mrf.mxu0
  %v1247 = vadd.f32 %v1158, %v1246
  %v1248 = vpop.f32.mrf.mxu0
  %v1249 = vadd.f32 %v1160, %v1248
  %1250 = vmatmul.bf16.gmra.mxu0 %v596
  %v1251 = vpop.f32.mrf.mxu0
  %v1252 = vadd.f32 %v1163, %v1251
  %v1253 = vpop.f32.mrf.mxu0
  %v1254 = vadd.f32 %v1165, %v1253
  %1255 = vmatmul.bf16.gmra.mxu0 %v602
  %v1256 = vpop.f32.mrf.mxu0
  %v1257 = vadd.f32 %v1168, %v1256
  %v1258 = vpop.f32.mrf.mxu0
  %v1259 = vadd.f32 %v1170, %v1258
  %1260 = vmatmul.bf16.gmra.mxu0 %v608
  %v1261 = vpop.f32.mrf.mxu0
  %v1262 = vadd.f32 %v1173, %v1261
  %v1263 = vpop.f32.mrf.mxu0
  %v1264 = vadd.f32 %v1175, %v1263
  %1265 = vmatmul.bf16.gmra.mxu0 %v614
  %v1266 = vpop.f32.mrf.mxu0
  %v1267 = vadd.f32 %v1178, %v1266
  %v1268 = vpop.f32.mrf.mxu0
  %v1269 = vadd.f32 %v1180, %v1268
  %1270 = vmatmul.bf16.gmra.mxu0 %v620
  %v1271 = vpop.f32.mrf.mxu0
  %v1272 = vadd.f32 %v1183, %v1271
  %v1273 = vpop.f32.mrf.mxu0
  %v1274 = vadd.f32 %v1185, %v1273
  %1275 = vmatmul.bf16.gmra.mxu0 %v626
  %v1276 = vpop.f32.mrf.mxu0
  %v1277 = vadd.f32 %v1188, %v1276
  %v1278 = vpop.f32.mrf.mxu0
  %v1279 = vadd.f32 %v1190, %v1278
  %1280 = vdwg.mxu0
  %1281 = vmatpush.bf16.msra.mxu0 %v949
  %1282 = vmatpush.bf16.msra.mxu0 %v948
  %1283 = vmatpush.bf16.msra.mxu0 %v947
  %1284 = vmatpush.bf16.msra.mxu0 %v946
  %1285 = vmatpush.bf16.msra.mxu0 %v945
  %1286 = vmatpush.bf16.msra.mxu0 %v944
  %1287 = vmatpush.bf16.msra.mxu0 %v943
  %1288 = vmatpush.bf16.msra.mxu0 %v942
  %1289 = vmatmul.bf16.gmra.mxu0 %v537
  %v1290 = vpop.f32.mrf.mxu0
  %v1291 = vadd.f32 %v1202, %v1290
  %v1292 = vpop.f32.mrf.mxu0
  %v1293 = vadd.f32 %v1204, %v1292
  %1294 = vmatmul.bf16.gmra.mxu0 %v543
  %v1295 = vpop.f32.mrf.mxu0
  %v1296 = vadd.f32 %v1207, %v1295
  %v1297 = vpop.f32.mrf.mxu0
  %v1298 = vadd.f32 %v1209, %v1297
  %1299 = vmatmul.bf16.gmra.mxu0 %v549
  %v1300 = vpop.f32.mrf.mxu0
  %v1301 = vadd.f32 %v1212, %v1300
  %v1302 = vpop.f32.mrf.mxu0
  %v1303 = vadd.f32 %v1214, %v1302
  %1304 = vmatmul.bf16.gmra.mxu0 %v555
  %v1305 = vpop.f32.mrf.mxu0
  %v1306 = vadd.f32 %v1217, %v1305
  %v1307 = vpop.f32.mrf.mxu0
  %v1308 = vadd.f32 %v1219, %v1307
  %1309 = vmatmul.bf16.gmra.mxu0 %v561
  %v1310 = vpop.f32.mrf.mxu0
  %v1311 = vadd.f32 %v1222, %v1310
  %v1312 = vpop.f32.mrf.mxu0
  %v1313 = vadd.f32 %v1224, %v1312
  %1314 = vmatmul.bf16.gmra.mxu0 %v567
  %v1315 = vpop.f32.mrf.mxu0
  %v1316 = vadd.f32 %v1227, %v1315
  %v1317 = vpop.f32.mrf.mxu0
  %v1318 = vadd.f32 %v1229, %v1317
  %1319 = vmatmul.bf16.gmra.mxu0 %v573
  %v1320 = vpop.f32.mrf.mxu0
  %v1321 = vadd.f32 %v1232, %v1320
  %v1322 = vpop.f32.mrf.mxu0
  %v1323 = vadd.f32 %v1234, %v1322
  %1324 = vmatmul.bf16.gmra.mxu0 %v579
  %v1325 = vpop.f32.mrf.mxu0
  %v1326 = vadd.f32 %v1237, %v1325
  %v1327 = vpop.f32.mrf.mxu0
  %v1328 = vadd.f32 %v1239, %v1327
  %1329 = vmatmul.bf16.gmra.mxu0 %v585
  %v1330 = vpop.f32.mrf.mxu0
  %v1331 = vadd.f32 %v1242, %v1330
  %v1332 = vpop.f32.mrf.mxu0
  %v1333 = vadd.f32 %v1244, %v1332
  %1334 = vmatmul.bf16.gmra.mxu0 %v591
  %v1335 = vpop.f32.mrf.mxu0
  %v1336 = vadd.f32 %v1247, %v1335
  %v1337 = vpop.f32.mrf.mxu0
  %v1338 = vadd.f32 %v1249, %v1337
  %1339 = vmatmul.bf16.gmra.mxu0 %v597
  %v1340 = vpop.f32.mrf.mxu0
  %v1341 = vadd.f32 %v1252, %v1340
  %v1342 = vpop.f32.mrf.mxu0
  %v1343 = vadd.f32 %v1254, %v1342
  %1344 = vmatmul.bf16.gmra.mxu0 %v603
  %v1345 = vpop.f32.mrf.mxu0
  %v1346 = vadd.f32 %v1257, %v1345
  %v1347 = vpop.f32.mrf.mxu0
  %v1348 = vadd.f32 %v1259, %v1347
  %1349 = vmatmul.bf16.gmra.mxu0 %v609
  %v1350 = vpop.f32.mrf.mxu0
  %v1351 = vadd.f32 %v1262, %v1350
  %v1352 = vpop.f32.mrf.mxu0
  %v1353 = vadd.f32 %v1264, %v1352
  %1354 = vmatmul.bf16.gmra.mxu0 %v615
  %v1355 = vpop.f32.mrf.mxu0
  %v1356 = vadd.f32 %v1267, %v1355
  %v1357 = vpop.f32.mrf.mxu0
  %v1358 = vadd.f32 %v1269, %v1357
  %1359 = vmatmul.bf16.gmra.mxu0 %v621
  %v1360 = vpop.f32.mrf.mxu0
  %v1361 = vadd.f32 %v1272, %v1360
  %v1362 = vpop.f32.mrf.mxu0
  %v1363 = vadd.f32 %v1274, %v1362
  %1364 = vmatmul.bf16.gmra.mxu0 %v627
  %v1365 = vpop.f32.mrf.mxu0
  %v1366 = vadd.f32 %v1277, %v1365
  %v1367 = vpop.f32.mrf.mxu0
  %v1368 = vadd.f32 %v1279, %v1367
  %1369 = vdwg.mxu0
  %1370 = vmatpush.bf16.msra.mxu0 %v957
  %1371 = vmatpush.bf16.msra.mxu0 %v956
  %1372 = vmatpush.bf16.msra.mxu0 %v955
  %1373 = vmatpush.bf16.msra.mxu0 %v954
  %1374 = vmatpush.bf16.msra.mxu0 %v953
  %1375 = vmatpush.bf16.msra.mxu0 %v952
  %1376 = vmatpush.bf16.msra.mxu0 %v951
  %1377 = vmatpush.bf16.msra.mxu0 %v950
  %1378 = vmatmul.bf16.gmra.mxu0 %v538
  %v1379 = vpop.f32.mrf.mxu0
  %v1380 = vadd.f32 %v1291, %v1379
  %v1381 = vpop.f32.mrf.mxu0
  %v1382 = vadd.f32 %v1293, %v1381
  %1383 = vmatmul.bf16.gmra.mxu0 %v544
  %v1384 = vpop.f32.mrf.mxu0
  %v1385 = vadd.f32 %v1296, %v1384
  %v1386 = vpop.f32.mrf.mxu0
  %v1387 = vadd.f32 %v1298, %v1386
  %1388 = vmatmul.bf16.gmra.mxu0 %v550
  %v1389 = vpop.f32.mrf.mxu0
  %v1390 = vadd.f32 %v1301, %v1389
  %v1391 = vpop.f32.mrf.mxu0
  %v1392 = vadd.f32 %v1303, %v1391
  %1393 = vmatmul.bf16.gmra.mxu0 %v556
  %v1394 = vpop.f32.mrf.mxu0
  %v1395 = vadd.f32 %v1306, %v1394
  %v1396 = vpop.f32.mrf.mxu0
  %v1397 = vadd.f32 %v1308, %v1396
  %1398 = vmatmul.bf16.gmra.mxu0 %v562
  %v1399 = vpop.f32.mrf.mxu0
  %v1400 = vadd.f32 %v1311, %v1399
  %v1401 = vpop.f32.mrf.mxu0
  %v1402 = vadd.f32 %v1313, %v1401
  %1403 = vmatmul.bf16.gmra.mxu0 %v568
  %v1404 = vpop.f32.mrf.mxu0
  %v1405 = vadd.f32 %v1316, %v1404
  %v1406 = vpop.f32.mrf.mxu0
  %v1407 = vadd.f32 %v1318, %v1406
  %1408 = vmatmul.bf16.gmra.mxu0 %v574
  %v1409 = vpop.f32.mrf.mxu0
  %v1410 = vadd.f32 %v1321, %v1409
  %v1411 = vpop.f32.mrf.mxu0
  %v1412 = vadd.f32 %v1323, %v1411
  %1413 = vmatmul.bf16.gmra.mxu0 %v580
  %v1414 = vpop.f32.mrf.mxu0
  %v1415 = vadd.f32 %v1326, %v1414
  %v1416 = vpop.f32.mrf.mxu0
  %v1417 = vadd.f32 %v1328, %v1416
  %1418 = vmatmul.bf16.gmra.mxu0 %v586
  %v1419 = vpop.f32.mrf.mxu0
  %v1420 = vadd.f32 %v1331, %v1419
  %v1421 = vpop.f32.mrf.mxu0
  %v1422 = vadd.f32 %v1333, %v1421
  %1423 = vmatmul.bf16.gmra.mxu0 %v592
  %v1424 = vpop.f32.mrf.mxu0
  %v1425 = vadd.f32 %v1336, %v1424
  %v1426 = vpop.f32.mrf.mxu0
  %v1427 = vadd.f32 %v1338, %v1426
  %1428 = vmatmul.bf16.gmra.mxu0 %v598
  %v1429 = vpop.f32.mrf.mxu0
  %v1430 = vadd.f32 %v1341, %v1429
  %v1431 = vpop.f32.mrf.mxu0
  %v1432 = vadd.f32 %v1343, %v1431
  %1433 = vmatmul.bf16.gmra.mxu0 %v604
  %v1434 = vpop.f32.mrf.mxu0
  %v1435 = vadd.f32 %v1346, %v1434
  %v1436 = vpop.f32.mrf.mxu0
  %v1437 = vadd.f32 %v1348, %v1436
  %1438 = vmatmul.bf16.gmra.mxu0 %v610
  %v1439 = vpop.f32.mrf.mxu0
  %v1440 = vadd.f32 %v1351, %v1439
  %v1441 = vpop.f32.mrf.mxu0
  %v1442 = vadd.f32 %v1353, %v1441
  %1443 = vmatmul.bf16.gmra.mxu0 %v616
  %v1444 = vpop.f32.mrf.mxu0
  %v1445 = vadd.f32 %v1356, %v1444
  %v1446 = vpop.f32.mrf.mxu0
  %v1447 = vadd.f32 %v1358, %v1446
  %1448 = vmatmul.bf16.gmra.mxu0 %v622
  %v1449 = vpop.f32.mrf.mxu0
  %v1450 = vadd.f32 %v1361, %v1449
  %v1451 = vpop.f32.mrf.mxu0
  %v1452 = vadd.f32 %v1363, %v1451
  %1453 = vmatmul.bf16.gmra.mxu0 %v628
  %v1454 = vpop.f32.mrf.mxu0
  %v1455 = vadd.f32 %v1366, %v1454
  %v1456 = vpop.f32.mrf.mxu0
  %v1457 = vadd.f32 %v1368, %v1456
  %1458 = vdwg.mxu0
  %1459 = vmatpush.bf16.msra.mxu0 %v965
  %1460 = vmatpush.bf16.msra.mxu0 %v964
  %1461 = vmatpush.bf16.msra.mxu0 %v963
  %1462 = vmatpush.bf16.msra.mxu0 %v962
  %1463 = vmatpush.bf16.msra.mxu0 %v961
  %1464 = vmatpush.bf16.msra.mxu0 %v960
  %1465 = vmatpush.bf16.msra.mxu0 %v959
  %1466 = vmatpush.bf16.msra.mxu0 %v958
  %1467 = vmatmul.bf16.gmra.mxu0 %v539
  %v1468 = vpop.f32.mrf.mxu0
  %v1469 = vadd.f32 %v1380, %v1468
  %v1470 = vpop.f32.mrf.mxu0
  %v1471 = vadd.f32 %v1382, %v1470
  %1472 = vmatmul.bf16.gmra.mxu0 %v545
  %v1473 = vpop.f32.mrf.mxu0
  %v1474 = vadd.f32 %v1385, %v1473
  %v1475 = vpop.f32.mrf.mxu0
  %v1476 = vadd.f32 %v1387, %v1475
  %1477 = vmatmul.bf16.gmra.mxu0 %v551
  %v1478 = vpop.f32.mrf.mxu0
  %v1479 = vadd.f32 %v1390, %v1478
  %v1480 = vpop.f32.mrf.mxu0
  %v1481 = vadd.f32 %v1392, %v1480
  %1482 = vmatmul.bf16.gmra.mxu0 %v557
  %v1483 = vpop.f32.mrf.mxu0
  %v1484 = vadd.f32 %v1395, %v1483
  %v1485 = vpop.f32.mrf.mxu0
  %v1486 = vadd.f32 %v1397, %v1485
  %1487 = vmatmul.bf16.gmra.mxu0 %v563
  %v1488 = vpop.f32.mrf.mxu0
  %v1489 = vadd.f32 %v1400, %v1488
  %v1490 = vpop.f32.mrf.mxu0
  %v1491 = vadd.f32 %v1402, %v1490
  %1492 = vmatmul.bf16.gmra.mxu0 %v569
  %v1493 = vpop.f32.mrf.mxu0
  %v1494 = vadd.f32 %v1405, %v1493
  %v1495 = vpop.f32.mrf.mxu0
  %v1496 = vadd.f32 %v1407, %v1495
  %1497 = vmatmul.bf16.gmra.mxu0 %v575
  %v1498 = vpop.f32.mrf.mxu0
  %v1499 = vadd.f32 %v1410, %v1498
  %v1500 = vpop.f32.mrf.mxu0
  %v1501 = vadd.f32 %v1412, %v1500
  %1502 = vmatmul.bf16.gmra.mxu0 %v581
  %v1503 = vpop.f32.mrf.mxu0
  %v1504 = vadd.f32 %v1415, %v1503
  %v1505 = vpop.f32.mrf.mxu0
  %v1506 = vadd.f32 %v1417, %v1505
  %1507 = vmatmul.bf16.gmra.mxu0 %v587
  %v1508 = vpop.f32.mrf.mxu0
  %v1509 = vadd.f32 %v1420, %v1508
  %v1510 = vpop.f32.mrf.mxu0
  %v1511 = vadd.f32 %v1422, %v1510
  %1512 = vmatmul.bf16.gmra.mxu0 %v593
  %v1513 = vpop.f32.mrf.mxu0
  %v1514 = vadd.f32 %v1425, %v1513
  %v1515 = vpop.f32.mrf.mxu0
  %v1516 = vadd.f32 %v1427, %v1515
  %1517 = vmatmul.bf16.gmra.mxu0 %v599
  %v1518 = vpop.f32.mrf.mxu0
  %v1519 = vadd.f32 %v1430, %v1518
  %v1520 = vpop.f32.mrf.mxu0
  %v1521 = vadd.f32 %v1432, %v1520
  %1522 = vmatmul.bf16.gmra.mxu0 %v605
  %v1523 = vpop.f32.mrf.mxu0
  %v1524 = vadd.f32 %v1435, %v1523
  %v1525 = vpop.f32.mrf.mxu0
  %v1526 = vadd.f32 %v1437, %v1525
  %1527 = vmatmul.bf16.gmra.mxu0 %v611
  %v1528 = vpop.f32.mrf.mxu0
  %v1529 = vadd.f32 %v1440, %v1528
  %v1530 = vpop.f32.mrf.mxu0
  %v1531 = vadd.f32 %v1442, %v1530
  %1532 = vmatmul.bf16.gmra.mxu0 %v617
  %v1533 = vpop.f32.mrf.mxu0
  %v1534 = vadd.f32 %v1445, %v1533
  %v1535 = vpop.f32.mrf.mxu0
  %v1536 = vadd.f32 %v1447, %v1535
  %1537 = vmatmul.bf16.gmra.mxu0 %v623
  %v1538 = vpop.f32.mrf.mxu0
  %v1539 = vadd.f32 %v1450, %v1538
  %v1540 = vpop.f32.mrf.mxu0
  %v1541 = vadd.f32 %v1452, %v1540
  %1542 = vmatmul.bf16.gmra.mxu0 %v629
  %v1543 = vpop.f32.mrf.mxu0
  %v1544 = vadd.f32 %v1455, %v1543
  %v1545 = vpop.f32.mrf.mxu0
  %v1546 = vadd.f32 %v1457, %v1545
  %1547 = vdwg.mxu0
  %v1548 = vmax.f32 %v1469, 0.0
  %v1549 = vmax.f32 %v1471, 0.0
  %v1550 = vmax.f32 %v1474, 0.0
  %v1551 = vmax.f32 %v1476, 0.0
  %v1552 = vmax.f32 %v1479, 0.0
  %v1553 = vmax.f32 %v1481, 0.0
  %v1554 = vmax.f32 %v1484, 0.0
  %v1555 = vmax.f32 %v1486, 0.0
  %v1556 = vmax.f32 %v1489, 0.0
  %v1557 = vmax.f32 %v1491, 0.0
  %v1558 = vmax.f32 %v1494, 0.0
  %v1559 = vmax.f32 %v1496, 0.0
  %v1560 = vmax.f32 %v1499, 0.0
  %v1561 = vmax.f32 %v1501, 0.0
  %v1562 = vmax.f32 %v1504, 0.0
  %v1563 = vmax.f32 %v1506, 0.0
  %v1564 = vmax.f32 %v1509, 0.0
  %v1565 = vmax.f32 %v1511, 0.0
  %v1566 = vmax.f32 %v1514, 0.0
  %v1567 = vmax.f32 %v1516, 0.0
  %v1568 = vmax.f32 %v1519, 0.0
  %v1569 = vmax.f32 %v1521, 0.0
  %v1570 = vmax.f32 %v1524, 0.0
  %v1571 = vmax.f32 %v1526, 0.0
  %v1572 = vmax.f32 %v1529, 0.0
  %v1573 = vmax.f32 %v1531, 0.0
  %v1574 = vmax.f32 %v1534, 0.0
  %v1575 = vmax.f32 %v1536, 0.0
  %v1576 = vmax.f32 %v1539, 0.0
  %v1577 = vmax.f32 %v1541, 0.0
  %v1578 = vmax.f32 %v1544, 0.0
  %v1579 = vmax.f32 %v1546, 0.0
  %v1580 = vpack.c.bf16 %v1549, %v1548
  %v1581 = vpack.c.bf16 %v1551, %v1550
  %v1582 = vpack.c.bf16 %v1553, %v1552
  %v1583 = vpack.c.bf16 %v1555, %v1554
  %v1584 = vpack.c.bf16 %v1557, %v1556
  %v1585 = vpack.c.bf16 %v1559, %v1558
  %v1586 = vpack.c.bf16 %v1561, %v1560
  %v1587 = vpack.c.bf16 %v1563, %v1562
  %v1588 = vpack.c.bf16 %v1565, %v1564
  %v1589 = vpack.c.bf16 %v1567, %v1566
  %v1590 = vpack.c.bf16 %v1569, %v1568
  %v1591 = vpack.c.bf16 %v1571, %v1570
  %v1592 = vpack.c.bf16 %v1573, %v1572
  %v1593 = vpack.c.bf16 %v1575, %v1574
  %v1594 = vpack.c.bf16 %v1577, %v1576
  %v1595 = vpack.c.bf16 %v1579, %v1578
  %v1596 = vld [vmem:[%s3] sm:$0xf]
  %v1597 = vld [vmem:[%s3 + $0x4] sm:$0xf]
  %v1598 = vld [vmem:[%s3 + $0x8] sm:$0xf]
  %v1599 = vld [vmem:[%s3 + $0xc] sm:$0xf]
  %v1600 = vld [vmem:[%s3 + $0x10] sm:$0xf]
  %v1601 = vld [vmem:[%s3 + $0x14] sm:$0xf]
  %v1602 = vld [vmem:[%s3 + $0x18] sm:$0xf]
  %v1603 = vld [vmem:[%s3 + $0x1c] sm:$0xf]
  %v1604 = vld [vmem:[%s3 + $0x20] sm:$0xf]
  %v1605 = vld [vmem:[%s3 + $0x24] sm:$0xf]
  %v1606 = vld [vmem:[%s3 + $0x28] sm:$0xf]
  %v1607 = vld [vmem:[%s3 + $0x2c] sm:$0xf]
  %v1608 = vld [vmem:[%s3 + $0x30] sm:$0xf]
  %v1609 = vld [vmem:[%s3 + $0x34] sm:$0xf]
  %v1610 = vld [vmem:[%s3 + $0x38] sm:$0xf]
  %v1611 = vld [vmem:[%s3 + $0x3c] sm:$0xf]
  %v1612 = vld [vmem:[%s4] sm:$0x1]
  %v1614 = vperm.slane %v1612, 0
  %v1632 = vunpack.c.l.b16 %v1596
  %v1633 = vunpack.c.l.b16 %v1597
  %v1634 = vunpack.c.l.b16 %v1598
  %v1635 = vunpack.c.l.b16 %v1599
  %v1636 = vunpack.c.l.b16 %v1600
  %v1637 = vunpack.c.l.b16 %v1601
  %v1638 = vunpack.c.l.b16 %v1602
  %v1639 = vunpack.c.l.b16 %v1603
  %v1640 = vunpack.c.l.b16 %v1604
  %v1641 = vunpack.c.l.b16 %v1605
  %v1642 = vunpack.c.l.b16 %v1606
  %v1643 = vunpack.c.l.b16 %v1607
  %v1644 = vunpack.c.l.b16 %v1608
  %v1645 = vunpack.c.l.b16 %v1609
  %v1646 = vunpack.c.l.b16 %v1610
  %v1647 = vunpack.c.l.b16 %v1611
  %v1648 = vpack.c.b16 %v1633, %v1632
  %v1649 = vpack.c.b16 %v1635, %v1634
  %v1650 = vpack.c.b16 %v1637, %v1636
  %v1651 = vpack.c.b16 %v1639, %v1638
  %v1652 = vpack.c.b16 %v1641, %v1640
  %v1653 = vpack.c.b16 %v1643, %v1642
  %v1654 = vpack.c.b16 %v1645, %v1644
  %v1655 = vpack.c.b16 %v1647, %v1646
  %1664 = vmatpush.bf16.msra.mxu0 %v1655
  %1665 = vmatpush.bf16.msra.mxu0 %v1654
  %1666 = vmatpush.bf16.msra.mxu0 %v1653
  %1667 = vmatpush.bf16.msra.mxu0 %v1652
  %1668 = vmatpush.bf16.msra.mxu0 %v1651
  %1669 = vmatpush.bf16.msra.mxu0 %v1650
  %1670 = vmatpush.bf16.msra.mxu0 %v1649
  %1671 = vmatpush.bf16.msra.mxu0 %v1648
  %1672 = vmatmul.bf16.gmra.mxu0 %v1580
  %v1673 = vpop.f32.mrf.mxu0
  %v1674 = vadd.f32 %v1614, %v1673
  %v1675 = vpop.f32.mrf.mxu0
  %v1676 = vadd.f32 %v1614, %v1675
  %1677 = vmatmul.bf16.gmra.mxu0 %v1581
  %v1678 = vpop.f32.mrf.mxu0
  %v1679 = vadd.f32 %v1614, %v1678
  %v1680 = vpop.f32.mrf.mxu0
  %v1681 = vadd.f32 %v1614, %v1680
  %1682 = vmatmul.bf16.gmra.mxu0 %v1582
  %v1683 = vpop.f32.mrf.mxu0
  %v1684 = vadd.f32 %v1614, %v1683
  %v1685 = vpop.f32.mrf.mxu0
  %v1686 = vadd.f32 %v1614, %v1685
  %1687 = vmatmul.bf16.gmra.mxu0 %v1583
  %v1688 = vpop.f32.mrf.mxu0
  %v1689 = vadd.f32 %v1614, %v1688
  %v1690 = vpop.f32.mrf.mxu0
  %v1691 = vadd.f32 %v1614, %v1690
  %1692 = vmatmul.bf16.gmra.mxu0 %v1584
  %v1693 = vpop.f32.mrf.mxu0
  %v1694 = vadd.f32 %v1614, %v1693
  %v1695 = vpop.f32.mrf.mxu0
  %v1696 = vadd.f32 %v1614, %v1695
  %1697 = vmatmul.bf16.gmra.mxu0 %v1585
  %v1698 = vpop.f32.mrf.mxu0
  %v1699 = vadd.f32 %v1614, %v1698
  %v1700 = vpop.f32.mrf.mxu0
  %v1701 = vadd.f32 %v1614, %v1700
  %1702 = vmatmul.bf16.gmra.mxu0 %v1586
  %v1703 = vpop.f32.mrf.mxu0
  %v1704 = vadd.f32 %v1614, %v1703
  %v1705 = vpop.f32.mrf.mxu0
  %v1706 = vadd.f32 %v1614, %v1705
  %1707 = vmatmul.bf16.gmra.mxu0 %v1587
  %v1708 = vpop.f32.mrf.mxu0
  %v1709 = vadd.f32 %v1614, %v1708
  %v1710 = vpop.f32.mrf.mxu0
  %v1711 = vadd.f32 %v1614, %v1710
  %1712 = vmatmul.bf16.gmra.mxu0 %v1588
  %v1713 = vpop.f32.mrf.mxu0
  %v1714 = vadd.f32 %v1614, %v1713
  %v1715 = vpop.f32.mrf.mxu0
  %v1716 = vadd.f32 %v1614, %v1715
  %1717 = vmatmul.bf16.gmra.mxu0 %v1589
  %v1718 = vpop.f32.mrf.mxu0
  %v1719 = vadd.f32 %v1614, %v1718
  %v1720 = vpop.f32.mrf.mxu0
  %v1721 = vadd.f32 %v1614, %v1720
  %1722 = vmatmul.bf16.gmra.mxu0 %v1590
  %v1723 = vpop.f32.mrf.mxu0
  %v1724 = vadd.f32 %v1614, %v1723
  %v1725 = vpop.f32.mrf.mxu0
  %v1726 = vadd.f32 %v1614, %v1725
  %1727 = vmatmul.bf16.gmra.mxu0 %v1591
  %v1728 = vpop.f32.mrf.mxu0
  %v1729 = vadd.f32 %v1614, %v1728
  %v1730 = vpop.f32.mrf.mxu0
  %v1731 = vadd.f32 %v1614, %v1730
  %1732 = vmatmul.bf16.gmra.mxu0 %v1592
  %v1733 = vpop.f32.mrf.mxu0
  %v1734 = vadd.f32 %v1614, %v1733
  %v1735 = vpop.f32.mrf.mxu0
  %v1736 = vadd.f32 %v1614, %v1735
  %1737 = vmatmul.bf16.gmra.mxu0 %v1593
  %v1738 = vpop.f32.mrf.mxu0
  %v1739 = vadd.f32 %v1614, %v1738
  %v1740 = vpop.f32.mrf.mxu0
  %v1741 = vadd.f32 %v1614, %v1740
  %1742 = vmatmul.bf16.gmra.mxu0 %v1594
  %v1743 = vpop.f32.mrf.mxu0
  %v1744 = vadd.f32 %v1614, %v1743
  %v1745 = vpop.f32.mrf.mxu0
  %v1746 = vadd.f32 %v1614, %v1745
  %1747 = vmatmul.bf16.gmra.mxu0 %v1595
  %v1748 = vpop.f32.mrf.mxu0
  %v1749 = vadd.f32 %v1614, %v1748
  %v1750 = vpop.f32.mrf.mxu0
  %v1751 = vadd.f32 %v1614, %v1750
  %1752 = vdwg.mxu0
  %v1753 = vmax.f32 %v1674, 0.0
  %v1754 = vmax.f32 %v1676, 0.0
  %v1755 = vmax.f32 %v1679, 0.0
  %v1756 = vmax.f32 %v1681, 0.0
  %v1757 = vmax.f32 %v1684, 0.0
  %v1758 = vmax.f32 %v1686, 0.0
  %v1759 = vmax.f32 %v1689, 0.0
  %v1760 = vmax.f32 %v1691, 0.0
  %v1761 = vmax.f32 %v1694, 0.0
  %v1762 = vmax.f32 %v1696, 0.0
  %v1763 = vmax.f32 %v1699, 0.0
  %v1764 = vmax.f32 %v1701, 0.0
  %v1765 = vmax.f32 %v1704, 0.0
  %v1766 = vmax.f32 %v1706, 0.0
  %v1767 = vmax.f32 %v1709, 0.0
  %v1768 = vmax.f32 %v1711, 0.0
  %v1769 = vmax.f32 %v1714, 0.0
  %v1770 = vmax.f32 %v1716, 0.0
  %v1771 = vmax.f32 %v1719, 0.0
  %v1772 = vmax.f32 %v1721, 0.0
  %v1773 = vmax.f32 %v1724, 0.0
  %v1774 = vmax.f32 %v1726, 0.0
  %v1775 = vmax.f32 %v1729, 0.0
  %v1776 = vmax.f32 %v1731, 0.0
  %v1777 = vmax.f32 %v1734, 0.0
  %v1778 = vmax.f32 %v1736, 0.0
  %v1779 = vmax.f32 %v1739, 0.0
  %v1780 = vmax.f32 %v1741, 0.0
  %v1781 = vmax.f32 %v1744, 0.0
  %v1782 = vmax.f32 %v1746, 0.0
  %v1783 = vmax.f32 %v1749, 0.0
  %v1784 = vmax.f32 %v1751, 0.0
  %vm1785 = vcmask 130048
  %1786 = vst.msk [vmem:[#allocation2] sm:$0xff] %vm1785, %v1753
  %1787 = vst.msk [vmem:[#allocation2 + $0x8] sm:$0xff] %vm1785, %v1754
  %1788 = vst.msk [vmem:[#allocation2 + $0x10] sm:$0xff] %vm1785, %v1755
  %1789 = vst.msk [vmem:[#allocation2 + $0x18] sm:$0xff] %vm1785, %v1756
  %1790 = vst.msk [vmem:[#allocation2 + $0x20] sm:$0xff] %vm1785, %v1757
  %1791 = vst.msk [vmem:[#allocation2 + $0x28] sm:$0xff] %vm1785, %v1758
  %1792 = vst.msk [vmem:[#allocation2 + $0x30] sm:$0xff] %vm1785, %v1759
  %1793 = vst.msk [vmem:[#allocation2 + $0x38] sm:$0xff] %vm1785, %v1760
  %1794 = vst.msk [vmem:[#allocation2 + $0x40] sm:$0xff] %vm1785, %v1761
  %1795 = vst.msk [vmem:[#allocation2 + $0x48] sm:$0xff] %vm1785, %v1762
  %1796 = vst.msk [vmem:[#allocation2 + $0x50] sm:$0xff] %vm1785, %v1763
  %1797 = vst.msk [vmem:[#allocation2 + $0x58] sm:$0xff] %vm1785, %v1764
  %1798 = vst.msk [vmem:[#allocation2 + $0x60] sm:$0xff] %vm1785, %v1765
  %1799 = vst.msk [vmem:[#allocation2 + $0x68] sm:$0xff] %vm1785, %v1766
  %1800 = vst.msk [vmem:[#allocation2 + $0x70] sm:$0xff] %vm1785, %v1767
  %1801 = vst.msk [vmem:[#allocation2 + $0x78] sm:$0xff] %vm1785, %v1768
  %1802 = vst.msk [vmem:[#allocation2 + $0x80] sm:$0xff] %vm1785, %v1769
  %1803 = vst.msk [vmem:[#allocation2 + $0x88] sm:$0xff] %vm1785, %v1770
  %1804 = vst.msk [vmem:[#allocation2 + $0x90] sm:$0xff] %vm1785, %v1771
  %1805 = vst.msk [vmem:[#allocation2 + $0x98] sm:$0xff] %vm1785, %v1772
  %1806 = vst.msk [vmem:[#allocation2 + $0xa0] sm:$0xff] %vm1785, %v1773
  %1807 = vst.msk [vmem:[#allocation2 + $0xa8] sm:$0xff] %vm1785, %v1774
  %1808 = vst.msk [vmem:[#allocation2 + $0xb0] sm:$0xff] %vm1785, %v1775
  %1809 = vst.msk [vmem:[#allocation2 + $0xb8] sm:$0xff] %vm1785, %v1776
  %1810 = vst.msk [vmem:[#allocation2 + $0xc0] sm:$0xff] %vm1785, %v1777
  %1811 = vst.msk [vmem:[#allocation2 + $0xc8] sm:$0xff] %vm1785, %v1778
  %1812 = vst.msk [vmem:[#allocation2 + $0xd0] sm:$0xff] %vm1785, %v1779
  %1813 = vst.msk [vmem:[#allocation2 + $0xd8] sm:$0xff] %vm1785, %v1780
  %1814 = vst.msk [vmem:[#allocation2 + $0xe0] sm:$0xff] %vm1785, %v1781
  %1815 = vst.msk [vmem:[#allocation2 + $0xe8] sm:$0xff] %vm1785, %v1782
  %1816 = vst.msk [vmem:[#allocation2 + $0xf0] sm:$0xff] %vm1785, %v1783
  %1817 = vst.msk [vmem:[#allocation2 + $0xf8] sm:$0xff] %vm1785, %v1784
  %v1818 = vld [vmem:[#allocation2] sm:$0xff]
  %v1819 = vld [vmem:[#allocation2 + $0x8] sm:$0xff]
  %v1820 = vld [vmem:[#allocation2 + $0x10] sm:$0x7]
  %v1821 = vld [vmem:[%s5] sm:$0xff]
  %v1822 = vld [vmem:[%s5 + $0x8] sm:$0xff]
  %v1823 = vld [vmem:[#allocation2 + $0x40] sm:$0xff]
  %v1824 = vld [vmem:[#allocation2 + $0x48] sm:$0xff]
  %v1825 = vld [vmem:[#allocation2 + $0x50] sm:$0x7]
  %v1826 = vld [vmem:[%s5 + $0x10] sm:$0xff]
  %v1827 = vld [vmem:[%s5 + $0x18] sm:$0xff]
  %v1829 = vsel %vm1785, %v1823, 0
  %v1832 = vsel %vm1785, %v1824, 0
  %v1835 = vsel %vm1785, %v1825, 0
  %1837 = vmatpush.msra.mxu0 0.0
  %1838 = vmatpush.msra.mxu0 0.0
  %1839 = vmatpush.msra.mxu0 0.0
  %1840 = vmatpush.msra.mxu0 0.0
  %1841 = vmatpush.msra.mxu0 0.0
  %1842 = vmatpush.msra.mxu0 0.0
  %1843 = vmatpush.msra.mxu0 0.0
  %1844 = vmatpush.msra.mxu0 0.0
  %1845 = vmatpush.msra.mxu0 0.0
  %1846 = vmatpush.msra.mxu0 0.0
  %1847 = vmatpush.msra.mxu0 0.0
  %1848 = vmatpush.msra.mxu0 0.0
  %1849 = vmatpush.msra.mxu0 0.0
  %1850 = vmatpush.msra.mxu0 0.0
  %1851 = vmatpush.msra.mxu0 %v1827
  %1852 = vmatpush.msra.mxu0 %v1826
  %1853 = vmatmul.f32.gmra.mxu0 %v1829
  %v1854 = vpop.f32.mrf.mxu0
  %v1855 = vadd.f32 0.0, %v1854
  %1856 = vmatmul.f32.gmra.mxu0 %v1832
  %v1857 = vpop.f32.mrf.mxu0
  %v1858 = vadd.f32 0.0, %v1857
  %1859 = vmatmul.f32.gmra.mxu0 %v1835
  %v1860 = vpop.f32.mrf.mxu0
  %v1861 = vadd.f32 0.0, %v1860
  %1862 = vdwg.mxu0
  %v1864 = vsel %vm1785, %v1818, 0
  %v1867 = vsel %vm1785, %v1819, 0
  %v1870 = vsel %vm1785, %v1820, 0
  %1872 = vmatpush.msra.mxu0 0.0
  %1873 = vmatpush.msra.mxu0 0.0
  %1874 = vmatpush.msra.mxu0 0.0
  %1875 = vmatpush.msra.mxu0 0.0
  %1876 = vmatpush.msra.mxu0 0.0
  %1877 = vmatpush.msra.mxu0 0.0
  %1878 = vmatpush.msra.mxu0 0.0
  %1879 = vmatpush.msra.mxu0 0.0
  %1880 = vmatpush.msra.mxu0 0.0
  %1881 = vmatpush.msra.mxu0 0.0
  %1882 = vmatpush.msra.mxu0 0.0
  %1883 = vmatpush.msra.mxu0 0.0
  %1884 = vmatpush.msra.mxu0 0.0
  %1885 = vmatpush.msra.mxu0 0.0
  %1886 = vmatpush.msra.mxu0 %v1822
  %1887 = vmatpush.msra.mxu0 %v1821
  %1888 = vmatmul.f32.gmra.mxu0 %v1864
  %v1889 = vpop.f32.mrf.mxu0
  %v1890 = vadd.f32 %v1855, %v1889
  %1891 = vmatmul.f32.gmra.mxu0 %v1867
  %v1892 = vpop.f32.mrf.mxu0
  %v1893 = vadd.f32 %v1858, %v1892
  %1894 = vmatmul.f32.gmra.mxu0 %v1870
  %v1895 = vpop.f32.mrf.mxu0
  %v1896 = vadd.f32 %v1861, %v1895
  %1897 = vdwg.mxu0
  %v1898 = vld [vmem:[#allocation2 + $0x1] sm:$0xff]
  %v1899 = vld [vmem:[#allocation2 + $0x9] sm:$0xff]
  %v1900 = vld [vmem:[#allocation2 + $0x11] sm:$0x7]
  %v1901 = vld [vmem:[%s5 + $0x20] sm:$0xff]
  %v1902 = vld [vmem:[%s5 + $0x28] sm:$0xff]
  %v1904 = vsel %vm1785, %v1898, 0
  %v1907 = vsel %vm1785, %v1899, 0
  %v1910 = vsel %vm1785, %v1900, 0
  %1912 = vmatpush.msra.mxu0 0.0
  %1913 = vmatpush.msra.mxu0 0.0
  %1914 = vmatpush.msra.mxu0 0.0
  %1915 = vmatpush.msra.mxu0 0.0
  %1916 = vmatpush.msra.mxu0 0.0
  %1917 = vmatpush.msra.mxu0 0.0
  %1918 = vmatpush.msra.mxu0 0.0
  %1919 = vmatpush.msra.mxu0 0.0
  %1920 = vmatpush.msra.mxu0 0.0
  %1921 = vmatpush.msra.mxu0 0.0
  %1922 = vmatpush.msra.mxu0 0.0
  %1923 = vmatpush.msra.mxu0 0.0
  %1924 = vmatpush.msra.mxu0 0.0
  %1925 = vmatpush.msra.mxu0 0.0
  %1926 = vmatpush.msra.mxu0 %v1902
  %1927 = vmatpush.msra.mxu0 %v1901
  %1928 = vmatmul.f32.gmra.mxu0 %v1904
  %v1929 = vpop.f32.mrf.mxu0
  %v1930 = vadd.f32 0.0, %v1929
  %1931 = vmatmul.f32.gmra.mxu0 %v1907
  %v1932 = vpop.f32.mrf.mxu0
  %v1933 = vadd.f32 0.0, %v1932
  %1934 = vmatmul.f32.gmra.mxu0 %v1910
  %v1935 = vpop.f32.mrf.mxu0
  %v1936 = vadd.f32 0.0, %v1935
  %1937 = vdwg.mxu0
  %v1938 = vadd.f32 %v1890, %v1930
  %v1939 = vadd.f32 %v1893, %v1933
  %v1940 = vadd.f32 %v1896, %v1936
  %v1941 = vld [vmem:[#allocation2 + $0x41] sm:$0xff]
  %v1942 = vld [vmem:[#allocation2 + $0x49] sm:$0xff]
  %v1943 = vld [vmem:[#allocation2 + $0x51] sm:$0x7]
  %v1944 = vld [vmem:[%s5 + $0x30] sm:$0xff]
  %v1945 = vld [vmem:[%s5 + $0x38] sm:$0xff]
  %v1947 = vsel %vm1785, %v1941, 0
  %v1950 = vsel %vm1785, %v1942, 0
  %v1953 = vsel %vm1785, %v1943, 0
  %1955 = vmatpush.msra.mxu0 0.0
  %1956 = vmatpush.msra.mxu0 0.0
  %1957 = vmatpush.msra.mxu0 0.0
  %1958 = vmatpush.msra.mxu0 0.0
  %1959 = vmatpush.msra.mxu0 0.0
  %1960 = vmatpush.msra.mxu0 0.0
  %1961 = vmatpush.msra.mxu0 0.0
  %1962 = vmatpush.msra.mxu0 0.0
  %1963 = vmatpush.msra.mxu0 0.0
  %1964 = vmatpush.msra.mxu0 0.0
  %1965 = vmatpush.msra.mxu0 0.0
  %1966 = vmatpush.msra.mxu0 0.0
  %1967 = vmatpush.msra.mxu0 0.0
  %1968 = vmatpush.msra.mxu0 0.0
  %1969 = vmatpush.msra.mxu0 %v1945
  %1970 = vmatpush.msra.mxu0 %v1944
  %1971 = vmatmul.f32.gmra.mxu0 %v1947
  %v1972 = vpop.f32.mrf.mxu0
  %v1973 = vadd.f32 0.0, %v1972
  %1974 = vmatmul.f32.gmra.mxu0 %v1950
  %v1975 = vpop.f32.mrf.mxu0
  %v1976 = vadd.f32 0.0, %v1975
  %1977 = vmatmul.f32.gmra.mxu0 %v1953
  %v1978 = vpop.f32.mrf.mxu0
  %v1979 = vadd.f32 0.0, %v1978
  %1980 = vdwg.mxu0
  %v1981 = vadd.f32 %v1938, %v1973
  %v1982 = vadd.f32 %v1939, %v1976
  %v1983 = vadd.f32 %v1940, %v1979
  %v1984 = vld [vmem:[#allocation2 + $0x80] sm:$0xff]
  %v1985 = vld [vmem:[#allocation2 + $0x88] sm:$0xff]
  %v1986 = vld [vmem:[#allocation2 + $0x90] sm:$0x7]
  %v1987 = vld [vmem:[%s5 + $0x40] sm:$0xff]
  %v1988 = vld [vmem:[%s5 + $0x48] sm:$0xff]
  %v1990 = vsel %vm1785, %v1984, 0
  %v1993 = vsel %vm1785, %v1985, 0
  %v1996 = vsel %vm1785, %v1986, 0
  %1998 = vmatpush.msra.mxu0 0.0
  %1999 = vmatpush.msra.mxu0 0.0
  %2000 = vmatpush.msra.mxu0 0.0
  %2001 = vmatpush.msra.mxu0 0.0
  %2002 = vmatpush.msra.mxu0 0.0
  %2003 = vmatpush.msra.mxu0 0.0
  %2004 = vmatpush.msra.mxu0 0.0
  %2005 = vmatpush.msra.mxu0 0.0
  %2006 = vmatpush.msra.mxu0 0.0
  %2007 = vmatpush.msra.mxu0 0.0
  %2008 = vmatpush.msra.mxu0 0.0
  %2009 = vmatpush.msra.mxu0 0.0
  %2010 = vmatpush.msra.mxu0 0.0
  %2011 = vmatpush.msra.mxu0 0.0
  %2012 = vmatpush.msra.mxu0 %v1988
  %2013 = vmatpush.msra.mxu0 %v1987
  %2014 = vmatmul.f32.gmra.mxu0 %v1990
  %v2015 = vpop.f32.mrf.mxu0
  %v2016 = vadd.f32 0.0, %v2015
  %2017 = vmatmul.f32.gmra.mxu0 %v1993
  %v2018 = vpop.f32.mrf.mxu0
  %v2019 = vadd.f32 0.0, %v2018
  %2020 = vmatmul.f32.gmra.mxu0 %v1996
  %v2021 = vpop.f32.mrf.mxu0
  %v2022 = vadd.f32 0.0, %v2021
  %2023 = vdwg.mxu0
  %v2024 = vadd.f32 %v1981, %v2016
  %v2025 = vadd.f32 %v1982, %v2019
  %v2026 = vadd.f32 %v1983, %v2022
  %v2027 = vld [vmem:[#allocation2 + $0xc0] sm:$0xff]
  %v2028 = vld [vmem:[#allocation2 + $0xc8] sm:$0xff]
  %v2029 = vld [vmem:[#allocation2 + $0xd0] sm:$0x7]
  %v2030 = vld [vmem:[%s5 + $0x50] sm:$0xff]
  %v2031 = vld [vmem:[%s5 + $0x58] sm:$0xff]
  %v2033 = vsel %vm1785, %v2027, 0
  %v2036 = vsel %vm1785, %v2028, 0
  %v2039 = vsel %vm1785, %v2029, 0
  %2041 = vmatpush.msra.mxu0 0.0
  %2042 = vmatpush.msra.mxu0 0.0
  %2043 = vmatpush.msra.mxu0 0.0
  %2044 = vmatpush.msra.mxu0 0.0
  %2045 = vmatpush.msra.mxu0 0.0
  %2046 = vmatpush.msra.mxu0 0.0
  %2047 = vmatpush.msra.mxu0 0.0
  %2048 = vmatpush.msra.mxu0 0.0
  %2049 = vmatpush.msra.mxu0 0.0
  %2050 = vmatpush.msra.mxu0 0.0
  %2051 = vmatpush.msra.mxu0 0.0
  %2052 = vmatpush.msra.mxu0 0.0
  %2053 = vmatpush.msra.mxu0 0.0
  %2054 = vmatpush.msra.mxu0 0.0
  %2055 = vmatpush.msra.mxu0 %v2031
  %2056 = vmatpush.msra.mxu0 %v2030
  %2057 = vmatmul.f32.gmra.mxu0 %v2033
  %v2058 = vpop.f32.mrf.mxu0
  %v2059 = vadd.f32 0.0, %v2058
  %2060 = vmatmul.f32.gmra.mxu0 %v2036
  %v2061 = vpop.f32.mrf.mxu0
  %v2062 = vadd.f32 0.0, %v2061
  %2063 = vmatmul.f32.gmra.mxu0 %v2039
  %v2064 = vpop.f32.mrf.mxu0
  %v2065 = vadd.f32 0.0, %v2064
  %2066 = vdwg.mxu0
  %v2067 = vadd.f32 %v2024, %v2059
  %v2068 = vadd.f32 %v2025, %v2062
  %v2069 = vadd.f32 %v2026, %v2065
  %v2070 = vld [vmem:[#allocation2 + $0x81] sm:$0xff]
  %v2071 = vld [vmem:[#allocation2 + $0x89] sm:$0xff]
  %v2072 = vld [vmem:[#allocation2 + $0x91] sm:$0x7]
  %v2073 = vld [vmem:[%s5 + $0x60] sm:$0xff]
  %v2074 = vld [vmem:[%s5 + $0x68] sm:$0xff]
  %v2076 = vsel %vm1785, %v2070, 0
  %v2079 = vsel %vm1785, %v2071, 0
  %v2082 = vsel %vm1785, %v2072, 0
  %2084 = vmatpush.msra.mxu0 0.0
  %2085 = vmatpush.msra.mxu0 0.0
  %2086 = vmatpush.msra.mxu0 0.0
  %2087 = vmatpush.msra.mxu0 0.0
  %2088 = vmatpush.msra.mxu0 0.0
  %2089 = vmatpush.msra.mxu0 0.0
  %2090 = vmatpush.msra.mxu0 0.0
  %2091 = vmatpush.msra.mxu0 0.0
  %2092 = vmatpush.msra.mxu0 0.0
  %2093 = vmatpush.msra.mxu0 0.0
  %2094 = vmatpush.msra.mxu0 0.0
  %2095 = vmatpush.msra.mxu0 0.0
  %2096 = vmatpush.msra.mxu0 0.0
  %2097 = vmatpush.msra.mxu0 0.0
  %2098 = vmatpush.msra.mxu0 %v2074
  %2099 = vmatpush.msra.mxu0 %v2073
  %2100 = vmatmul.f32.gmra.mxu0 %v2076
  %v2101 = vpop.f32.mrf.mxu0
  %v2102 = vadd.f32 0.0, %v2101
  %2103 = vmatmul.f32.gmra.mxu0 %v2079
  %v2104 = vpop.f32.mrf.mxu0
  %v2105 = vadd.f32 0.0, %v2104
  %2106 = vmatmul.f32.gmra.mxu0 %v2082
  %v2107 = vpop.f32.mrf.mxu0
  %v2108 = vadd.f32 0.0, %v2107
  %2109 = vdwg.mxu0
  %v2110 = vadd.f32 %v2067, %v2102
  %v2111 = vadd.f32 %v2068, %v2105
  %v2112 = vadd.f32 %v2069, %v2108
  %v2113 = vld [vmem:[#allocation2 + $0xc1] sm:$0xff]
  %v2114 = vld [vmem:[#allocation2 + $0xc9] sm:$0xff]
  %v2115 = vld [vmem:[#allocation2 + $0xd1] sm:$0x7]
  %v2116 = vld [vmem:[%s5 + $0x70] sm:$0xff]
  %v2117 = vld [vmem:[%s5 + $0x78] sm:$0xff]
  %v2119 = vsel %vm1785, %v2113, 0
  %v2122 = vsel %vm1785, %v2114, 0
  %v2125 = vsel %vm1785, %v2115, 0
  %2127 = vmatpush.msra.mxu0 0.0
  %2128 = vmatpush.msra.mxu0 0.0
  %2129 = vmatpush.msra.mxu0 0.0
  %2130 = vmatpush.msra.mxu0 0.0
  %2131 = vmatpush.msra.mxu0 0.0
  %2132 = vmatpush.msra.mxu0 0.0
  %2133 = vmatpush.msra.mxu0 0.0
  %2134 = vmatpush.msra.mxu0 0.0
  %2135 = vmatpush.msra.mxu0 0.0
  %2136 = vmatpush.msra.mxu0 0.0
  %2137 = vmatpush.msra.mxu0 0.0
  %2138 = vmatpush.msra.mxu0 0.0
  %2139 = vmatpush.msra.mxu0 0.0
  %2140 = vmatpush.msra.mxu0 0.0
  %2141 = vmatpush.msra.mxu0 %v2117
  %2142 = vmatpush.msra.mxu0 %v2116
  %2143 = vmatmul.f32.gmra.mxu0 %v2119
  %v2144 = vpop.f32.mrf.mxu0
  %v2145 = vadd.f32 0.0, %v2144
  %2146 = vmatmul.f32.gmra.mxu0 %v2122
  %v2147 = vpop.f32.mrf.mxu0
  %v2148 = vadd.f32 0.0, %v2147
  %2149 = vmatmul.f32.gmra.mxu0 %v2125
  %v2150 = vpop.f32.mrf.mxu0
  %v2151 = vadd.f32 0.0, %v2150
  %2152 = vdwg.mxu0
  %v2153 = vadd.f32 %v2110, %v2145
  %v2154 = vadd.f32 %v2111, %v2148
  %v2155 = vadd.f32 %v2112, %v2151
  %v2156 = vld [vmem:[#allocation2 + $0x5] sm:$0xff]
  %v2157 = vld [vmem:[#allocation2 + $0xd] sm:$0xff]
  %v2158 = vld [vmem:[#allocation2 + $0x15] sm:$0x7]
  %v2159 = vld [vmem:[%s5 + $0x80] sm:$0xff]
  %v2160 = vld [vmem:[%s5 + $0x88] sm:$0xff]
  %v2162 = vsel %vm1785, %v2156, 0
  %v2165 = vsel %vm1785, %v2157, 0
  %v2168 = vsel %vm1785, %v2158, 0
  %2170 = vmatpush.msra.mxu0 0.0
  %2171 = vmatpush.msra.mxu0 0.0
  %2172 = vmatpush.msra.mxu0 0.0
  %2173 = vmatpush.msra.mxu0 0.0
  %2174 = vmatpush.msra.mxu0 0.0
  %2175 = vmatpush.msra.mxu0 0.0
  %2176 = vmatpush.msra.mxu0 0.0
  %2177 = vmatpush.msra.mxu0 0.0
  %2178 = vmatpush.msra.mxu0 0.0
  %2179 = vmatpush.msra.mxu0 0.0
  %2180 = vmatpush.msra.mxu0 0.0
  %2181 = vmatpush.msra.mxu0 0.0
  %2182 = vmatpush.msra.mxu0 0.0
  %2183 = vmatpush.msra.mxu0 0.0
  %2184 = vmatpush.msra.mxu0 %v2160
  %2185 = vmatpush.msra.mxu0 %v2159
  %2186 = vmatmul.f32.gmra.mxu0 %v2162
  %v2187 = vpop.f32.mrf.mxu0
  %v2188 = vadd.f32 0.0, %v2187
  %2189 = vmatmul.f32.gmra.mxu0 %v2165
  %v2190 = vpop.f32.mrf.mxu0
  %v2191 = vadd.f32 0.0, %v2190
  %2192 = vmatmul.f32.gmra.mxu0 %v2168
  %v2193 = vpop.f32.mrf.mxu0
  %v2194 = vadd.f32 0.0, %v2193
  %2195 = vdwg.mxu0
  %v2196 = vadd.f32 %v2153, %v2188
  %v2197 = vadd.f32 %v2154, %v2191
  %v2198 = vadd.f32 %v2155, %v2194
  %v2199 = vld [vmem:[#allocation2 + $0x45] sm:$0xff]
  %v2200 = vld [vmem:[#allocation2 + $0x4d] sm:$0xff]
  %v2201 = vld [vmem:[#allocation2 + $0x55] sm:$0x7]
  %v2202 = vld [vmem:[%s5 + $0x90] sm:$0xff]
  %v2203 = vld [vmem:[%s5 + $0x98] sm:$0xff]
  %v2205 = vsel %vm1785, %v2199, 0
  %v2208 = vsel %vm1785, %v2200, 0
  %v2211 = vsel %vm1785, %v2201, 0
  %2213 = vmatpush.msra.mxu0 0.0
  %2214 = vmatpush.msra.mxu0 0.0
  %2215 = vmatpush.msra.mxu0 0.0
  %2216 = vmatpush.msra.mxu0 0.0
  %2217 = vmatpush.msra.mxu0 0.0
  %2218 = vmatpush.msra.mxu0 0.0
  %2219 = vmatpush.msra.mxu0 0.0
  %2220 = vmatpush.msra.mxu0 0.0
  %2221 = vmatpush.msra.mxu0 0.0
  %2222 = vmatpush.msra.mxu0 0.0
  %2223 = vmatpush.msra.mxu0 0.0
  %2224 = vmatpush.msra.mxu0 0.0
  %2225 = vmatpush.msra.mxu0 0.0
  %2226 = vmatpush.msra.mxu0 0.0
  %2227 = vmatpush.msra.mxu0 %v2203
  %2228 = vmatpush.msra.mxu0 %v2202
  %2229 = vmatmul.f32.gmra.mxu0 %v2205
  %v2230 = vpop.f32.mrf.mxu0
  %v2231 = vadd.f32 0.0, %v2230
  %2232 = vmatmul.f32.gmra.mxu0 %v2208
  %v2233 = vpop.f32.mrf.mxu0
  %v2234 = vadd.f32 0.0, %v2233
  %2235 = vmatmul.f32.gmra.mxu0 %v2211
  %v2236 = vpop.f32.mrf.mxu0
  %v2237 = vadd.f32 0.0, %v2236
  %2238 = vdwg.mxu0
  %v2239 = vadd.f32 %v2196, %v2231
  %v2240 = vadd.f32 %v2197, %v2234
  %v2241 = vadd.f32 %v2198, %v2237
  %v2242 = vld [vmem:[#allocation2 + $0x6] sm:$0xff]
  %v2243 = vld [vmem:[#allocation2 + $0xe] sm:$0xff]
  %v2244 = vld [vmem:[#allocation2 + $0x16] sm:$0x7]
  %v2245 = vld [vmem:[%s5 + $0xa0] sm:$0xff]
  %v2246 = vld [vmem:[%s5 + $0xa8] sm:$0xff]
  %v2248 = vsel %vm1785, %v2242, 0
  %v2251 = vsel %vm1785, %v2243, 0
  %v2254 = vsel %vm1785, %v2244, 0
  %2256 = vmatpush.msra.mxu0 0.0
  %2257 = vmatpush.msra.mxu0 0.0
  %2258 = vmatpush.msra.mxu0 0.0
  %2259 = vmatpush.msra.mxu0 0.0
  %2260 = vmatpush.msra.mxu0 0.0
  %2261 = vmatpush.msra.mxu0 0.0
  %2262 = vmatpush.msra.mxu0 0.0
  %2263 = vmatpush.msra.mxu0 0.0
  %2264 = vmatpush.msra.mxu0 0.0
  %2265 = vmatpush.msra.mxu0 0.0
  %2266 = vmatpush.msra.mxu0 0.0
  %2267 = vmatpush.msra.mxu0 0.0
  %2268 = vmatpush.msra.mxu0 0.0
  %2269 = vmatpush.msra.mxu0 0.0
  %2270 = vmatpush.msra.mxu0 %v2246
  %2271 = vmatpush.msra.mxu0 %v2245
  %2272 = vmatmul.f32.gmra.mxu0 %v2248
  %v2273 = vpop.f32.mrf.mxu0
  %v2274 = vadd.f32 0.0, %v2273
  %2275 = vmatmul.f32.gmra.mxu0 %v2251
  %v2276 = vpop.f32.mrf.mxu0
  %v2277 = vadd.f32 0.0, %v2276
  %2278 = vmatmul.f32.gmra.mxu0 %v2254
  %v2279 = vpop.f32.mrf.mxu0
  %v2280 = vadd.f32 0.0, %v2279
  %2281 = vdwg.mxu0
  %v2282 = vadd.f32 %v2239, %v2274
  %v2283 = vadd.f32 %v2240, %v2277
  %v2284 = vadd.f32 %v2241, %v2280
  %v2285 = vld [vmem:[#allocation2 + $0x46] sm:$0xff]
  %v2286 = vld [vmem:[#allocation2 + $0x4e] sm:$0xff]
  %v2287 = vld [vmem:[#allocation2 + $0x56] sm:$0x7]
  %v2288 = vld [vmem:[%s5 + $0xb0] sm:$0xff]
  %v2289 = vld [vmem:[%s5 + $0xb8] sm:$0xff]
  %v2291 = vsel %vm1785, %v2285, 0
  %v2294 = vsel %vm1785, %v2286, 0
  %v2297 = vsel %vm1785, %v2287, 0
  %2299 = vmatpush.msra.mxu0 0.0
  %2300 = vmatpush.msra.mxu0 0.0
  %2301 = vmatpush.msra.mxu0 0.0
  %2302 = vmatpush.msra.mxu0 0.0
  %2303 = vmatpush.msra.mxu0 0.0
  %2304 = vmatpush.msra.mxu0 0.0
  %2305 = vmatpush.msra.mxu0 0.0
  %2306 = vmatpush.msra.mxu0 0.0
  %2307 = vmatpush.msra.mxu0 0.0
  %2308 = vmatpush.msra.mxu0 0.0
  %2309 = vmatpush.msra.mxu0 0.0
  %2310 = vmatpush.msra.mxu0 0.0
  %2311 = vmatpush.msra.mxu0 0.0
  %2312 = vmatpush.msra.mxu0 0.0
  %2313 = vmatpush.msra.mxu0 %v2289
  %2314 = vmatpush.msra.mxu0 %v2288
  %2315 = vmatmul.f32.gmra.mxu0 %v2291
  %v2316 = vpop.f32.mrf.mxu0
  %v2317 = vadd.f32 0.0, %v2316
  %2318 = vmatmul.f32.gmra.mxu0 %v2294
  %v2319 = vpop.f32.mrf.mxu0
  %v2320 = vadd.f32 0.0, %v2319
  %2321 = vmatmul.f32.gmra.mxu0 %v2297
  %v2322 = vpop.f32.mrf.mxu0
  %v2323 = vadd.f32 0.0, %v2322
  %2324 = vdwg.mxu0
  %v2325 = vadd.f32 %v2282, %v2317
  %v2326 = vadd.f32 %v2283, %v2320
  %v2327 = vadd.f32 %v2284, %v2323
  %v2328 = vld [vmem:[#allocation2 + $0x85] sm:$0xff]
  %v2329 = vld [vmem:[#allocation2 + $0x8d] sm:$0xff]
  %v2330 = vld [vmem:[#allocation2 + $0x95] sm:$0x7]
  %v2331 = vld [vmem:[%s5 + $0xc0] sm:$0xff]
  %v2332 = vld [vmem:[%s5 + $0xc8] sm:$0xff]
  %v2334 = vsel %vm1785, %v2328, 0
  %v2337 = vsel %vm1785, %v2329, 0
  %v2340 = vsel %vm1785, %v2330, 0
  %2342 = vmatpush.msra.mxu0 0.0
  %2343 = vmatpush.msra.mxu0 0.0
  %2344 = vmatpush.msra.mxu0 0.0
  %2345 = vmatpush.msra.mxu0 0.0
  %2346 = vmatpush.msra.mxu0 0.0
  %2347 = vmatpush.msra.mxu0 0.0
  %2348 = vmatpush.msra.mxu0 0.0
  %2349 = vmatpush.msra.mxu0 0.0
  %2350 = vmatpush.msra.mxu0 0.0
  %2351 = vmatpush.msra.mxu0 0.0
  %2352 = vmatpush.msra.mxu0 0.0
  %2353 = vmatpush.msra.mxu0 0.0
  %2354 = vmatpush.msra.mxu0 0.0
  %2355 = vmatpush.msra.mxu0 0.0
  %2356 = vmatpush.msra.mxu0 %v2332
  %2357 = vmatpush.msra.mxu0 %v2331
  %2358 = vmatmul.f32.gmra.mxu0 %v2334
  %v2359 = vpop.f32.mrf.mxu0
  %v2360 = vadd.f32 0.0, %v2359
  %2361 = vmatmul.f32.gmra.mxu0 %v2337
  %v2362 = vpop.f32.mrf.mxu0
  %v2363 = vadd.f32 0.0, %v2362
  %2364 = vmatmul.f32.gmra.mxu0 %v2340
  %v2365 = vpop.f32.mrf.mxu0
  %v2366 = vadd.f32 0.0, %v2365
  %2367 = vdwg.mxu0
  %v2368 = vadd.f32 %v2325, %v2360
  %v2369 = vadd.f32 %v2326, %v2363
  %v2370 = vadd.f32 %v2327, %v2366
  %v2371 = vld [vmem:[#allocation2 + $0xc5] sm:$0xff]
  %v2372 = vld [vmem:[#allocation2 + $0xcd] sm:$0xff]
  %v2373 = vld [vmem:[#allocation2 + $0xd5] sm:$0x7]
  %v2374 = vld [vmem:[%s5 + $0xd0] sm:$0xff]
  %v2375 = vld [vmem:[%s5 + $0xd8] sm:$0xff]
  %v2377 = vsel %vm1785, %v2371, 0
  %v2380 = vsel %vm1785, %v2372, 0
  %v2383 = vsel %vm1785, %v2373, 0
  %2385 = vmatpush.msra.mxu0 0.0
  %2386 = vmatpush.msra.mxu0 0.0
  %2387 = vmatpush.msra.mxu0 0.0
  %2388 = vmatpush.msra.mxu0 0.0
  %2389 = vmatpush.msra.mxu0 0.0
  %2390 = vmatpush.msra.mxu0 0.0
  %2391 = vmatpush.msra.mxu0 0.0
  %2392 = vmatpush.msra.mxu0 0.0
  %2393 = vmatpush.msra.mxu0 0.0
  %2394 = vmatpush.msra.mxu0 0.0
  %2395 = vmatpush.msra.mxu0 0.0
  %2396 = vmatpush.msra.mxu0 0.0
  %2397 = vmatpush.msra.mxu0 0.0
  %2398 = vmatpush.msra.mxu0 0.0
  %2399 = vmatpush.msra.mxu0 %v2375
  %2400 = vmatpush.msra.mxu0 %v2374
  %2401 = vmatmul.f32.gmra.mxu0 %v2377
  %v2402 = vpop.f32.mrf.mxu0
  %v2403 = vadd.f32 0.0, %v2402
  %2404 = vmatmul.f32.gmra.mxu0 %v2380
  %v2405 = vpop.f32.mrf.mxu0
  %v2406 = vadd.f32 0.0, %v2405
  %2407 = vmatmul.f32.gmra.mxu0 %v2383
  %v2408 = vpop.f32.mrf.mxu0
  %v2409 = vadd.f32 0.0, %v2408
  %2410 = vdwg.mxu0
  %v2411 = vadd.f32 %v2368, %v2403
  %v2412 = vadd.f32 %v2369, %v2406
  %v2413 = vadd.f32 %v2370, %v2409
  %v2414 = vld [vmem:[#allocation2 + $0x86] sm:$0xff]
  %v2415 = vld [vmem:[#allocation2 + $0x8e] sm:$0xff]
  %v2416 = vld [vmem:[#allocation2 + $0x96] sm:$0x7]
  %v2417 = vld [vmem:[%s5 + $0xe0] sm:$0xff]
  %v2418 = vld [vmem:[%s5 + $0xe8] sm:$0xff]
  %v2420 = vsel %vm1785, %v2414, 0
  %v2423 = vsel %vm1785, %v2415, 0
  %v2426 = vsel %vm1785, %v2416, 0
  %2428 = vmatpush.msra.mxu0 0.0
  %2429 = vmatpush.msra.mxu0 0.0
  %2430 = vmatpush.msra.mxu0 0.0
  %2431 = vmatpush.msra.mxu0 0.0
  %2432 = vmatpush.msra.mxu0 0.0
  %2433 = vmatpush.msra.mxu0 0.0
  %2434 = vmatpush.msra.mxu0 0.0
  %2435 = vmatpush.msra.mxu0 0.0
  %2436 = vmatpush.msra.mxu0 0.0
  %2437 = vmatpush.msra.mxu0 0.0
  %2438 = vmatpush.msra.mxu0 0.0
  %2439 = vmatpush.msra.mxu0 0.0
  %2440 = vmatpush.msra.mxu0 0.0
  %2441 = vmatpush.msra.mxu0 0.0
  %2442 = vmatpush.msra.mxu0 %v2418
  %2443 = vmatpush.msra.mxu0 %v2417
  %2444 = vmatmul.f32.gmra.mxu0 %v2420
  %v2445 = vpop.f32.mrf.mxu0
  %v2446 = vadd.f32 0.0, %v2445
  %2447 = vmatmul.f32.gmra.mxu0 %v2423
  %v2448 = vpop.f32.mrf.mxu0
  %v2449 = vadd.f32 0.0, %v2448
  %2450 = vmatmul.f32.gmra.mxu0 %v2426
  %v2451 = vpop.f32.mrf.mxu0
  %v2452 = vadd.f32 0.0, %v2451
  %2453 = vdwg.mxu0
  %v2454 = vadd.f32 %v2411, %v2446
  %v2455 = vadd.f32 %v2412, %v2449
  %v2456 = vadd.f32 %v2413, %v2452
  %v2457 = vld [vmem:[#allocation2 + $0xc6] sm:$0xff]
  %v2458 = vld [vmem:[#allocation2 + $0xce] sm:$0xff]
  %v2459 = vld [vmem:[#allocation2 + $0xd6] sm:$0x7]
  %v2460 = vld [vmem:[%s5 + $0xf0] sm:$0xff]
  %v2461 = vld [vmem:[%s5 + $0xf8] sm:$0xff]
  %v2463 = vsel %vm1785, %v2457, 0
  %v2466 = vsel %vm1785, %v2458, 0
  %v2469 = vsel %vm1785, %v2459, 0
  %2471 = vmatpush.msra.mxu0 0.0
  %2472 = vmatpush.msra.mxu0 0.0
  %2473 = vmatpush.msra.mxu0 0.0
  %2474 = vmatpush.msra.mxu0 0.0
  %2475 = vmatpush.msra.mxu0 0.0
  %2476 = vmatpush.msra.mxu0 0.0
  %2477 = vmatpush.msra.mxu0 0.0
  %2478 = vmatpush.msra.mxu0 0.0
  %2479 = vmatpush.msra.mxu0 0.0
  %2480 = vmatpush.msra.mxu0 0.0
  %2481 = vmatpush.msra.mxu0 0.0
  %2482 = vmatpush.msra.mxu0 0.0
  %2483 = vmatpush.msra.mxu0 0.0
  %2484 = vmatpush.msra.mxu0 0.0
  %2485 = vmatpush.msra.mxu0 %v2461
  %2486 = vmatpush.msra.mxu0 %v2460
  %2487 = vmatmul.f32.gmra.mxu0 %v2463
  %v2488 = vpop.f32.mrf.mxu0
  %v2489 = vadd.f32 0.0, %v2488
  %2490 = vmatmul.f32.gmra.mxu0 %v2466
  %v2491 = vpop.f32.mrf.mxu0
  %v2492 = vadd.f32 0.0, %v2491
  %2493 = vmatmul.f32.gmra.mxu0 %v2469
  %v2494 = vpop.f32.mrf.mxu0
  %v2495 = vadd.f32 0.0, %v2494
  %2496 = vdwg.mxu0
  %v2497 = vadd.f32 %v2454, %v2489
  %v2498 = vadd.f32 %v2455, %v2492
  %v2499 = vadd.f32 %v2456, %v2495
  %v2500 = vld [vmem:[%s6] sm:$0x1]
  %v2502 = vperm.slane %v2500, 0
  %v2504 = vadd.f32 %v2497, %v2502
  %v2505 = vadd.f32 %v2498, %v2502
  %v2506 = vadd.f32 %v2499, %v2502
  %v2507 = vmax.f32 %v2504, 0.0
  %v2508 = vmax.f32 %v2505, 0.0
  %v2509 = vmax.f32 %v2506, 0.0
  %v2510 = vld [vmem:[#allocation2 + $0x20] sm:$0xff]
  %v2511 = vld [vmem:[#allocation2 + $0x28] sm:$0xff]
  %v2512 = vld [vmem:[#allocation2 + $0x30] sm:$0x7]
  %v2513 = vld [vmem:[#allocation2 + $0x60] sm:$0xff]
  %v2514 = vld [vmem:[#allocation2 + $0x68] sm:$0xff]
  %v2515 = vld [vmem:[#allocation2 + $0x70] sm:$0x7]
  %v2517 = vsel %vm1785, %v2513, 0
  %v2520 = vsel %vm1785, %v2514, 0
  %v2523 = vsel %vm1785, %v2515, 0
  %2525 = vmatpush.msra.mxu0 0.0
  %2526 = vmatpush.msra.mxu0 0.0
  %2527 = vmatpush.msra.mxu0 0.0
  %2528 = vmatpush.msra.mxu0 0.0
  %2529 = vmatpush.msra.mxu0 0.0
  %2530 = vmatpush.msra.mxu0 0.0
  %2531 = vmatpush.msra.mxu0 0.0
  %2532 = vmatpush.msra.mxu0 0.0
  %2533 = vmatpush.msra.mxu0 0.0
  %2534 = vmatpush.msra.mxu0 0.0
  %2535 = vmatpush.msra.mxu0 0.0
  %2536 = vmatpush.msra.mxu0 0.0
  %2537 = vmatpush.msra.mxu0 0.0
  %2538 = vmatpush.msra.mxu0 0.0
  %2539 = vmatpush.msra.mxu0 %v1827
  %2540 = vmatpush.msra.mxu0 %v1826
  %2541 = vmatmul.f32.gmra.mxu0 %v2517
  %v2542 = vpop.f32.mrf.mxu0
  %v2543 = vadd.f32 0.0, %v2542
  %2544 = vmatmul.f32.gmra.mxu0 %v2520
  %v2545 = vpop.f32.mrf.mxu0
  %v2546 = vadd.f32 0.0, %v2545
  %2547 = vmatmul.f32.gmra.mxu0 %v2523
  %v2548 = vpop.f32.mrf.mxu0
  %v2549 = vadd.f32 0.0, %v2548
  %2550 = vdwg.mxu0
  %v2552 = vsel %vm1785, %v2510, 0
  %v2555 = vsel %vm1785, %v2511, 0
  %v2558 = vsel %vm1785, %v2512, 0
  %2560 = vmatpush.msra.mxu0 0.0
  %2561 = vmatpush.msra.mxu0 0.0
  %2562 = vmatpush.msra.mxu0 0.0
  %2563 = vmatpush.msra.mxu0 0.0
  %2564 = vmatpush.msra.mxu0 0.0
  %2565 = vmatpush.msra.mxu0 0.0
  %2566 = vmatpush.msra.mxu0 0.0
  %2567 = vmatpush.msra.mxu0 0.0
  %2568 = vmatpush.msra.mxu0 0.0
  %2569 = vmatpush.msra.mxu0 0.0
  %2570 = vmatpush.msra.mxu0 0.0
  %2571 = vmatpush.msra.mxu0 0.0
  %2572 = vmatpush.msra.mxu0 0.0
  %2573 = vmatpush.msra.mxu0 0.0
  %2574 = vmatpush.msra.mxu0 %v1822
  %2575 = vmatpush.msra.mxu0 %v1821
  %2576 = vmatmul.f32.gmra.mxu0 %v2552
  %v2577 = vpop.f32.mrf.mxu0
  %v2578 = vadd.f32 %v2543, %v2577
  %2579 = vmatmul.f32.gmra.mxu0 %v2555
  %v2580 = vpop.f32.mrf.mxu0
  %v2581 = vadd.f32 %v2546, %v2580
  %2582 = vmatmul.f32.gmra.mxu0 %v2558
  %v2583 = vpop.f32.mrf.mxu0
  %v2584 = vadd.f32 %v2549, %v2583
  %2585 = vdwg.mxu0
  %v2586 = vld [vmem:[#allocation2 + $0x21] sm:$0xff]
  %v2587 = vld [vmem:[#allocation2 + $0x29] sm:$0xff]
  %v2588 = vld [vmem:[#allocation2 + $0x31] sm:$0x7]
  %v2590 = vsel %vm1785, %v2586, 0
  %v2593 = vsel %vm1785, %v2587, 0
  %v2596 = vsel %vm1785, %v2588, 0
  %2598 = vmatpush.msra.mxu0 0.0
  %2599 = vmatpush.msra.mxu0 0.0
  %2600 = vmatpush.msra.mxu0 0.0
  %2601 = vmatpush.msra.mxu0 0.0
  %2602 = vmatpush.msra.mxu0 0.0
  %2603 = vmatpush.msra.mxu0 0.0
  %2604 = vmatpush.msra.mxu0 0.0
  %2605 = vmatpush.msra.mxu0 0.0
  %2606 = vmatpush.msra.mxu0 0.0
  %2607 = vmatpush.msra.mxu0 0.0
  %2608 = vmatpush.msra.mxu0 0.0
  %2609 = vmatpush.msra.mxu0 0.0
  %2610 = vmatpush.msra.mxu0 0.0
  %2611 = vmatpush.msra.mxu0 0.0
  %2612 = vmatpush.msra.mxu0 %v1902
  %2613 = vmatpush.msra.mxu0 %v1901
  %2614 = vmatmul.f32.gmra.mxu0 %v2590
  %v2615 = vpop.f32.mrf.mxu0
  %v2616 = vadd.f32 0.0, %v2615
  %2617 = vmatmul.f32.gmra.mxu0 %v2593
  %v2618 = vpop.f32.mrf.mxu0
  %v2619 = vadd.f32 0.0, %v2618
  %2620 = vmatmul.f32.gmra.mxu0 %v2596
  %v2621 = vpop.f32.mrf.mxu0
  %v2622 = vadd.f32 0.0, %v2621
  %2623 = vdwg.mxu0
  %v2624 = vadd.f32 %v2578, %v2616
  %v2625 = vadd.f32 %v2581, %v2619
  %v2626 = vadd.f32 %v2584, %v2622
  %v2627 = vld [vmem:[#allocation2 + $0x61] sm:$0xff]
  %v2628 = vld [vmem:[#allocation2 + $0x69] sm:$0xff]
  %v2629 = vld [vmem:[#allocation2 + $0x71] sm:$0x7]
  %v2631 = vsel %vm1785, %v2627, 0
  %v2634 = vsel %vm1785, %v2628, 0
  %v2637 = vsel %vm1785, %v2629, 0
  %2639 = vmatpush.msra.mxu0 0.0
  %2640 = vmatpush.msra.mxu0 0.0
  %2641 = vmatpush.msra.mxu0 0.0
  %2642 = vmatpush.msra.mxu0 0.0
  %2643 = vmatpush.msra.mxu0 0.0
  %2644 = vmatpush.msra.mxu0 0.0
  %2645 = vmatpush.msra.mxu0 0.0
  %2646 = vmatpush.msra.mxu0 0.0
  %2647 = vmatpush.msra.mxu0 0.0
  %2648 = vmatpush.msra.mxu0 0.0
  %2649 = vmatpush.msra.mxu0 0.0
  %2650 = vmatpush.msra.mxu0 0.0
  %2651 = vmatpush.msra.mxu0 0.0
  %2652 = vmatpush.msra.mxu0 0.0
  %2653 = vmatpush.msra.mxu0 %v1945
  %2654 = vmatpush.msra.mxu0 %v1944
  %2655 = vmatmul.f32.gmra.mxu0 %v2631
  %v2656 = vpop.f32.mrf.mxu0
  %v2657 = vadd.f32 0.0, %v2656
  %2658 = vmatmul.f32.gmra.mxu0 %v2634
  %v2659 = vpop.f32.mrf.mxu0
  %v2660 = vadd.f32 0.0, %v2659
  %2661 = vmatmul.f32.gmra.mxu0 %v2637
  %v2662 = vpop.f32.mrf.mxu0
  %v2663 = vadd.f32 0.0, %v2662
  %2664 = vdwg.mxu0
  %v2665 = vadd.f32 %v2624, %v2657
  %v2666 = vadd.f32 %v2625, %v2660
  %v2667 = vadd.f32 %v2626, %v2663
  %v2668 = vld [vmem:[#allocation2 + $0xa0] sm:$0xff]
  %v2669 = vld [vmem:[#allocation2 + $0xa8] sm:$0xff]
  %v2670 = vld [vmem:[#allocation2 + $0xb0] sm:$0x7]
  %v2672 = vsel %vm1785, %v2668, 0
  %v2675 = vsel %vm1785, %v2669, 0
  %v2678 = vsel %vm1785, %v2670, 0
  %2680 = vmatpush.msra.mxu0 0.0
  %2681 = vmatpush.msra.mxu0 0.0
  %2682 = vmatpush.msra.mxu0 0.0
  %2683 = vmatpush.msra.mxu0 0.0
  %2684 = vmatpush.msra.mxu0 0.0
  %2685 = vmatpush.msra.mxu0 0.0
  %2686 = vmatpush.msra.mxu0 0.0
  %2687 = vmatpush.msra.mxu0 0.0
  %2688 = vmatpush.msra.mxu0 0.0
  %2689 = vmatpush.msra.mxu0 0.0
  %2690 = vmatpush.msra.mxu0 0.0
  %2691 = vmatpush.msra.mxu0 0.0
  %2692 = vmatpush.msra.mxu0 0.0
  %2693 = vmatpush.msra.mxu0 0.0
  %2694 = vmatpush.msra.mxu0 %v1988
  %2695 = vmatpush.msra.mxu0 %v1987
  %2696 = vmatmul.f32.gmra.mxu0 %v2672
  %v2697 = vpop.f32.mrf.mxu0
  %v2698 = vadd.f32 0.0, %v2697
  %2699 = vmatmul.f32.gmra.mxu0 %v2675
  %v2700 = vpop.f32.mrf.mxu0
  %v2701 = vadd.f32 0.0, %v2700
  %2702 = vmatmul.f32.gmra.mxu0 %v2678
  %v2703 = vpop.f32.mrf.mxu0
  %v2704 = vadd.f32 0.0, %v2703
  %2705 = vdwg.mxu0
  %v2706 = vadd.f32 %v2665, %v2698
  %v2707 = vadd.f32 %v2666, %v2701
  %v2708 = vadd.f32 %v2667, %v2704
  %v2709 = vld [vmem:[#allocation2 + $0xe0] sm:$0xff]
  %v2710 = vld [vmem:[#allocation2 + $0xe8] sm:$0xff]
  %v2711 = vld [vmem:[#allocation2 + $0xf0] sm:$0x7]
  %v2713 = vsel %vm1785, %v2709, 0
  %v2716 = vsel %vm1785, %v2710, 0
  %v2719 = vsel %vm1785, %v2711, 0
  %2721 = vmatpush.msra.mxu0 0.0
  %2722 = vmatpush.msra.mxu0 0.0
  %2723 = vmatpush.msra.mxu0 0.0
  %2724 = vmatpush.msra.mxu0 0.0
  %2725 = vmatpush.msra.mxu0 0.0
  %2726 = vmatpush.msra.mxu0 0.0
  %2727 = vmatpush.msra.mxu0 0.0
  %2728 = vmatpush.msra.mxu0 0.0
  %2729 = vmatpush.msra.mxu0 0.0
  %2730 = vmatpush.msra.mxu0 0.0
  %2731 = vmatpush.msra.mxu0 0.0
  %2732 = vmatpush.msra.mxu0 0.0
  %2733 = vmatpush.msra.mxu0 0.0
  %2734 = vmatpush.msra.mxu0 0.0
  %2735 = vmatpush.msra.mxu0 %v2031
  %2736 = vmatpush.msra.mxu0 %v2030
  %2737 = vmatmul.f32.gmra.mxu0 %v2713
  %v2738 = vpop.f32.mrf.mxu0
  %v2739 = vadd.f32 0.0, %v2738
  %2740 = vmatmul.f32.gmra.mxu0 %v2716
  %v2741 = vpop.f32.mrf.mxu0
  %v2742 = vadd.f32 0.0, %v2741
  %2743 = vmatmul.f32.gmra.mxu0 %v2719
  %v2744 = vpop.f32.mrf.mxu0
  %v2745 = vadd.f32 0.0, %v2744
  %2746 = vdwg.mxu0
  %v2747 = vadd.f32 %v2706, %v2739
  %v2748 = vadd.f32 %v2707, %v2742
  %v2749 = vadd.f32 %v2708, %v2745
  %v2750 = vld [vmem:[#allocation2 + $0xa1] sm:$0xff]
  %v2751 = vld [vmem:[#allocation2 + $0xa9] sm:$0xff]
  %v2752 = vld [vmem:[#allocation2 + $0xb1] sm:$0x7]
  %v2754 = vsel %vm1785, %v2750, 0
  %v2757 = vsel %vm1785, %v2751, 0
  %v2760 = vsel %vm1785, %v2752, 0
  %2762 = vmatpush.msra.mxu0 0.0
  %2763 = vmatpush.msra.mxu0 0.0
  %2764 = vmatpush.msra.mxu0 0.0
  %2765 = vmatpush.msra.mxu0 0.0
  %2766 = vmatpush.msra.mxu0 0.0
  %2767 = vmatpush.msra.mxu0 0.0
  %2768 = vmatpush.msra.mxu0 0.0
  %2769 = vmatpush.msra.mxu0 0.0
  %2770 = vmatpush.msra.mxu0 0.0
  %2771 = vmatpush.msra.mxu0 0.0
  %2772 = vmatpush.msra.mxu0 0.0
  %2773 = vmatpush.msra.mxu0 0.0
  %2774 = vmatpush.msra.mxu0 0.0
  %2775 = vmatpush.msra.mxu0 0.0
  %2776 = vmatpush.msra.mxu0 %v2074
  %2777 = vmatpush.msra.mxu0 %v2073
  %2778 = vmatmul.f32.gmra.mxu0 %v2754
  %v2779 = vpop.f32.mrf.mxu0
  %v2780 = vadd.f32 0.0, %v2779
  %2781 = vmatmul.f32.gmra.mxu0 %v2757
  %v2782 = vpop.f32.mrf.mxu0
  %v2783 = vadd.f32 0.0, %v2782
  %2784 = vmatmul.f32.gmra.mxu0 %v2760
  %v2785 = vpop.f32.mrf.mxu0
  %v2786 = vadd.f32 0.0, %v2785
  %2787 = vdwg.mxu0
  %v2788 = vadd.f32 %v2747, %v2780
  %v2789 = vadd.f32 %v2748, %v2783
  %v2790 = vadd.f32 %v2749, %v2786
  %v2791 = vld [vmem:[#allocation2 + $0xe1] sm:$0xff]
  %v2792 = vld [vmem:[#allocation2 + $0xe9] sm:$0xff]
  %v2793 = vld [vmem:[#allocation2 + $0xf1] sm:$0x7]
  %v2795 = vsel %vm1785, %v2791, 0
  %v2798 = vsel %vm1785, %v2792, 0
  %v2801 = vsel %vm1785, %v2793, 0
  %2803 = vmatpush.msra.mxu0 0.0
  %2804 = vmatpush.msra.mxu0 0.0
  %2805 = vmatpush.msra.mxu0 0.0
  %2806 = vmatpush.msra.mxu0 0.0
  %2807 = vmatpush.msra.mxu0 0.0
  %2808 = vmatpush.msra.mxu0 0.0
  %2809 = vmatpush.msra.mxu0 0.0
  %2810 = vmatpush.msra.mxu0 0.0
  %2811 = vmatpush.msra.mxu0 0.0
  %2812 = vmatpush.msra.mxu0 0.0
  %2813 = vmatpush.msra.mxu0 0.0
  %2814 = vmatpush.msra.mxu0 0.0
  %2815 = vmatpush.msra.mxu0 0.0
  %2816 = vmatpush.msra.mxu0 0.0
  %2817 = vmatpush.msra.mxu0 %v2117
  %2818 = vmatpush.msra.mxu0 %v2116
  %2819 = vmatmul.f32.gmra.mxu0 %v2795
  %v2820 = vpop.f32.mrf.mxu0
  %v2821 = vadd.f32 0.0, %v2820
  %2822 = vmatmul.f32.gmra.mxu0 %v2798
  %v2823 = vpop.f32.mrf.mxu0
  %v2824 = vadd.f32 0.0, %v2823
  %2825 = vmatmul.f32.gmra.mxu0 %v2801
  %v2826 = vpop.f32.mrf.mxu0
  %v2827 = vadd.f32 0.0, %v2826
  %2828 = vdwg.mxu0
  %v2829 = vadd.f32 %v2788, %v2821
  %v2830 = vadd.f32 %v2789, %v2824
  %v2831 = vadd.f32 %v2790, %v2827
  %v2832 = vld [vmem:[#allocation2 + $0x25] sm:$0xff]
  %v2833 = vld [vmem:[#allocation2 + $0x2d] sm:$0xff]
  %v2834 = vld [vmem:[#allocation2 + $0x35] sm:$0x7]
  %v2836 = vsel %vm1785, %v2832, 0
  %v2839 = vsel %vm1785, %v2833, 0
  %v2842 = vsel %vm1785, %v2834, 0
  %2844 = vmatpush.msra.mxu0 0.0
  %2845 = vmatpush.msra.mxu0 0.0
  %2846 = vmatpush.msra.mxu0 0.0
  %2847 = vmatpush.msra.mxu0 0.0
  %2848 = vmatpush.msra.mxu0 0.0
  %2849 = vmatpush.msra.mxu0 0.0
  %2850 = vmatpush.msra.mxu0 0.0
  %2851 = vmatpush.msra.mxu0 0.0
  %2852 = vmatpush.msra.mxu0 0.0
  %2853 = vmatpush.msra.mxu0 0.0
  %2854 = vmatpush.msra.mxu0 0.0
  %2855 = vmatpush.msra.mxu0 0.0
  %2856 = vmatpush.msra.mxu0 0.0
  %2857 = vmatpush.msra.mxu0 0.0
  %2858 = vmatpush.msra.mxu0 %v2160
  %2859 = vmatpush.msra.mxu0 %v2159
  %2860 = vmatmul.f32.gmra.mxu0 %v2836
  %v2861 = vpop.f32.mrf.mxu0
  %v2862 = vadd.f32 0.0, %v2861
  %2863 = vmatmul.f32.gmra.mxu0 %v2839
  %v2864 = vpop.f32.mrf.mxu0
  %v2865 = vadd.f32 0.0, %v2864
  %2866 = vmatmul.f32.gmra.mxu0 %v2842
  %v2867 = vpop.f32.mrf.mxu0
  %v2868 = vadd.f32 0.0, %v2867
  %2869 = vdwg.mxu0
  %v2870 = vadd.f32 %v2829, %v2862
  %v2871 = vadd.f32 %v2830, %v2865
  %v2872 = vadd.f32 %v2831, %v2868
  %v2873 = vld [vmem:[#allocation2 + $0x65] sm:$0xff]
  %v2874 = vld [vmem:[#allocation2 + $0x6d] sm:$0xff]
  %v2875 = vld [vmem:[#allocation2 + $0x75] sm:$0x7]
  %v2877 = vsel %vm1785, %v2873, 0
  %v2880 = vsel %vm1785, %v2874, 0
  %v2883 = vsel %vm1785, %v2875, 0
  %2885 = vmatpush.msra.mxu0 0.0
  %2886 = vmatpush.msra.mxu0 0.0
  %2887 = vmatpush.msra.mxu0 0.0
  %2888 = vmatpush.msra.mxu0 0.0
  %2889 = vmatpush.msra.mxu0 0.0
  %2890 = vmatpush.msra.mxu0 0.0
  %2891 = vmatpush.msra.mxu0 0.0
  %2892 = vmatpush.msra.mxu0 0.0
  %2893 = vmatpush.msra.mxu0 0.0
  %2894 = vmatpush.msra.mxu0 0.0
  %2895 = vmatpush.msra.mxu0 0.0
  %2896 = vmatpush.msra.mxu0 0.0
  %2897 = vmatpush.msra.mxu0 0.0
  %2898 = vmatpush.msra.mxu0 0.0
  %2899 = vmatpush.msra.mxu0 %v2203
  %2900 = vmatpush.msra.mxu0 %v2202
  %2901 = vmatmul.f32.gmra.mxu0 %v2877
  %v2902 = vpop.f32.mrf.mxu0
  %v2903 = vadd.f32 0.0, %v2902
  %2904 = vmatmul.f32.gmra.mxu0 %v2880
  %v2905 = vpop.f32.mrf.mxu0
  %v2906 = vadd.f32 0.0, %v2905
  %2907 = vmatmul.f32.gmra.mxu0 %v2883
  %v2908 = vpop.f32.mrf.mxu0
  %v2909 = vadd.f32 0.0, %v2908
  %2910 = vdwg.mxu0
  %v2911 = vadd.f32 %v2870, %v2903
  %v2912 = vadd.f32 %v2871, %v2906
  %v2913 = vadd.f32 %v2872, %v2909
  %v2914 = vld [vmem:[#allocation2 + $0x26] sm:$0xff]
  %v2915 = vld [vmem:[#allocation2 + $0x2e] sm:$0xff]
  %v2916 = vld [vmem:[#allocation2 + $0x36] sm:$0x7]
  %v2918 = vsel %vm1785, %v2914, 0
  %v2921 = vsel %vm1785, %v2915, 0
  %v2924 = vsel %vm1785, %v2916, 0
  %2926 = vmatpush.msra.mxu0 0.0
  %2927 = vmatpush.msra.mxu0 0.0
  %2928 = vmatpush.msra.mxu0 0.0
  %2929 = vmatpush.msra.mxu0 0.0
  %2930 = vmatpush.msra.mxu0 0.0
  %2931 = vmatpush.msra.mxu0 0.0
  %2932 = vmatpush.msra.mxu0 0.0
  %2933 = vmatpush.msra.mxu0 0.0
  %2934 = vmatpush.msra.mxu0 0.0
  %2935 = vmatpush.msra.mxu0 0.0
  %2936 = vmatpush.msra.mxu0 0.0
  %2937 = vmatpush.msra.mxu0 0.0
  %2938 = vmatpush.msra.mxu0 0.0
  %2939 = vmatpush.msra.mxu0 0.0
  %2940 = vmatpush.msra.mxu0 %v2246
  %2941 = vmatpush.msra.mxu0 %v2245
  %2942 = vmatmul.f32.gmra.mxu0 %v2918
  %v2943 = vpop.f32.mrf.mxu0
  %v2944 = vadd.f32 0.0, %v2943
  %2945 = vmatmul.f32.gmra.mxu0 %v2921
  %v2946 = vpop.f32.mrf.mxu0
  %v2947 = vadd.f32 0.0, %v2946
  %2948 = vmatmul.f32.gmra.mxu0 %v2924
  %v2949 = vpop.f32.mrf.mxu0
  %v2950 = vadd.f32 0.0, %v2949
  %2951 = vdwg.mxu0
  %v2952 = vadd.f32 %v2911, %v2944
  %v2953 = vadd.f32 %v2912, %v2947
  %v2954 = vadd.f32 %v2913, %v2950
  %v2955 = vld [vmem:[#allocation2 + $0x66] sm:$0xff]
  %v2956 = vld [vmem:[#allocation2 + $0x6e] sm:$0xff]
  %v2957 = vld [vmem:[#allocation2 + $0x76] sm:$0x7]
  %v2959 = vsel %vm1785, %v2955, 0
  %v2962 = vsel %vm1785, %v2956, 0
  %v2965 = vsel %vm1785, %v2957, 0
  %2967 = vmatpush.msra.mxu0 0.0
  %2968 = vmatpush.msra.mxu0 0.0
  %2969 = vmatpush.msra.mxu0 0.0
  %2970 = vmatpush.msra.mxu0 0.0
  %2971 = vmatpush.msra.mxu0 0.0
  %2972 = vmatpush.msra.mxu0 0.0
  %2973 = vmatpush.msra.mxu0 0.0
  %2974 = vmatpush.msra.mxu0 0.0
  %2975 = vmatpush.msra.mxu0 0.0
  %2976 = vmatpush.msra.mxu0 0.0
  %2977 = vmatpush.msra.mxu0 0.0
  %2978 = vmatpush.msra.mxu0 0.0
  %2979 = vmatpush.msra.mxu0 0.0
  %2980 = vmatpush.msra.mxu0 0.0
  %2981 = vmatpush.msra.mxu0 %v2289
  %2982 = vmatpush.msra.mxu0 %v2288
  %2983 = vmatmul.f32.gmra.mxu0 %v2959
  %v2984 = vpop.f32.mrf.mxu0
  %v2985 = vadd.f32 0.0, %v2984
  %2986 = vmatmul.f32.gmra.mxu0 %v2962
  %v2987 = vpop.f32.mrf.mxu0
  %v2988 = vadd.f32 0.0, %v2987
  %2989 = vmatmul.f32.gmra.mxu0 %v2965
  %v2990 = vpop.f32.mrf.mxu0
  %v2991 = vadd.f32 0.0, %v2990
  %2992 = vdwg.mxu0
  %v2993 = vadd.f32 %v2952, %v2985
  %v2994 = vadd.f32 %v2953, %v2988
  %v2995 = vadd.f32 %v2954, %v2991
  %v2996 = vld [vmem:[#allocation2 + $0xa5] sm:$0xff]
  %v2997 = vld [vmem:[#allocation2 + $0xad] sm:$0xff]
  %v2998 = vld [vmem:[#allocation2 + $0xb5] sm:$0x7]
  %v3000 = vsel %vm1785, %v2996, 0
  %v3003 = vsel %vm1785, %v2997, 0
  %v3006 = vsel %vm1785, %v2998, 0
  %3008 = vmatpush.msra.mxu0 0.0
  %3009 = vmatpush.msra.mxu0 0.0
  %3010 = vmatpush.msra.mxu0 0.0
  %3011 = vmatpush.msra.mxu0 0.0
  %3012 = vmatpush.msra.mxu0 0.0
  %3013 = vmatpush.msra.mxu0 0.0
  %3014 = vmatpush.msra.mxu0 0.0
  %3015 = vmatpush.msra.mxu0 0.0
  %3016 = vmatpush.msra.mxu0 0.0
  %3017 = vmatpush.msra.mxu0 0.0
  %3018 = vmatpush.msra.mxu0 0.0
  %3019 = vmatpush.msra.mxu0 0.0
  %3020 = vmatpush.msra.mxu0 0.0
  %3021 = vmatpush.msra.mxu0 0.0
  %3022 = vmatpush.msra.mxu0 %v2332
  %3023 = vmatpush.msra.mxu0 %v2331
  %3024 = vmatmul.f32.gmra.mxu0 %v3000
  %v3025 = vpop.f32.mrf.mxu0
  %v3026 = vadd.f32 0.0, %v3025
  %3027 = vmatmul.f32.gmra.mxu0 %v3003
  %v3028 = vpop.f32.mrf.mxu0
  %v3029 = vadd.f32 0.0, %v3028
  %3030 = vmatmul.f32.gmra.mxu0 %v3006
  %v3031 = vpop.f32.mrf.mxu0
  %v3032 = vadd.f32 0.0, %v3031
  %3033 = vdwg.mxu0
  %v3034 = vadd.f32 %v2993, %v3026
  %v3035 = vadd.f32 %v2994, %v3029
  %v3036 = vadd.f32 %v2995, %v3032
  %v3037 = vld [vmem:[#allocation2 + $0xe5] sm:$0xff]
  %v3038 = vld [vmem:[#allocation2 + $0xed] sm:$0xff]
  %v3039 = vld [vmem:[#allocation2 + $0xf5] sm:$0x7]
  %v3041 = vsel %vm1785, %v3037, 0
  %v3044 = vsel %vm1785, %v3038, 0
  %v3047 = vsel %vm1785, %v3039, 0
  %3049 = vmatpush.msra.mxu0 0.0
  %3050 = vmatpush.msra.mxu0 0.0
  %3051 = vmatpush.msra.mxu0 0.0
  %3052 = vmatpush.msra.mxu0 0.0
  %3053 = vmatpush.msra.mxu0 0.0
  %3054 = vmatpush.msra.mxu0 0.0
  %3055 = vmatpush.msra.mxu0 0.0
  %3056 = vmatpush.msra.mxu0 0.0
  %3057 = vmatpush.msra.mxu0 0.0
  %3058 = vmatpush.msra.mxu0 0.0
  %3059 = vmatpush.msra.mxu0 0.0
  %3060 = vmatpush.msra.mxu0 0.0
  %3061 = vmatpush.msra.mxu0 0.0
  %3062 = vmatpush.msra.mxu0 0.0
  %3063 = vmatpush.msra.mxu0 %v2375
  %3064 = vmatpush.msra.mxu0 %v2374
  %3065 = vmatmul.f32.gmra.mxu0 %v3041
  %v3066 = vpop.f32.mrf.mxu0
  %v3067 = vadd.f32 0.0, %v3066
  %3068 = vmatmul.f32.gmra.mxu0 %v3044
  %v3069 = vpop.f32.mrf.mxu0
  %v3070 = vadd.f32 0.0, %v3069
  %3071 = vmatmul.f32.gmra.mxu0 %v3047
  %v3072 = vpop.f32.mrf.mxu0
  %v3073 = vadd.f32 0.0, %v3072
  %3074 = vdwg.mxu0
  %v3075 = vadd.f32 %v3034, %v3067
  %v3076 = vadd.f32 %v3035, %v3070
  %v3077 = vadd.f32 %v3036, %v3073
  %v3078 = vld [vmem:[#allocation2 + $0xa6] sm:$0xff]
  %v3079 = vld [vmem:[#allocation2 + $0xae] sm:$0xff]
  %v3080 = vld [vmem:[#allocation2 + $0xb6] sm:$0x7]
  %v3082 = vsel %vm1785, %v3078, 0
  %v3085 = vsel %vm1785, %v3079, 0
  %v3088 = vsel %vm1785, %v3080, 0
  %3090 = vmatpush.msra.mxu0 0.0
  %3091 = vmatpush.msra.mxu0 0.0
  %3092 = vmatpush.msra.mxu0 0.0
  %3093 = vmatpush.msra.mxu0 0.0
  %3094 = vmatpush.msra.mxu0 0.0
  %3095 = vmatpush.msra.mxu0 0.0
  %3096 = vmatpush.msra.mxu0 0.0
  %3097 = vmatpush.msra.mxu0 0.0
  %3098 = vmatpush.msra.mxu0 0.0
  %3099 = vmatpush.msra.mxu0 0.0
  %3100 = vmatpush.msra.mxu0 0.0
  %3101 = vmatpush.msra.mxu0 0.0
  %3102 = vmatpush.msra.mxu0 0.0
  %3103 = vmatpush.msra.mxu0 0.0
  %3104 = vmatpush.msra.mxu0 %v2418
  %3105 = vmatpush.msra.mxu0 %v2417
  %3106 = vmatmul.f32.gmra.mxu0 %v3082
  %v3107 = vpop.f32.mrf.mxu0
  %v3108 = vadd.f32 0.0, %v3107
  %3109 = vmatmul.f32.gmra.mxu0 %v3085
  %v3110 = vpop.f32.mrf.mxu0
  %v3111 = vadd.f32 0.0, %v3110
  %3112 = vmatmul.f32.gmra.mxu0 %v3088
  %v3113 = vpop.f32.mrf.mxu0
  %v3114 = vadd.f32 0.0, %v3113
  %3115 = vdwg.mxu0
  %v3116 = vadd.f32 %v3075, %v3108
  %v3117 = vadd.f32 %v3076, %v3111
  %v3118 = vadd.f32 %v3077, %v3114
  %v3119 = vld [vmem:[#allocation2 + $0xe6] sm:$0xff]
  %v3120 = vld [vmem:[#allocation2 + $0xee] sm:$0xff]
  %v3121 = vld [vmem:[#allocation2 + $0xf6] sm:$0x7]
  %v3123 = vsel %vm1785, %v3119, 0
  %v3126 = vsel %vm1785, %v3120, 0
  %v3129 = vsel %vm1785, %v3121, 0
  %3131 = vmatpush.msra.mxu0 0.0
  %3132 = vmatpush.msra.mxu0 0.0
  %3133 = vmatpush.msra.mxu0 0.0
  %3134 = vmatpush.msra.mxu0 0.0
  %3135 = vmatpush.msra.mxu0 0.0
  %3136 = vmatpush.msra.mxu0 0.0
  %3137 = vmatpush.msra.mxu0 0.0
  %3138 = vmatpush.msra.mxu0 0.0
  %3139 = vmatpush.msra.mxu0 0.0
  %3140 = vmatpush.msra.mxu0 0.0
  %3141 = vmatpush.msra.mxu0 0.0
  %3142 = vmatpush.msra.mxu0 0.0
  %3143 = vmatpush.msra.mxu0 0.0
  %3144 = vmatpush.msra.mxu0 0.0
  %3145 = vmatpush.msra.mxu0 %v2461
  %3146 = vmatpush.msra.mxu0 %v2460
  %3147 = vmatmul.f32.gmra.mxu0 %v3123
  %v3148 = vpop.f32.mrf.mxu0
  %v3149 = vadd.f32 0.0, %v3148
  %3150 = vmatmul.f32.gmra.mxu0 %v3126
  %v3151 = vpop.f32.mrf.mxu0
  %v3152 = vadd.f32 0.0, %v3151
  %3153 = vmatmul.f32.gmra.mxu0 %v3129
  %v3154 = vpop.f32.mrf.mxu0
  %v3155 = vadd.f32 0.0, %v3154
  %3156 = vdwg.mxu0
  %v3157 = vadd.f32 %v3116, %v3149
  %v3158 = vadd.f32 %v3117, %v3152
  %v3159 = vadd.f32 %v3118, %v3155
  %v3160 = vadd.f32 %v3157, %v2502
  %v3161 = vadd.f32 %v3158, %v2502
  %v3162 = vadd.f32 %v3159, %v2502
  %v3163 = vmax.f32 %v3160, 0.0
  %v3164 = vmax.f32 %v3161, 0.0
  %v3165 = vmax.f32 %v3162, 0.0
  %v3167 = vrot.slane %v3163, 7
  %vm3169 = vcmask 1040384
  %v3170 = vsel %vm3169, %v2507, %v3167
  %v3171 = vld [vmem:[%s7] sm:$0xff]
  %v3172 = vld [vmem:[%s7 + $0x8] sm:$0xff]
  %v3173 = vld [vmem:[%s7 + $0x10] sm:$0xff]
  %v3174 = vld [vmem:[%s7 + $0x18] sm:$0xff]
  %v3175 = vld [vmem:[%s7 + $0x20] sm:$0xff]
  %v3176 = vld [vmem:[%s7 + $0x28] sm:$0xff]
  %v3177 = vld [vmem:[%s7 + $0x30] sm:$0xff]
  %v3178 = vld [vmem:[%s7 + $0x38] sm:$0xff]
  %v3180 = vrot.slane %v2507, 1
  %v3182 = vsel %vm3169, %v3180, %v3163
  %v3183 = vld [vmem:[%s7 + $0x40] sm:$0xff]
  %v3184 = vld [vmem:[%s7 + $0x48] sm:$0xff]
  %v3185 = vld [vmem:[%s7 + $0x50] sm:$0xff]
  %v3186 = vld [vmem:[%s7 + $0x58] sm:$0xff]
  %v3187 = vld [vmem:[%s7 + $0x60] sm:$0xff]
  %v3188 = vld [vmem:[%s7 + $0x68] sm:$0xff]
  %v3189 = vld [vmem:[%s7 + $0x70] sm:$0xff]
  %v3190 = vld [vmem:[%s7 + $0x78] sm:$0xff]
  %vm3191 = vcmask 261120
  %v3193 = vsel %vm3191, %v3182, 0
  %3195 = vmatpush.msra.mxu0 0.0
  %3196 = vmatpush.msra.mxu0 0.0
  %3197 = vmatpush.msra.mxu0 0.0
  %3198 = vmatpush.msra.mxu0 0.0
  %3199 = vmatpush.msra.mxu0 0.0
  %3200 = vmatpush.msra.mxu0 0.0
  %3201 = vmatpush.msra.mxu0 0.0
  %3202 = vmatpush.msra.mxu0 0.0
  %3203 = vmatpush.msra.mxu0 0.0
  %3204 = vmatpush.msra.mxu0 0.0
  %3205 = vmatpush.msra.mxu0 0.0
  %3206 = vmatpush.msra.mxu0 0.0
  %3207 = vmatpush.msra.mxu0 %v3189
  %3208 = vmatpush.msra.mxu0 %v3187
  %3209 = vmatpush.msra.mxu0 %v3185
  %3210 = vmatpush.msra.mxu0 %v3183
  %3211 = vmatmul.f32.gmra.mxu0 %v3193
  %v3212 = vpop.f32.mrf.mxu0
  %v3213 = vadd.f32 0.0, %v3212
  %3214 = vdwg.mxu0
  %3215 = vmatpush.msra.mxu0 0.0
  %3216 = vmatpush.msra.mxu0 0.0
  %3217 = vmatpush.msra.mxu0 0.0
  %3218 = vmatpush.msra.mxu0 0.0
  %3219 = vmatpush.msra.mxu0 0.0
  %3220 = vmatpush.msra.mxu0 0.0
  %3221 = vmatpush.msra.mxu0 0.0
  %3222 = vmatpush.msra.mxu0 0.0
  %3223 = vmatpush.msra.mxu0 0.0
  %3224 = vmatpush.msra.mxu0 0.0
  %3225 = vmatpush.msra.mxu0 0.0
  %3226 = vmatpush.msra.mxu0 0.0
  %3227 = vmatpush.msra.mxu0 %v3190
  %3228 = vmatpush.msra.mxu0 %v3188
  %3229 = vmatpush.msra.mxu0 %v3186
  %3230 = vmatpush.msra.mxu0 %v3184
  %3231 = vmatmul.f32.gmra.mxu0 %v3193
  %v3232 = vpop.f32.mrf.mxu0
  %v3233 = vadd.f32 0.0, %v3232
  %3234 = vdwg.mxu0
  %v3236 = vsel %vm3191, %v3170, 0
  %3238 = vmatpush.msra.mxu0 0.0
  %3239 = vmatpush.msra.mxu0 0.0
  %3240 = vmatpush.msra.mxu0 0.0
  %3241 = vmatpush.msra.mxu0 0.0
  %3242 = vmatpush.msra.mxu0 0.0
  %3243 = vmatpush.msra.mxu0 0.0
  %3244 = vmatpush.msra.mxu0 0.0
  %3245 = vmatpush.msra.mxu0 0.0
  %3246 = vmatpush.msra.mxu0 0.0
  %3247 = vmatpush.msra.mxu0 0.0
  %3248 = vmatpush.msra.mxu0 0.0
  %3249 = vmatpush.msra.mxu0 0.0
  %3250 = vmatpush.msra.mxu0 %v3177
  %3251 = vmatpush.msra.mxu0 %v3175
  %3252 = vmatpush.msra.mxu0 %v3173
  %3253 = vmatpush.msra.mxu0 %v3171
  %3254 = vmatmul.f32.gmra.mxu0 %v3236
  %v3255 = vpop.f32.mrf.mxu0
  %v3256 = vadd.f32 %v3213, %v3255
  %3257 = vdwg.mxu0
  %3258 = vmatpush.msra.mxu0 0.0
  %3259 = vmatpush.msra.mxu0 0.0
  %3260 = vmatpush.msra.mxu0 0.0
  %3261 = vmatpush.msra.mxu0 0.0
  %3262 = vmatpush.msra.mxu0 0.0
  %3263 = vmatpush.msra.mxu0 0.0
  %3264 = vmatpush.msra.mxu0 0.0
  %3265 = vmatpush.msra.mxu0 0.0
  %3266 = vmatpush.msra.mxu0 0.0
  %3267 = vmatpush.msra.mxu0 0.0
  %3268 = vmatpush.msra.mxu0 0.0
  %3269 = vmatpush.msra.mxu0 0.0
  %3270 = vmatpush.msra.mxu0 %v3178
  %3271 = vmatpush.msra.mxu0 %v3176
  %3272 = vmatpush.msra.mxu0 %v3174
  %3273 = vmatpush.msra.mxu0 %v3172
  %3274 = vmatmul.f32.gmra.mxu0 %v3236
  %v3275 = vpop.f32.mrf.mxu0
  %v3276 = vadd.f32 %v3233, %v3275
  %3277 = vdwg.mxu0
  %v3278 = vrot.slane %v2507, 2
  %v3280 = vrot.slane %v3163, 1
  %v3282 = vsel %vm3169, %v3278, %v3280
  %v3283 = vld [vmem:[%s7 + $0x80] sm:$0xff]
  %v3284 = vld [vmem:[%s7 + $0x88] sm:$0xff]
  %v3285 = vld [vmem:[%s7 + $0x90] sm:$0xff]
  %v3286 = vld [vmem:[%s7 + $0x98] sm:$0xff]
  %v3287 = vld [vmem:[%s7 + $0xa0] sm:$0xff]
  %v3288 = vld [vmem:[%s7 + $0xa8] sm:$0xff]
  %v3289 = vld [vmem:[%s7 + $0xb0] sm:$0xff]
  %v3290 = vld [vmem:[%s7 + $0xb8] sm:$0xff]
  %v3292 = vsel %vm3191, %v3282, 0
  %3294 = vmatpush.msra.mxu0 0.0
  %3295 = vmatpush.msra.mxu0 0.0
  %3296 = vmatpush.msra.mxu0 0.0
  %3297 = vmatpush.msra.mxu0 0.0
  %3298 = vmatpush.msra.mxu0 0.0
  %3299 = vmatpush.msra.mxu0 0.0
  %3300 = vmatpush.msra.mxu0 0.0
  %3301 = vmatpush.msra.mxu0 0.0
  %3302 = vmatpush.msra.mxu0 0.0
  %3303 = vmatpush.msra.mxu0 0.0
  %3304 = vmatpush.msra.mxu0 0.0
  %3305 = vmatpush.msra.mxu0 0.0
  %3306 = vmatpush.msra.mxu0 %v3289
  %3307 = vmatpush.msra.mxu0 %v3287
  %3308 = vmatpush.msra.mxu0 %v3285
  %3309 = vmatpush.msra.mxu0 %v3283
  %3310 = vmatmul.f32.gmra.mxu0 %v3292
  %v3311 = vpop.f32.mrf.mxu0
  %v3312 = vadd.f32 0.0, %v3311
  %3313 = vdwg.mxu0
  %3314 = vmatpush.msra.mxu0 0.0
  %3315 = vmatpush.msra.mxu0 0.0
  %3316 = vmatpush.msra.mxu0 0.0
  %3317 = vmatpush.msra.mxu0 0.0
  %3318 = vmatpush.msra.mxu0 0.0
  %3319 = vmatpush.msra.mxu0 0.0
  %3320 = vmatpush.msra.mxu0 0.0
  %3321 = vmatpush.msra.mxu0 0.0
  %3322 = vmatpush.msra.mxu0 0.0
  %3323 = vmatpush.msra.mxu0 0.0
  %3324 = vmatpush.msra.mxu0 0.0
  %3325 = vmatpush.msra.mxu0 0.0
  %3326 = vmatpush.msra.mxu0 %v3290
  %3327 = vmatpush.msra.mxu0 %v3288
  %3328 = vmatpush.msra.mxu0 %v3286
  %3329 = vmatpush.msra.mxu0 %v3284
  %3330 = vmatmul.f32.gmra.mxu0 %v3292
  %v3331 = vpop.f32.mrf.mxu0
  %v3332 = vadd.f32 0.0, %v3331
  %3333 = vdwg.mxu0
  %v3334 = vadd.f32 %v3256, %v3312
  %v3335 = vadd.f32 %v3276, %v3332
  %v3336 = vrot.slane %v2507, 3
  %v3338 = vrot.slane %v3163, 2
  %v3340 = vsel %vm3169, %v3336, %v3338
  %v3341 = vld [vmem:[%s7 + $0xc0] sm:$0xff]
  %v3342 = vld [vmem:[%s7 + $0xc8] sm:$0xff]
  %v3343 = vld [vmem:[%s7 + $0xd0] sm:$0xff]
  %v3344 = vld [vmem:[%s7 + $0xd8] sm:$0xff]
  %v3345 = vld [vmem:[%s7 + $0xe0] sm:$0xff]
  %v3346 = vld [vmem:[%s7 + $0xe8] sm:$0xff]
  %v3347 = vld [vmem:[%s7 + $0xf0] sm:$0xff]
  %v3348 = vld [vmem:[%s7 + $0xf8] sm:$0xff]
  %v3350 = vsel %vm3191, %v3340, 0
  %3352 = vmatpush.msra.mxu0 0.0
  %3353 = vmatpush.msra.mxu0 0.0
  %3354 = vmatpush.msra.mxu0 0.0
  %3355 = vmatpush.msra.mxu0 0.0
  %3356 = vmatpush.msra.mxu0 0.0
  %3357 = vmatpush.msra.mxu0 0.0
  %3358 = vmatpush.msra.mxu0 0.0
  %3359 = vmatpush.msra.mxu0 0.0
  %3360 = vmatpush.msra.mxu0 0.0
  %3361 = vmatpush.msra.mxu0 0.0
  %3362 = vmatpush.msra.mxu0 0.0
  %3363 = vmatpush.msra.mxu0 0.0
  %3364 = vmatpush.msra.mxu0 %v3347
  %3365 = vmatpush.msra.mxu0 %v3345
  %3366 = vmatpush.msra.mxu0 %v3343
  %3367 = vmatpush.msra.mxu0 %v3341
  %3368 = vmatmul.f32.gmra.mxu0 %v3350
  %v3369 = vpop.f32.mrf.mxu0
  %v3370 = vadd.f32 0.0, %v3369
  %3371 = vdwg.mxu0
  %3372 = vmatpush.msra.mxu0 0.0
  %3373 = vmatpush.msra.mxu0 0.0
  %3374 = vmatpush.msra.mxu0 0.0
  %3375 = vmatpush.msra.mxu0 0.0
  %3376 = vmatpush.msra.mxu0 0.0
  %3377 = vmatpush.msra.mxu0 0.0
  %3378 = vmatpush.msra.mxu0 0.0
  %3379 = vmatpush.msra.mxu0 0.0
  %3380 = vmatpush.msra.mxu0 0.0
  %3381 = vmatpush.msra.mxu0 0.0
  %3382 = vmatpush.msra.mxu0 0.0
  %3383 = vmatpush.msra.mxu0 0.0
  %3384 = vmatpush.msra.mxu0 %v3348
  %3385 = vmatpush.msra.mxu0 %v3346
  %3386 = vmatpush.msra.mxu0 %v3344
  %3387 = vmatpush.msra.mxu0 %v3342
  %3388 = vmatmul.f32.gmra.mxu0 %v3350
  %v3389 = vpop.f32.mrf.mxu0
  %v3390 = vadd.f32 0.0, %v3389
  %3391 = vdwg.mxu0
  %v3392 = vadd.f32 %v3334, %v3370
  %v3393 = vadd.f32 %v3335, %v3390
  %v3394 = vrot.slane %v2507, 5
  %v3396 = vrot.slane %v3163, 4
  %v3398 = vsel %vm3169, %v3394, %v3396
  %v3399 = vld [vmem:[%s7 + $0x100] sm:$0xff]
  %v3400 = vld [vmem:[%s7 + $0x108] sm:$0xff]
  %v3401 = vld [vmem:[%s7 + $0x110] sm:$0xff]
  %v3402 = vld [vmem:[%s7 + $0x118] sm:$0xff]
  %v3403 = vld [vmem:[%s7 + $0x120] sm:$0xff]
  %v3404 = vld [vmem:[%s7 + $0x128] sm:$0xff]
  %v3405 = vld [vmem:[%s7 + $0x130] sm:$0xff]
  %v3406 = vld [vmem:[%s7 + $0x138] sm:$0xff]
  %v3408 = vsel %vm3191, %v3398, 0
  %3410 = vmatpush.msra.mxu0 0.0
  %3411 = vmatpush.msra.mxu0 0.0
  %3412 = vmatpush.msra.mxu0 0.0
  %3413 = vmatpush.msra.mxu0 0.0
  %3414 = vmatpush.msra.mxu0 0.0
  %3415 = vmatpush.msra.mxu0 0.0
  %3416 = vmatpush.msra.mxu0 0.0
  %3417 = vmatpush.msra.mxu0 0.0
  %3418 = vmatpush.msra.mxu0 0.0
  %3419 = vmatpush.msra.mxu0 0.0
  %3420 = vmatpush.msra.mxu0 0.0
  %3421 = vmatpush.msra.mxu0 0.0
  %3422 = vmatpush.msra.mxu0 %v3405
  %3423 = vmatpush.msra.mxu0 %v3403
  %3424 = vmatpush.msra.mxu0 %v3401
  %3425 = vmatpush.msra.mxu0 %v3399
  %3426 = vmatmul.f32.gmra.mxu0 %v3408
  %v3427 = vpop.f32.mrf.mxu0
  %v3428 = vadd.f32 0.0, %v3427
  %3429 = vdwg.mxu0
  %3430 = vmatpush.msra.mxu0 0.0
  %3431 = vmatpush.msra.mxu0 0.0
  %3432 = vmatpush.msra.mxu0 0.0
  %3433 = vmatpush.msra.mxu0 0.0
  %3434 = vmatpush.msra.mxu0 0.0
  %3435 = vmatpush.msra.mxu0 0.0
  %3436 = vmatpush.msra.mxu0 0.0
  %3437 = vmatpush.msra.mxu0 0.0
  %3438 = vmatpush.msra.mxu0 0.0
  %3439 = vmatpush.msra.mxu0 0.0
  %3440 = vmatpush.msra.mxu0 0.0
  %3441 = vmatpush.msra.mxu0 0.0
  %3442 = vmatpush.msra.mxu0 %v3406
  %3443 = vmatpush.msra.mxu0 %v3404
  %3444 = vmatpush.msra.mxu0 %v3402
  %3445 = vmatpush.msra.mxu0 %v3400
  %3446 = vmatmul.f32.gmra.mxu0 %v3408
  %v3447 = vpop.f32.mrf.mxu0
  %v3448 = vadd.f32 0.0, %v3447
  %3449 = vdwg.mxu0
  %v3450 = vadd.f32 %v3392, %v3428
  %v3451 = vadd.f32 %v3393, %v3448
  %v3452 = vrot.slane %v2507, 6
  %v3454 = vrot.slane %v3163, 5
  %v3456 = vsel %vm3169, %v3452, %v3454
  %v3457 = vld [vmem:[%s7 + $0x140] sm:$0xff]
  %v3458 = vld [vmem:[%s7 + $0x148] sm:$0xff]
  %v3459 = vld [vmem:[%s7 + $0x150] sm:$0xff]
  %v3460 = vld [vmem:[%s7 + $0x158] sm:$0xff]
  %v3461 = vld [vmem:[%s7 + $0x160] sm:$0xff]
  %v3462 = vld [vmem:[%s7 + $0x168] sm:$0xff]
  %v3463 = vld [vmem:[%s7 + $0x170] sm:$0xff]
  %v3464 = vld [vmem:[%s7 + $0x178] sm:$0xff]
  %v3466 = vsel %vm3191, %v3456, 0
  %3468 = vmatpush.msra.mxu0 0.0
  %3469 = vmatpush.msra.mxu0 0.0
  %3470 = vmatpush.msra.mxu0 0.0
  %3471 = vmatpush.msra.mxu0 0.0
  %3472 = vmatpush.msra.mxu0 0.0
  %3473 = vmatpush.msra.mxu0 0.0
  %3474 = vmatpush.msra.mxu0 0.0
  %3475 = vmatpush.msra.mxu0 0.0
  %3476 = vmatpush.msra.mxu0 0.0
  %3477 = vmatpush.msra.mxu0 0.0
  %3478 = vmatpush.msra.mxu0 0.0
  %3479 = vmatpush.msra.mxu0 0.0
  %3480 = vmatpush.msra.mxu0 %v3463
  %3481 = vmatpush.msra.mxu0 %v3461
  %3482 = vmatpush.msra.mxu0 %v3459
  %3483 = vmatpush.msra.mxu0 %v3457
  %3484 = vmatmul.f32.gmra.mxu0 %v3466
  %v3485 = vpop.f32.mrf.mxu0
  %v3486 = vadd.f32 0.0, %v3485
  %3487 = vdwg.mxu0
  %3488 = vmatpush.msra.mxu0 0.0
  %3489 = vmatpush.msra.mxu0 0.0
  %3490 = vmatpush.msra.mxu0 0.0
  %3491 = vmatpush.msra.mxu0 0.0
  %3492 = vmatpush.msra.mxu0 0.0
  %3493 = vmatpush.msra.mxu0 0.0
  %3494 = vmatpush.msra.mxu0 0.0
  %3495 = vmatpush.msra.mxu0 0.0
  %3496 = vmatpush.msra.mxu0 0.0
  %3497 = vmatpush.msra.mxu0 0.0
  %3498 = vmatpush.msra.mxu0 0.0
  %3499 = vmatpush.msra.mxu0 0.0
  %3500 = vmatpush.msra.mxu0 %v3464
  %3501 = vmatpush.msra.mxu0 %v3462
  %3502 = vmatpush.msra.mxu0 %v3460
  %3503 = vmatpush.msra.mxu0 %v3458
  %3504 = vmatmul.f32.gmra.mxu0 %v3466
  %v3505 = vpop.f32.mrf.mxu0
  %v3506 = vadd.f32 0.0, %v3505
  %3507 = vdwg.mxu0
  %v3508 = vadd.f32 %v3450, %v3486
  %v3509 = vadd.f32 %v3451, %v3506
  %v3510 = vrot.slane %v2507, 7
  %v3512 = vrot.slane %v3163, 6
  %v3514 = vsel %vm3169, %v3510, %v3512
  %v3515 = vld [vmem:[%s7 + $0x180] sm:$0xff]
  %v3516 = vld [vmem:[%s7 + $0x188] sm:$0xff]
  %v3517 = vld [vmem:[%s7 + $0x190] sm:$0xff]
  %v3518 = vld [vmem:[%s7 + $0x198] sm:$0xff]
  %v3519 = vld [vmem:[%s7 + $0x1a0] sm:$0xff]
  %v3520 = vld [vmem:[%s7 + $0x1a8] sm:$0xff]
  %v3521 = vld [vmem:[%s7 + $0x1b0] sm:$0xff]
  %v3522 = vld [vmem:[%s7 + $0x1b8] sm:$0xff]
  %v3524 = vsel %vm3191, %v3514, 0
  %3526 = vmatpush.msra.mxu0 0.0
  %3527 = vmatpush.msra.mxu0 0.0
  %3528 = vmatpush.msra.mxu0 0.0
  %3529 = vmatpush.msra.mxu0 0.0
  %3530 = vmatpush.msra.mxu0 0.0
  %3531 = vmatpush.msra.mxu0 0.0
  %3532 = vmatpush.msra.mxu0 0.0
  %3533 = vmatpush.msra.mxu0 0.0
  %3534 = vmatpush.msra.mxu0 0.0
  %3535 = vmatpush.msra.mxu0 0.0
  %3536 = vmatpush.msra.mxu0 0.0
  %3537 = vmatpush.msra.mxu0 0.0
  %3538 = vmatpush.msra.mxu0 %v3521
  %3539 = vmatpush.msra.mxu0 %v3519
  %3540 = vmatpush.msra.mxu0 %v3517
  %3541 = vmatpush.msra.mxu0 %v3515
  %3542 = vmatmul.f32.gmra.mxu0 %v3524
  %v3543 = vpop.f32.mrf.mxu0
  %v3544 = vadd.f32 0.0, %v3543
  %3545 = vdwg.mxu0
  %3546 = vmatpush.msra.mxu0 0.0
  %3547 = vmatpush.msra.mxu0 0.0
  %3548 = vmatpush.msra.mxu0 0.0
  %3549 = vmatpush.msra.mxu0 0.0
  %3550 = vmatpush.msra.mxu0 0.0
  %3551 = vmatpush.msra.mxu0 0.0
  %3552 = vmatpush.msra.mxu0 0.0
  %3553 = vmatpush.msra.mxu0 0.0
  %3554 = vmatpush.msra.mxu0 0.0
  %3555 = vmatpush.msra.mxu0 0.0
  %3556 = vmatpush.msra.mxu0 0.0
  %3557 = vmatpush.msra.mxu0 0.0
  %3558 = vmatpush.msra.mxu0 %v3522
  %3559 = vmatpush.msra.mxu0 %v3520
  %3560 = vmatpush.msra.mxu0 %v3518
  %3561 = vmatpush.msra.mxu0 %v3516
  %3562 = vmatmul.f32.gmra.mxu0 %v3524
  %v3563 = vpop.f32.mrf.mxu0
  %v3564 = vadd.f32 0.0, %v3563
  %3565 = vdwg.mxu0
  %v3566 = vadd.f32 %v3508, %v3544
  %v3567 = vadd.f32 %v3509, %v3564
  %v3569 = vrot.slane %v3164, 7
  %v3571 = vsel %vm3169, %v2508, %v3569
  %v3572 = vld [vmem:[%s7 + $0x1c0] sm:$0xff]
  %v3573 = vld [vmem:[%s7 + $0x1c8] sm:$0xff]
  %v3574 = vld [vmem:[%s7 + $0x1d0] sm:$0xff]
  %v3575 = vld [vmem:[%s7 + $0x1d8] sm:$0xff]
  %v3576 = vld [vmem:[%s7 + $0x1e0] sm:$0xff]
  %v3577 = vld [vmem:[%s7 + $0x1e8] sm:$0xff]
  %v3578 = vld [vmem:[%s7 + $0x1f0] sm:$0xff]
  %v3579 = vld [vmem:[%s7 + $0x1f8] sm:$0xff]
  %v3581 = vsel %vm3191, %v3571, 0
  %3583 = vmatpush.msra.mxu0 0.0
  %3584 = vmatpush.msra.mxu0 0.0
  %3585 = vmatpush.msra.mxu0 0.0
  %3586 = vmatpush.msra.mxu0 0.0
  %3587 = vmatpush.msra.mxu0 0.0
  %3588 = vmatpush.msra.mxu0 0.0
  %3589 = vmatpush.msra.mxu0 0.0
  %3590 = vmatpush.msra.mxu0 0.0
  %3591 = vmatpush.msra.mxu0 0.0
  %3592 = vmatpush.msra.mxu0 0.0
  %3593 = vmatpush.msra.mxu0 0.0
  %3594 = vmatpush.msra.mxu0 0.0
  %3595 = vmatpush.msra.mxu0 %v3578
  %3596 = vmatpush.msra.mxu0 %v3576
  %3597 = vmatpush.msra.mxu0 %v3574
  %3598 = vmatpush.msra.mxu0 %v3572
  %3599 = vmatmul.f32.gmra.mxu0 %v3581
  %v3600 = vpop.f32.mrf.mxu0
  %v3601 = vadd.f32 0.0, %v3600
  %3602 = vdwg.mxu0
  %3603 = vmatpush.msra.mxu0 0.0
  %3604 = vmatpush.msra.mxu0 0.0
  %3605 = vmatpush.msra.mxu0 0.0
  %3606 = vmatpush.msra.mxu0 0.0
  %3607 = vmatpush.msra.mxu0 0.0
  %3608 = vmatpush.msra.mxu0 0.0
  %3609 = vmatpush.msra.mxu0 0.0
  %3610 = vmatpush.msra.mxu0 0.0
  %3611 = vmatpush.msra.mxu0 0.0
  %3612 = vmatpush.msra.mxu0 0.0
  %3613 = vmatpush.msra.mxu0 0.0
  %3614 = vmatpush.msra.mxu0 0.0
  %3615 = vmatpush.msra.mxu0 %v3579
  %3616 = vmatpush.msra.mxu0 %v3577
  %3617 = vmatpush.msra.mxu0 %v3575
  %3618 = vmatpush.msra.mxu0 %v3573
  %3619 = vmatmul.f32.gmra.mxu0 %v3581
  %v3620 = vpop.f32.mrf.mxu0
  %v3621 = vadd.f32 0.0, %v3620
  %3622 = vdwg.mxu0
  %v3623 = vadd.f32 %v3566, %v3601
  %v3624 = vadd.f32 %v3567, %v3621
  %v3626 = vrot.slane %v2508, 2
  %v3628 = vrot.slane %v3164, 1
  %v3630 = vsel %vm3169, %v3626, %v3628
  %v3631 = vld [vmem:[%s7 + $0x200] sm:$0xff]
  %v3632 = vld [vmem:[%s7 + $0x208] sm:$0xff]
  %v3633 = vld [vmem:[%s7 + $0x210] sm:$0xff]
  %v3634 = vld [vmem:[%s7 + $0x218] sm:$0xff]
  %v3635 = vld [vmem:[%s7 + $0x220] sm:$0xff]
  %v3636 = vld [vmem:[%s7 + $0x228] sm:$0xff]
  %v3637 = vld [vmem:[%s7 + $0x230] sm:$0xff]
  %v3638 = vld [vmem:[%s7 + $0x238] sm:$0xff]
  %v3640 = vsel %vm3191, %v3630, 0
  %3642 = vmatpush.msra.mxu0 0.0
  %3643 = vmatpush.msra.mxu0 0.0
  %3644 = vmatpush.msra.mxu0 0.0
  %3645 = vmatpush.msra.mxu0 0.0
  %3646 = vmatpush.msra.mxu0 0.0
  %3647 = vmatpush.msra.mxu0 0.0
  %3648 = vmatpush.msra.mxu0 0.0
  %3649 = vmatpush.msra.mxu0 0.0
  %3650 = vmatpush.msra.mxu0 0.0
  %3651 = vmatpush.msra.mxu0 0.0
  %3652 = vmatpush.msra.mxu0 0.0
  %3653 = vmatpush.msra.mxu0 0.0
  %3654 = vmatpush.msra.mxu0 %v3637
  %3655 = vmatpush.msra.mxu0 %v3635
  %3656 = vmatpush.msra.mxu0 %v3633
  %3657 = vmatpush.msra.mxu0 %v3631
  %3658 = vmatmul.f32.gmra.mxu0 %v3640
  %v3659 = vpop.f32.mrf.mxu0
  %v3660 = vadd.f32 0.0, %v3659
  %3661 = vdwg.mxu0
  %3662 = vmatpush.msra.mxu0 0.0
  %3663 = vmatpush.msra.mxu0 0.0
  %3664 = vmatpush.msra.mxu0 0.0
  %3665 = vmatpush.msra.mxu0 0.0
  %3666 = vmatpush.msra.mxu0 0.0
  %3667 = vmatpush.msra.mxu0 0.0
  %3668 = vmatpush.msra.mxu0 0.0
  %3669 = vmatpush.msra.mxu0 0.0
  %3670 = vmatpush.msra.mxu0 0.0
  %3671 = vmatpush.msra.mxu0 0.0
  %3672 = vmatpush.msra.mxu0 0.0
  %3673 = vmatpush.msra.mxu0 0.0
  %3674 = vmatpush.msra.mxu0 %v3638
  %3675 = vmatpush.msra.mxu0 %v3636
  %3676 = vmatpush.msra.mxu0 %v3634
  %3677 = vmatpush.msra.mxu0 %v3632
  %3678 = vmatmul.f32.gmra.mxu0 %v3640
  %v3679 = vpop.f32.mrf.mxu0
  %v3680 = vadd.f32 0.0, %v3679
  %3681 = vdwg.mxu0
  %v3682 = vadd.f32 %v3623, %v3660
  %v3683 = vadd.f32 %v3624, %v3680
  %v3684 = vrot.slane %v2508, 3
  %v3686 = vrot.slane %v3164, 2
  %v3688 = vsel %vm3169, %v3684, %v3686
  %v3689 = vld [vmem:[%s7 + $0x240] sm:$0xff]
  %v3690 = vld [vmem:[%s7 + $0x248] sm:$0xff]
  %v3691 = vld [vmem:[%s7 + $0x250] sm:$0xff]
  %v3692 = vld [vmem:[%s7 + $0x258] sm:$0xff]
  %v3693 = vld [vmem:[%s7 + $0x260] sm:$0xff]
  %v3694 = vld [vmem:[%s7 + $0x268] sm:$0xff]
  %v3695 = vld [vmem:[%s7 + $0x270] sm:$0xff]
  %v3696 = vld [vmem:[%s7 + $0x278] sm:$0xff]
  %v3698 = vsel %vm3191, %v3688, 0
  %3700 = vmatpush.msra.mxu0 0.0
  %3701 = vmatpush.msra.mxu0 0.0
  %3702 = vmatpush.msra.mxu0 0.0
  %3703 = vmatpush.msra.mxu0 0.0
  %3704 = vmatpush.msra.mxu0 0.0
  %3705 = vmatpush.msra.mxu0 0.0
  %3706 = vmatpush.msra.mxu0 0.0
  %3707 = vmatpush.msra.mxu0 0.0
  %3708 = vmatpush.msra.mxu0 0.0
  %3709 = vmatpush.msra.mxu0 0.0
  %3710 = vmatpush.msra.mxu0 0.0
  %3711 = vmatpush.msra.mxu0 0.0
  %3712 = vmatpush.msra.mxu0 %v3695
  %3713 = vmatpush.msra.mxu0 %v3693
  %3714 = vmatpush.msra.mxu0 %v3691
  %3715 = vmatpush.msra.mxu0 %v3689
  %3716 = vmatmul.f32.gmra.mxu0 %v3698
  %v3717 = vpop.f32.mrf.mxu0
  %v3718 = vadd.f32 0.0, %v3717
  %3719 = vdwg.mxu0
  %3720 = vmatpush.msra.mxu0 0.0
  %3721 = vmatpush.msra.mxu0 0.0
  %3722 = vmatpush.msra.mxu0 0.0
  %3723 = vmatpush.msra.mxu0 0.0
  %3724 = vmatpush.msra.mxu0 0.0
  %3725 = vmatpush.msra.mxu0 0.0
  %3726 = vmatpush.msra.mxu0 0.0
  %3727 = vmatpush.msra.mxu0 0.0
  %3728 = vmatpush.msra.mxu0 0.0
  %3729 = vmatpush.msra.mxu0 0.0
  %3730 = vmatpush.msra.mxu0 0.0
  %3731 = vmatpush.msra.mxu0 0.0
  %3732 = vmatpush.msra.mxu0 %v3696
  %3733 = vmatpush.msra.mxu0 %v3694
  %3734 = vmatpush.msra.mxu0 %v3692
  %3735 = vmatpush.msra.mxu0 %v3690
  %3736 = vmatmul.f32.gmra.mxu0 %v3698
  %v3737 = vpop.f32.mrf.mxu0
  %v3738 = vadd.f32 0.0, %v3737
  %3739 = vdwg.mxu0
  %v3740 = vadd.f32 %v3682, %v3718
  %v3741 = vadd.f32 %v3683, %v3738
  %v3742 = vrot.slane %v2508, 4
  %v3744 = vrot.slane %v3164, 3
  %v3746 = vsel %vm3169, %v3742, %v3744
  %v3747 = vld [vmem:[%s7 + $0x280] sm:$0xff]
  %v3748 = vld [vmem:[%s7 + $0x288] sm:$0xff]
  %v3749 = vld [vmem:[%s7 + $0x290] sm:$0xff]
  %v3750 = vld [vmem:[%s7 + $0x298] sm:$0xff]
  %v3751 = vld [vmem:[%s7 + $0x2a0] sm:$0xff]
  %v3752 = vld [vmem:[%s7 + $0x2a8] sm:$0xff]
  %v3753 = vld [vmem:[%s7 + $0x2b0] sm:$0xff]
  %v3754 = vld [vmem:[%s7 + $0x2b8] sm:$0xff]
  %v3756 = vsel %vm3191, %v3746, 0
  %3758 = vmatpush.msra.mxu0 0.0
  %3759 = vmatpush.msra.mxu0 0.0
  %3760 = vmatpush.msra.mxu0 0.0
  %3761 = vmatpush.msra.mxu0 0.0
  %3762 = vmatpush.msra.mxu0 0.0
  %3763 = vmatpush.msra.mxu0 0.0
  %3764 = vmatpush.msra.mxu0 0.0
  %3765 = vmatpush.msra.mxu0 0.0
  %3766 = vmatpush.msra.mxu0 0.0
  %3767 = vmatpush.msra.mxu0 0.0
  %3768 = vmatpush.msra.mxu0 0.0
  %3769 = vmatpush.msra.mxu0 0.0
  %3770 = vmatpush.msra.mxu0 %v3753
  %3771 = vmatpush.msra.mxu0 %v3751
  %3772 = vmatpush.msra.mxu0 %v3749
  %3773 = vmatpush.msra.mxu0 %v3747
  %3774 = vmatmul.f32.gmra.mxu0 %v3756
  %v3775 = vpop.f32.mrf.mxu0
  %v3776 = vadd.f32 0.0, %v3775
  %3777 = vdwg.mxu0
  %3778 = vmatpush.msra.mxu0 0.0
  %3779 = vmatpush.msra.mxu0 0.0
  %3780 = vmatpush.msra.mxu0 0.0
  %3781 = vmatpush.msra.mxu0 0.0
  %3782 = vmatpush.msra.mxu0 0.0
  %3783 = vmatpush.msra.mxu0 0.0
  %3784 = vmatpush.msra.mxu0 0.0
  %3785 = vmatpush.msra.mxu0 0.0
  %3786 = vmatpush.msra.mxu0 0.0
  %3787 = vmatpush.msra.mxu0 0.0
  %3788 = vmatpush.msra.mxu0 0.0
  %3789 = vmatpush.msra.mxu0 0.0
  %3790 = vmatpush.msra.mxu0 %v3754
  %3791 = vmatpush.msra.mxu0 %v3752
  %3792 = vmatpush.msra.mxu0 %v3750
  %3793 = vmatpush.msra.mxu0 %v3748
  %3794 = vmatmul.f32.gmra.mxu0 %v3756
  %v3795 = vpop.f32.mrf.mxu0
  %v3796 = vadd.f32 0.0, %v3795
  %3797 = vdwg.mxu0
  %v3798 = vadd.f32 %v3740, %v3776
  %v3799 = vadd.f32 %v3741, %v3796
  %v3800 = vrot.slane %v2508, 5
  %v3802 = vrot.slane %v3164, 4
  %v3804 = vsel %vm3169, %v3800, %v3802
  %v3805 = vld [vmem:[%s7 + $0x2c0] sm:$0xff]
  %v3806 = vld [vmem:[%s7 + $0x2c8] sm:$0xff]
  %v3807 = vld [vmem:[%s7 + $0x2d0] sm:$0xff]
  %v3808 = vld [vmem:[%s7 + $0x2d8] sm:$0xff]
  %v3809 = vld [vmem:[%s7 + $0x2e0] sm:$0xff]
  %v3810 = vld [vmem:[%s7 + $0x2e8] sm:$0xff]
  %v3811 = vld [vmem:[%s7 + $0x2f0] sm:$0xff]
  %v3812 = vld [vmem:[%s7 + $0x2f8] sm:$0xff]
  %v3814 = vsel %vm3191, %v3804, 0
  %3816 = vmatpush.msra.mxu0 0.0
  %3817 = vmatpush.msra.mxu0 0.0
  %3818 = vmatpush.msra.mxu0 0.0
  %3819 = vmatpush.msra.mxu0 0.0
  %3820 = vmatpush.msra.mxu0 0.0
  %3821 = vmatpush.msra.mxu0 0.0
  %3822 = vmatpush.msra.mxu0 0.0
  %3823 = vmatpush.msra.mxu0 0.0
  %3824 = vmatpush.msra.mxu0 0.0
  %3825 = vmatpush.msra.mxu0 0.0
  %3826 = vmatpush.msra.mxu0 0.0
  %3827 = vmatpush.msra.mxu0 0.0
  %3828 = vmatpush.msra.mxu0 %v3811
  %3829 = vmatpush.msra.mxu0 %v3809
  %3830 = vmatpush.msra.mxu0 %v3807
  %3831 = vmatpush.msra.mxu0 %v3805
  %3832 = vmatmul.f32.gmra.mxu0 %v3814
  %v3833 = vpop.f32.mrf.mxu0
  %v3834 = vadd.f32 0.0, %v3833
  %3835 = vdwg.mxu0
  %3836 = vmatpush.msra.mxu0 0.0
  %3837 = vmatpush.msra.mxu0 0.0
  %3838 = vmatpush.msra.mxu0 0.0
  %3839 = vmatpush.msra.mxu0 0.0
  %3840 = vmatpush.msra.mxu0 0.0
  %3841 = vmatpush.msra.mxu0 0.0
  %3842 = vmatpush.msra.mxu0 0.0
  %3843 = vmatpush.msra.mxu0 0.0
  %3844 = vmatpush.msra.mxu0 0.0
  %3845 = vmatpush.msra.mxu0 0.0
  %3846 = vmatpush.msra.mxu0 0.0
  %3847 = vmatpush.msra.mxu0 0.0
  %3848 = vmatpush.msra.mxu0 %v3812
  %3849 = vmatpush.msra.mxu0 %v3810
  %3850 = vmatpush.msra.mxu0 %v3808
  %3851 = vmatpush.msra.mxu0 %v3806
  %3852 = vmatmul.f32.gmra.mxu0 %v3814
  %v3853 = vpop.f32.mrf.mxu0
  %v3854 = vadd.f32 0.0, %v3853
  %3855 = vdwg.mxu0
  %v3856 = vadd.f32 %v3798, %v3834
  %v3857 = vadd.f32 %v3799, %v3854
  %v3858 = vrot.slane %v2508, 7
  %v3860 = vrot.slane %v3164, 6
  %v3862 = vsel %vm3169, %v3858, %v3860
  %v3863 = vld [vmem:[%s7 + $0x300] sm:$0xff]
  %v3864 = vld [vmem:[%s7 + $0x308] sm:$0xff]
  %v3865 = vld [vmem:[%s7 + $0x310] sm:$0xff]
  %v3866 = vld [vmem:[%s7 + $0x318] sm:$0xff]
  %v3867 = vld [vmem:[%s7 + $0x320] sm:$0xff]
  %v3868 = vld [vmem:[%s7 + $0x328] sm:$0xff]
  %v3869 = vld [vmem:[%s7 + $0x330] sm:$0xff]
  %v3870 = vld [vmem:[%s7 + $0x338] sm:$0xff]
  %v3872 = vsel %vm3191, %v3862, 0
  %3874 = vmatpush.msra.mxu0 0.0
  %3875 = vmatpush.msra.mxu0 0.0
  %3876 = vmatpush.msra.mxu0 0.0
  %3877 = vmatpush.msra.mxu0 0.0
  %3878 = vmatpush.msra.mxu0 0.0
  %3879 = vmatpush.msra.mxu0 0.0
  %3880 = vmatpush.msra.mxu0 0.0
  %3881 = vmatpush.msra.mxu0 0.0
  %3882 = vmatpush.msra.mxu0 0.0
  %3883 = vmatpush.msra.mxu0 0.0
  %3884 = vmatpush.msra.mxu0 0.0
  %3885 = vmatpush.msra.mxu0 0.0
  %3886 = vmatpush.msra.mxu0 %v3869
  %3887 = vmatpush.msra.mxu0 %v3867
  %3888 = vmatpush.msra.mxu0 %v3865
  %3889 = vmatpush.msra.mxu0 %v3863
  %3890 = vmatmul.f32.gmra.mxu0 %v3872
  %v3891 = vpop.f32.mrf.mxu0
  %v3892 = vadd.f32 0.0, %v3891
  %3893 = vdwg.mxu0
  %3894 = vmatpush.msra.mxu0 0.0
  %3895 = vmatpush.msra.mxu0 0.0
  %3896 = vmatpush.msra.mxu0 0.0
  %3897 = vmatpush.msra.mxu0 0.0
  %3898 = vmatpush.msra.mxu0 0.0
  %3899 = vmatpush.msra.mxu0 0.0
  %3900 = vmatpush.msra.mxu0 0.0
  %3901 = vmatpush.msra.mxu0 0.0
  %3902 = vmatpush.msra.mxu0 0.0
  %3903 = vmatpush.msra.mxu0 0.0
  %3904 = vmatpush.msra.mxu0 0.0
  %3905 = vmatpush.msra.mxu0 0.0
  %3906 = vmatpush.msra.mxu0 %v3870
  %3907 = vmatpush.msra.mxu0 %v3868
  %3908 = vmatpush.msra.mxu0 %v3866
  %3909 = vmatpush.msra.mxu0 %v3864
  %3910 = vmatmul.f32.gmra.mxu0 %v3872
  %v3911 = vpop.f32.mrf.mxu0
  %v3912 = vadd.f32 0.0, %v3911
  %3913 = vdwg.mxu0
  %v3914 = vadd.f32 %v3856, %v3892
  %v3915 = vadd.f32 %v3857, %v3912
  %v3917 = vrot.slane %v3165, 7
  %v3919 = vsel %vm3169, %v2509, %v3917
  %v3920 = vld [vmem:[%s7 + $0x340] sm:$0xff]
  %v3921 = vld [vmem:[%s7 + $0x348] sm:$0xff]
  %v3922 = vld [vmem:[%s7 + $0x350] sm:$0xff]
  %v3923 = vld [vmem:[%s7 + $0x358] sm:$0xff]
  %v3924 = vld [vmem:[%s7 + $0x360] sm:$0xff]
  %v3925 = vld [vmem:[%s7 + $0x368] sm:$0xff]
  %v3926 = vld [vmem:[%s7 + $0x370] sm:$0xff]
  %v3927 = vld [vmem:[%s7 + $0x378] sm:$0xff]
  %v3929 = vsel %vm3191, %v3919, 0
  %3931 = vmatpush.msra.mxu0 0.0
  %3932 = vmatpush.msra.mxu0 0.0
  %3933 = vmatpush.msra.mxu0 0.0
  %3934 = vmatpush.msra.mxu0 0.0
  %3935 = vmatpush.msra.mxu0 0.0
  %3936 = vmatpush.msra.mxu0 0.0
  %3937 = vmatpush.msra.mxu0 0.0
  %3938 = vmatpush.msra.mxu0 0.0
  %3939 = vmatpush.msra.mxu0 0.0
  %3940 = vmatpush.msra.mxu0 0.0
  %3941 = vmatpush.msra.mxu0 0.0
  %3942 = vmatpush.msra.mxu0 0.0
  %3943 = vmatpush.msra.mxu0 %v3926
  %3944 = vmatpush.msra.mxu0 %v3924
  %3945 = vmatpush.msra.mxu0 %v3922
  %3946 = vmatpush.msra.mxu0 %v3920
  %3947 = vmatmul.f32.gmra.mxu0 %v3929
  %v3948 = vpop.f32.mrf.mxu0
  %v3949 = vadd.f32 0.0, %v3948
  %3950 = vdwg.mxu0
  %3951 = vmatpush.msra.mxu0 0.0
  %3952 = vmatpush.msra.mxu0 0.0
  %3953 = vmatpush.msra.mxu0 0.0
  %3954 = vmatpush.msra.mxu0 0.0
  %3955 = vmatpush.msra.mxu0 0.0
  %3956 = vmatpush.msra.mxu0 0.0
  %3957 = vmatpush.msra.mxu0 0.0
  %3958 = vmatpush.msra.mxu0 0.0
  %3959 = vmatpush.msra.mxu0 0.0
  %3960 = vmatpush.msra.mxu0 0.0
  %3961 = vmatpush.msra.mxu0 0.0
  %3962 = vmatpush.msra.mxu0 0.0
  %3963 = vmatpush.msra.mxu0 %v3927
  %3964 = vmatpush.msra.mxu0 %v3925
  %3965 = vmatpush.msra.mxu0 %v3923
  %3966 = vmatpush.msra.mxu0 %v3921
  %3967 = vmatmul.f32.gmra.mxu0 %v3929
  %v3968 = vpop.f32.mrf.mxu0
  %v3969 = vadd.f32 0.0, %v3968
  %3970 = vdwg.mxu0
  %v3971 = vadd.f32 %v3914, %v3949
  %v3972 = vadd.f32 %v3915, %v3969
  %v3974 = vrot.slane %v2509, 1
  %v3976 = vsel %vm3169, %v3974, %v3165
  %v3977 = vld [vmem:[%s7 + $0x380] sm:$0xff]
  %v3978 = vld [vmem:[%s7 + $0x388] sm:$0xff]
  %v3979 = vld [vmem:[%s7 + $0x390] sm:$0xff]
  %v3980 = vld [vmem:[%s7 + $0x398] sm:$0xff]
  %v3981 = vld [vmem:[%s7 + $0x3a0] sm:$0xff]
  %v3982 = vld [vmem:[%s7 + $0x3a8] sm:$0xff]
  %v3983 = vld [vmem:[%s7 + $0x3b0] sm:$0xff]
  %v3984 = vld [vmem:[%s7 + $0x3b8] sm:$0xff]
  %v3986 = vsel %vm3191, %v3976, 0
  %3988 = vmatpush.msra.mxu0 0.0
  %3989 = vmatpush.msra.mxu0 0.0
  %3990 = vmatpush.msra.mxu0 0.0
  %3991 = vmatpush.msra.mxu0 0.0
  %3992 = vmatpush.msra.mxu0 0.0
  %3993 = vmatpush.msra.mxu0 0.0
  %3994 = vmatpush.msra.mxu0 0.0
  %3995 = vmatpush.msra.mxu0 0.0
  %3996 = vmatpush.msra.mxu0 0.0
  %3997 = vmatpush.msra.mxu0 0.0
  %3998 = vmatpush.msra.mxu0 0.0
  %3999 = vmatpush.msra.mxu0 0.0
  %4000 = vmatpush.msra.mxu0 %v3983
  %4001 = vmatpush.msra.mxu0 %v3981
  %4002 = vmatpush.msra.mxu0 %v3979
  %4003 = vmatpush.msra.mxu0 %v3977
  %4004 = vmatmul.f32.gmra.mxu0 %v3986
  %v4005 = vpop.f32.mrf.mxu0
  %v4006 = vadd.f32 0.0, %v4005
  %4007 = vdwg.mxu0
  %4008 = vmatpush.msra.mxu0 0.0
  %4009 = vmatpush.msra.mxu0 0.0
  %4010 = vmatpush.msra.mxu0 0.0
  %4011 = vmatpush.msra.mxu0 0.0
  %4012 = vmatpush.msra.mxu0 0.0
  %4013 = vmatpush.msra.mxu0 0.0
  %4014 = vmatpush.msra.mxu0 0.0
  %4015 = vmatpush.msra.mxu0 0.0
  %4016 = vmatpush.msra.mxu0 0.0
  %4017 = vmatpush.msra.mxu0 0.0
  %4018 = vmatpush.msra.mxu0 0.0
  %4019 = vmatpush.msra.mxu0 0.0
  %4020 = vmatpush.msra.mxu0 %v3984
  %4021 = vmatpush.msra.mxu0 %v3982
  %4022 = vmatpush.msra.mxu0 %v3980
  %4023 = vmatpush.msra.mxu0 %v3978
  %4024 = vmatmul.f32.gmra.mxu0 %v3986
  %v4025 = vpop.f32.mrf.mxu0
  %v4026 = vadd.f32 0.0, %v4025
  %4027 = vdwg.mxu0
  %v4028 = vadd.f32 %v3971, %v4006
  %v4029 = vadd.f32 %v3972, %v4026
  %v4030 = vrot.slane %v2509, 2
  %v4032 = vrot.slane %v3165, 1
  %v4034 = vsel %vm3169, %v4030, %v4032
  %v4035 = vld [vmem:[%s7 + $0x3c0] sm:$0xff]
  %v4036 = vld [vmem:[%s7 + $0x3c8] sm:$0xff]
  %v4037 = vld [vmem:[%s7 + $0x3d0] sm:$0xff]
  %v4038 = vld [vmem:[%s7 + $0x3d8] sm:$0xff]
  %v4039 = vld [vmem:[%s7 + $0x3e0] sm:$0xff]
  %v4040 = vld [vmem:[%s7 + $0x3e8] sm:$0xff]
  %v4041 = vld [vmem:[%s7 + $0x3f0] sm:$0xff]
  %v4042 = vld [vmem:[%s7 + $0x3f8] sm:$0xff]
  %v4044 = vsel %vm3191, %v4034, 0
  %4046 = vmatpush.msra.mxu0 0.0
  %4047 = vmatpush.msra.mxu0 0.0
  %4048 = vmatpush.msra.mxu0 0.0
  %4049 = vmatpush.msra.mxu0 0.0
  %4050 = vmatpush.msra.mxu0 0.0
  %4051 = vmatpush.msra.mxu0 0.0
  %4052 = vmatpush.msra.mxu0 0.0
  %4053 = vmatpush.msra.mxu0 0.0
  %4054 = vmatpush.msra.mxu0 0.0
  %4055 = vmatpush.msra.mxu0 0.0
  %4056 = vmatpush.msra.mxu0 0.0
  %4057 = vmatpush.msra.mxu0 0.0
  %4058 = vmatpush.msra.mxu0 %v4041
  %4059 = vmatpush.msra.mxu0 %v4039
  %4060 = vmatpush.msra.mxu0 %v4037
  %4061 = vmatpush.msra.mxu0 %v4035
  %4062 = vmatmul.f32.gmra.mxu0 %v4044
  %v4063 = vpop.f32.mrf.mxu0
  %v4064 = vadd.f32 0.0, %v4063
  %4065 = vdwg.mxu0
  %4066 = vmatpush.msra.mxu0 0.0
  %4067 = vmatpush.msra.mxu0 0.0
  %4068 = vmatpush.msra.mxu0 0.0
  %4069 = vmatpush.msra.mxu0 0.0
  %4070 = vmatpush.msra.mxu0 0.0
  %4071 = vmatpush.msra.mxu0 0.0
  %4072 = vmatpush.msra.mxu0 0.0
  %4073 = vmatpush.msra.mxu0 0.0
  %4074 = vmatpush.msra.mxu0 0.0
  %4075 = vmatpush.msra.mxu0 0.0
  %4076 = vmatpush.msra.mxu0 0.0
  %4077 = vmatpush.msra.mxu0 0.0
  %4078 = vmatpush.msra.mxu0 %v4042
  %4079 = vmatpush.msra.mxu0 %v4040
  %4080 = vmatpush.msra.mxu0 %v4038
  %4081 = vmatpush.msra.mxu0 %v4036
  %4082 = vmatmul.f32.gmra.mxu0 %v4044
  %v4083 = vpop.f32.mrf.mxu0
  %v4084 = vadd.f32 0.0, %v4083
  %4085 = vdwg.mxu0
  %v4086 = vadd.f32 %v4028, %v4064
  %v4087 = vadd.f32 %v4029, %v4084
  %v4088 = vld [vmem:[%s8] sm:$0x3]
  %v4090 = vperm.slane %v4088, 0
  %v4091 = vperm.slane %v4088, 1
  %v4094 = vadd.f32 %v4086, %v4090
  %v4095 = vadd.f32 %v4087, %v4091
  %v4096 = vmax.f32 %v4094, 0.0
  %v4097 = vmax.f32 %v4095, 0.0
  %vm4098 = vcmp.ne.f32.partialorder %v4096, %v4096
  %vm4099 = vcmp.ne.f32.partialorder %v4097, %v4097
  %v4100 = vsel %vm4098, 0.0, %v4096
  %v4101 = vsel %vm4099, 0.0, %v4097
  %vm4102 = vcmp.eq.f32.partialorder %v4100, inf
  %vm4103 = vcmp.eq.f32.partialorder %v4101, inf
  %v4104 = vsel %vm4102, 1.0, %v4100
  %v4105 = vsel %vm4103, 1.0, %v4101
  %vm4106 = vcmp.eq.f32.partialorder %v4104, -inf
  %vm4107 = vcmp.eq.f32.partialorder %v4105, -inf
  %v4108 = vsel %vm4106, -1.0, %v4104
  %v4109 = vsel %vm4107, -1.0, %v4105
  %v4110 = vld [vmem:[%s9] sm:$0xff]
  %v4111 = vld [vmem:[%s9 + $0x8] sm:$0xff]
  %v4112 = vld [vmem:[%s9 + $0x10] sm:$0xff]
  %v4113 = vld [vmem:[%s9 + $0x18] sm:$0xff]
  %v4114 = vld [vmem:[%s9 + $0x20] sm:$0xff]
  %v4115 = vld [vmem:[%s9 + $0x28] sm:$0xff]
  %v4116 = vld [vmem:[%s9 + $0x30] sm:$0xff]
  %v4117 = vld [vmem:[%s9 + $0x38] sm:$0xff]
  %v4118 = vld [vmem:[%s9 + $0x40] sm:$0xff]
  %v4119 = vld [vmem:[%s9 + $0x48] sm:$0xff]
  %v4120 = vld [vmem:[%s9 + $0x50] sm:$0xff]
  %v4121 = vld [vmem:[%s9 + $0x58] sm:$0xff]
  %v4122 = vld [vmem:[%s9 + $0x60] sm:$0xff]
  %v4123 = vld [vmem:[%s9 + $0x68] sm:$0xff]
  %v4124 = vld [vmem:[%s9 + $0x70] sm:$0xff]
  %v4125 = vld [vmem:[%s9 + $0x78] sm:$0xff]
  %v4126 = vld [vmem:[%s9 + $0x80] sm:$0xff]
  %v4127 = vld [vmem:[%s9 + $0x88] sm:$0xff]
  %v4128 = vld [vmem:[%s9 + $0x90] sm:$0xff]
  %v4129 = vld [vmem:[%s9 + $0x98] sm:$0xff]
  %v4130 = vld [vmem:[%s9 + $0xa0] sm:$0xff]
  %v4131 = vld [vmem:[%s9 + $0xa8] sm:$0xff]
  %v4132 = vld [vmem:[%s9 + $0xb0] sm:$0xff]
  %v4133 = vld [vmem:[%s9 + $0xb8] sm:$0xff]
  %v4134 = vld [vmem:[%s9 + $0xc0] sm:$0xff]
  %v4135 = vld [vmem:[%s9 + $0xc8] sm:$0xff]
  %v4136 = vld [vmem:[%s9 + $0xd0] sm:$0xff]
  %v4137 = vld [vmem:[%s9 + $0xd8] sm:$0xff]
  %v4138 = vld [vmem:[%s9 + $0xe0] sm:$0xff]
  %v4139 = vld [vmem:[%s9 + $0xe8] sm:$0xff]
  %v4140 = vld [vmem:[%s9 + $0xf0] sm:$0xff]
  %v4141 = vld [vmem:[%s9 + $0xf8] sm:$0xff]
  %v4142 = vld [vmem:[%s10] sm:$0x1]
  %v4144 = vperm.slane %v4142, 0
  %4146 = vmatpush.msra.mxu0 %v4125
  %4147 = vmatpush.msra.mxu0 %v4124
  %4148 = vmatpush.msra.mxu0 %v4123
  %4149 = vmatpush.msra.mxu0 %v4122
  %4150 = vmatpush.msra.mxu0 %v4121
  %4151 = vmatpush.msra.mxu0 %v4120
  %4152 = vmatpush.msra.mxu0 %v4119
  %4153 = vmatpush.msra.mxu0 %v4118
  %4154 = vmatpush.msra.mxu0 %v4117
  %4155 = vmatpush.msra.mxu0 %v4116
  %4156 = vmatpush.msra.mxu0 %v4115
  %4157 = vmatpush.msra.mxu0 %v4114
  %4158 = vmatpush.msra.mxu0 %v4113
  %4159 = vmatpush.msra.mxu0 %v4112
  %4160 = vmatpush.msra.mxu0 %v4111
  %4161 = vmatpush.msra.mxu0 %v4110
  %4162 = vmatmul.f32.gmra.mxu0 %v4108
  %v4163 = vpop.f32.mrf.mxu0
  %v4164 = vadd.f32 %v4144, %v4163
  %4165 = vdwg.mxu0
  %4166 = vmatpush.msra.mxu0 %v4141
  %4167 = vmatpush.msra.mxu0 %v4140
  %4168 = vmatpush.msra.mxu0 %v4139
  %4169 = vmatpush.msra.mxu0 %v4138
  %4170 = vmatpush.msra.mxu0 %v4137
  %4171 = vmatpush.msra.mxu0 %v4136
  %4172 = vmatpush.msra.mxu0 %v4135
  %4173 = vmatpush.msra.mxu0 %v4134
  %4174 = vmatpush.msra.mxu0 %v4133
  %4175 = vmatpush.msra.mxu0 %v4132
  %4176 = vmatpush.msra.mxu0 %v4131
  %4177 = vmatpush.msra.mxu0 %v4130
  %4178 = vmatpush.msra.mxu0 %v4129
  %4179 = vmatpush.msra.mxu0 %v4128
  %4180 = vmatpush.msra.mxu0 %v4127
  %4181 = vmatpush.msra.mxu0 %v4126
  %4182 = vmatmul.f32.gmra.mxu0 %v4109
  %v4183 = vpop.f32.mrf.mxu0
  %v4184 = vadd.f32 %v4164, %v4183
  %4185 = vdwg.mxu0
  %v4186 = vld [vmem:[%s13] sm:$0x3]
  %v4187 = vadd.f32 %v4184, %v4186
  %vm4188 = vcmask 25600
  %v4189 = vsel %vm4188, %v4187, -inf
  %4190 = vmax.xlane.f32.xlu0 %v4189
  %v4191 = vpop.xlane.xlu0 %4190
  %v4192 = vlaneseq
  %v4193 = vand.u32 %v4192, 127
  %vm4194 = vcmp.ge.f32.partialorder %v4187, %v4191
  %v4195 = vsel %vm4194, %v4193, 4
  %v4196 = vsel %vm4188, %v4195, 2147483647
  %v4197 = vand.u32 %v4196, 65535
  %v4198 = vshra.s32 %v4196, 16
  %v4199 = vcvt.s32.f32 %v4197
  %v4200 = vcvt.s32.f32 %v4198
  %4201 = vmin.xlane.f32.xlu0 %v4200
  %v4202 = vpop.xlane.xlu0 %4201
  %vm4203 = vcmp.eq.f32.partialorder %v4200, %v4202
  %v4204 = vsel %vm4203, %v4199, inf
  %4205 = vmin.xlane.f32.xlu0 %v4204
  %v4206 = vpop.xlane.xlu0 %4205
  %v4207 = vcvt.f32.s32 %v4206
  %v4208 = vcvt.f32.s32 %v4202
  %v4209 = vshll.u32 %v4208, 16
  %v4210 = vadd.s32 %v4209, %v4207
  %vm4211 = vcmp.eq.s32.totalorder %v4193, %v4210
  %v4212 = vsel %vm4211, 1, 0
  %v4213 = vcvt.s32.f32 %v4212
  %v4214 = vld [vmem:[%s11] sm:$0xff]
  %v4215 = vld [vmem:[%s11 + $0x8] sm:$0xff]
  %v4216 = vld [vmem:[%s11 + $0x10] sm:$0xff]
  %v4217 = vld [vmem:[%s11 + $0x18] sm:$0xff]
  %v4218 = vld [vmem:[%s11 + $0x20] sm:$0xff]
  %v4219 = vld [vmem:[%s11 + $0x28] sm:$0xff]
  %v4220 = vld [vmem:[%s11 + $0x30] sm:$0xff]
  %v4221 = vld [vmem:[%s11 + $0x38] sm:$0xff]
  %v4222 = vld [vmem:[%s11 + $0x40] sm:$0xff]
  %v4223 = vld [vmem:[%s11 + $0x48] sm:$0xff]
  %v4224 = vld [vmem:[%s11 + $0x50] sm:$0xff]
  %v4225 = vld [vmem:[%s11 + $0x58] sm:$0xff]
  %v4226 = vld [vmem:[%s11 + $0x60] sm:$0xff]
  %v4227 = vld [vmem:[%s11 + $0x68] sm:$0xff]
  %v4228 = vld [vmem:[%s11 + $0x70] sm:$0xff]
  %v4229 = vld [vmem:[%s11 + $0x78] sm:$0xff]
  %v4230 = vld [vmem:[%s11 + $0x80] sm:$0xff]
  %v4231 = vld [vmem:[%s11 + $0x88] sm:$0xff]
  %v4232 = vld [vmem:[%s11 + $0x90] sm:$0xff]
  %v4233 = vld [vmem:[%s11 + $0x98] sm:$0xff]
  %v4234 = vld [vmem:[%s11 + $0xa0] sm:$0xff]
  %v4235 = vld [vmem:[%s11 + $0xa8] sm:$0xff]
  %v4236 = vld [vmem:[%s11 + $0xb0] sm:$0xff]
  %v4237 = vld [vmem:[%s11 + $0xb8] sm:$0xff]
  %v4238 = vld [vmem:[%s11 + $0xc0] sm:$0xff]
  %v4239 = vld [vmem:[%s11 + $0xc8] sm:$0xff]
  %v4240 = vld [vmem:[%s11 + $0xd0] sm:$0xff]
  %v4241 = vld [vmem:[%s11 + $0xd8] sm:$0xff]
  %v4242 = vld [vmem:[%s11 + $0xe0] sm:$0xff]
  %v4243 = vld [vmem:[%s11 + $0xe8] sm:$0xff]
  %v4244 = vld [vmem:[%s11 + $0xf0] sm:$0xff]
  %v4245 = vld [vmem:[%s11 + $0xf8] sm:$0xff]
  %v4246 = vld [vmem:[%s12] sm:$0x1]
  %v4248 = vperm.slane %v4246, 0
  %4250 = vmatpush.msra.mxu0 %v4229
  %4251 = vmatpush.msra.mxu0 %v4228
  %4252 = vmatpush.msra.mxu0 %v4227
  %4253 = vmatpush.msra.mxu0 %v4226
  %4254 = vmatpush.msra.mxu0 %v4225
  %4255 = vmatpush.msra.mxu0 %v4224
  %4256 = vmatpush.msra.mxu0 %v4223
  %4257 = vmatpush.msra.mxu0 %v4222
  %4258 = vmatpush.msra.mxu0 %v4221
  %4259 = vmatpush.msra.mxu0 %v4220
  %4260 = vmatpush.msra.mxu0 %v4219
  %4261 = vmatpush.msra.mxu0 %v4218
  %4262 = vmatpush.msra.mxu0 %v4217
  %4263 = vmatpush.msra.mxu0 %v4216
  %4264 = vmatpush.msra.mxu0 %v4215
  %4265 = vmatpush.msra.mxu0 %v4214
  %4266 = vmatmul.f32.gmra.mxu0 %v4108
  %v4267 = vpop.f32.mrf.mxu0
  %v4268 = vadd.f32 %v4248, %v4267
  %4269 = vdwg.mxu0
  %4270 = vmatpush.msra.mxu0 %v4245
  %4271 = vmatpush.msra.mxu0 %v4244
  %4272 = vmatpush.msra.mxu0 %v4243
  %4273 = vmatpush.msra.mxu0 %v4242
  %4274 = vmatpush.msra.mxu0 %v4241
  %4275 = vmatpush.msra.mxu0 %v4240
  %4276 = vmatpush.msra.mxu0 %v4239
  %4277 = vmatpush.msra.mxu0 %v4238
  %4278 = vmatpush.msra.mxu0 %v4237
  %4279 = vmatpush.msra.mxu0 %v4236
  %4280 = vmatpush.msra.mxu0 %v4235
  %4281 = vmatpush.msra.mxu0 %v4234
  %4282 = vmatpush.msra.mxu0 %v4233
  %4283 = vmatpush.msra.mxu0 %v4232
  %4284 = vmatpush.msra.mxu0 %v4231
  %4285 = vmatpush.msra.mxu0 %v4230
  %4286 = vmatmul.f32.gmra.mxu0 %v4109
  %v4287 = vpop.f32.mrf.mxu0
  %v4288 = vadd.f32 %v4268, %v4287
  %4289 = vdwg.mxu0
  %4291 = vset.pattern.permute.xlu0 0
  %4292 = vperm.xlu0 %4291, %v4213
  %v4293 = vpop.permute.xlu0 %4292
  %v4295 = vmul.f32 %v4293, %v4288
  %v4296 = vadd.f32 %v4295, 0.0
  %4297 = vset.pattern.permute.xlu0 1
  %4298 = vperm.xlu0 %4297, %v4213
  %v4299 = vpop.permute.xlu0 %4298
  %v4301 = vmul.f32 %v4299, %v4288
  %4303 = vrot.lane.b32.xlu0 %v4301, 120
  %v4304 = vpop.permute.xlu0 %4303
  %v4306 = vadd.f32 %v4296, %v4304
  %4307 = vset.pattern.permute.xlu0 2
  %4308 = vperm.xlu0 %4307, %v4213
  %v4309 = vpop.permute.xlu0 %4308
  %v4311 = vmul.f32 %v4309, %v4288
  %4313 = vrot.lane.b32.xlu0 %v4311, 112
  %v4314 = vpop.permute.xlu0 %4313
  %v4316 = vadd.f32 %v4306, %v4314
  %4317 = vset.pattern.permute.xlu0 3
  %4318 = vperm.xlu0 %4317, %v4213
  %v4319 = vpop.permute.xlu0 %4318
  %v4321 = vmul.f32 %v4319, %v4288
  %4323 = vrot.lane.b32.xlu0 %v4321, 104
  %v4324 = vpop.permute.xlu0 %4323
  %v4326 = vadd.f32 %v4316, %v4324
  %v4327 = vmul.f32 %v4326, 1.442695
  %v4328 = vpow.pop %v4327
  %v4329 = vld [vmem:[%s14] sm:$0x3]
  %4331 = vrot.lane.b32.xlu0 %v4329, 32
  %v4332 = vpop.permute.xlu0 %4331
  %v4334 = vmul.f32 %v4328, %v4332
  %4336 = vrot.lane.b32.xlu0 %v4334, 96
  %v4337 = vpop.permute.xlu0 %4336
  %v4339 = vadd.f32 %v4326, %v4337
  %4341 = vrot.lane.b32.xlu0 %v4339, 4
  %v4342 = vpop.permute.xlu0 %4341
  %4345 = vrot.lane.b32.xlu0 %v4326, 12
  %v4346 = vpop.permute.xlu0 %4345
  %4349 = vrot.lane.b32.xlu0 %v4328, 116
  %v4350 = vpop.permute.xlu0 %4349
  %vm4352 = vcmask 31744
  %v4353 = vsel %vm4352, %v4184, %v4342
  %vm4354 = vcmask 97280
  %v4355 = vsel %vm4354, %v4353, %v4346
  %vm4356 = vcmask 162816
  %v4357 = vsel %vm4356, %v4355, %v4350
  %vm4358 = vcmask 222208
  %4359 = vst.msk [vmem:[%s15] sm:$0x3] %vm4358, %v4357
  // Predicated region
  $region62: #{prior_forward.3} parent=0 // pred_check
    _
  $region63: #{prior_forward.3} parent=0 // pred_check_branch
    %4361 = sbr.rel (0) target = $region65
  $region64: #{prior_forward.3} parent=0 // pred_region
    _
  $region65: #{prior_forward.3} parent=0 // pred_fallthru
    _
  // Predicated region
  $region66: #{prior_forward.3} parent=0 // pred_check
    _
  $region67: #{prior_forward.3} parent=0 // pred_check_branch
    %4363 = sbr.rel (0) target = $region69
  $region68: #{prior_forward.3} parent=0 // pred_region
    _
  $region69: #{prior_forward.3} parent=0 // pred_fallthru
    _

</llo_original>
